<compile_context>
chip_gen: v7x
topology: tpu7x:2x2x1
jax: 0.10.0
libtpu: 0.0.40
codegen_flags: <defaults>
</compile_context>

<pallas_src>
import jax
import jax.numpy as jnp
from jax.experimental import pallas as pl
from jax.experimental.pallas import tpu as pltpu


# ----------------------------------------------------------------------------
# Pallas kernel: one grid step = GB graphs, everything resident in VMEM
# ----------------------------------------------------------------------------
def gin_kernel(
    x_ref, a_ref, m_ref,
    w0_ref, b0_ref,
    w1a_ref, w1b_ref, w2a_ref, w2b_ref, w3a_ref, w3b_ref, bmlp_ref,
    wl1a_ref, wl1b_ref, wl1c_ref, bl1_ref,
    wl2_ref, bl2_ref,
    out_ref,
):
    f32 = jnp.float32
    bf16 = jnp.bfloat16

    x = x_ref[...]          # (M, F)    bf16 stacked node features of GB graphs
    A = a_ref[...]          # (M, M)    bf16 block-diagonal A_hat (= A + I)
    m = m_ref[...]          # (GB, M)   bf16 per-graph pooling masks
    bias = bmlp_ref[...]    # (8, Hp)   f32 packed conv-MLP biases (rows 0..5 used)

    # x = linear(x); bn0(x); relu(x)    (BN folded into w0/b0 host-side;
    # padded Hp columns stay exactly 0 because padded weights/bias are 0)
    h = jnp.dot(x, w0_ref[...], preferred_element_type=f32) + b0_ref[...]
    h = jnp.maximum(h, 0.0).astype(bf16)

    def gin_conv(hin, wa, ba, wb, bb):
        # GIN eps=0: (A + I) @ h, folded into the block-diagonal A -> one MXU op
        agg = jnp.dot(A, hin, preferred_element_type=f32).astype(bf16)
        # MLP: Linear -> BatchNorm(eval, folded) -> ReLU -> Linear -> ReLU
        z = jnp.dot(agg, wa, preferred_element_type=f32) + ba
        z = jnp.maximum(z, 0.0).astype(bf16)
        z = jnp.dot(z, wb, preferred_element_type=f32) + bb
        return jnp.maximum(z, 0.0).astype(bf16)

    h1 = gin_conv(h,  w1a_ref[...], bias[0:1], w1b_ref[...], bias[1:2])
    h2 = gin_conv(h1, w2a_ref[...], bias[2:3], w2b_ref[...], bias[3:4])
    h3 = gin_conv(h2, w3a_ref[...], bias[4:5], w3b_ref[...], bias[5:6])

    # global_add_pool for all GB graphs at once: (GB, M) @ (M, Hp)
    g1 = jnp.dot(m, h1, preferred_element_type=f32).astype(bf16)
    g2 = jnp.dot(m, h2, preferred_element_type=f32).astype(bf16)
    g3 = jnp.dot(m, h3, preferred_element_type=f32).astype(bf16)

    # lin1 over the (virtual) concat [g1|g2|g3]: three row-blocks of wl1
    # accumulated in f32 -> no lane-axis concatenate / relayout.
    hh = (jnp.dot(g1, wl1a_ref[...], preferred_element_type=f32)
          + jnp.dot(g2, wl1b_ref[...], preferred_element_type=f32)
          + jnp.dot(g3, wl1c_ref[...], preferred_element_type=f32)
          + bl1_ref[...])
    hh = jnp.maximum(hh, 0.0).astype(bf16)

    # dropout(p=0.5) is identity in eval mode; lin2 (class dim zero-padded to
    # 128 so the output store is lane-dense; GB rows -> sublane-dense)
    out_ref[...] = jnp.dot(hh, wl2_ref[...], preferred_element_type=f32) + bl2_ref[...]


# ----------------------------------------------------------------------------
# Wrapper
# ----------------------------------------------------------------------------
def gin_forward(xb, Ab, mb, params, num_graphs, num_classes):
    """xb: (B, M, F) bf16, Ab: (B, M, M) bf16, mb: (B, GB, M) bf16."""
    B, M, F = xb.shape
    GB = mb.shape[1]
    Hp = params[2].shape[1]          # w1a: (Fp, Hp)
    Cp = params[-1].shape[-1]        # bl2p: (1, Cp)
    inputs = [xb, Ab, mb] + list(params)

    def block_spec(block_shape):
        return pl.BlockSpec(block_shape,
                            lambda b: (b,) + (0,) * (len(block_shape) - 1))

    def weight_spec(a):
        # full-array block; constant index -> DMA'd once across the grid
        # TODO(synk): mark with pipeline_mode=pl.Buffered(1) (or load into
        # scratch once) to drop the redundant double buffer when M grows large
        # enough for weight VMEM to matter on v7x's 64 MiB.
        return pl.BlockSpec(a.shape, lambda b, n=a.ndim: (0,) * n)

    in_specs = [
        block_spec((None, M, F)),
        block_spec((None, M, M)),
        block_spec((None, GB, M)),
    ] + [weight_spec(p) for p in params]

    out_specs = pl.BlockSpec((None, GB, Cp), lambda b: (b, 0, 0))
    out_shape = jax.ShapeDtypeStruct((B, GB, Cp), jnp.float32)

    # advisory cost estimate (per block, times B)
    mm = lambda m_, k_, n_: 2 * m_ * k_ * n_
    per_block = (
        mm(M, F, Hp)                                   # lin0 (+bn0 folded)
        + 3 * (mm(M, M, Hp) + 2 * mm(M, Hp, Hp))       # conv1..3 (agg + 2 linears)
        + 3 * mm(GB, M, Hp)                            # pooling
        + 3 * mm(GB, Hp, Hp)                           # lin1 (3 row blocks)
        + mm(GB, Hp, Cp)                               # lin2
    )
    in_bytes = sum(int(a.size) * a.dtype.itemsize for a in inputs)
    out_bytes = B * GB * Cp * 4
    cost = pl.CostEstimate(flops=int(B * per_block), transcendentals=0,
                           bytes_accessed=int(in_bytes + out_bytes))

    # VMEM budget: double-buffered per-step blocks + resident weights + temporaries
    blk_bytes = 2 * ((M * F + M * M + GB * M) * 2 + GB * Cp * 4)
    w_bytes = 2 * sum(int(p.size) * p.dtype.itemsize for p in params)
    act_bytes = 8 * M * Hp * 4
    vmem_limit = int(min(max(blk_bytes + w_bytes + act_bytes + (8 << 20), 16 << 20),
                         100 << 20))

    out = pl.pallas_call(
        gin_kernel,
        out_shape=out_shape,
        grid=(B,),
        in_specs=in_specs,
        out_specs=out_specs,
        compiler_params=pltpu.CompilerParams(
            dimension_semantics=("parallel",),   # independent blocks -> 2 TCs on v7x
            vmem_limit_bytes=vmem_limit,
        ),
        cost_estimate=cost,
    )(*inputs)
    return out.reshape(B * GB, Cp)[:num_graphs, :num_classes]


# ----------------------------------------------------------------------------
# Host-side parameter construction + folding/padding
# ----------------------------------------------------------------------------
def make_raw_params(key, F, H, C):
    keys = iter(jax.random.split(key, 64))

    def lin(din, dout):
        w = jax.random.normal(next(keys), (din, dout), jnp.float32) * 0.1
        b = jnp.full((dout,), 0.01, jnp.float32)
        return w, b

    def bn(dim):
        gamma = 1.0 + 0.05 * jax.random.normal(next(keys), (dim,), jnp.float32)
        beta = jnp.full((dim,), 0.02, jnp.float32)
        mean = 0.1 * jax.random.normal(next(keys), (dim,), jnp.float32)
        var = 1.0 + 0.1 * jax.random.uniform(next(keys), (dim,), jnp.float32)
        return gamma, beta, mean, var

    raw = {"lin0": lin(F, F), "bn0": bn(F)}
    for i, din in zip((1, 2, 3), (F, H, H)):
        raw[f"conv{i}_a"] = lin(din, H)
        raw[f"conv{i}_bn"] = bn(H)
        raw[f"conv{i}_b"] = lin(H, H)
    raw["lin1"] = lin(3 * H, 3 * H)
    raw["lin2"] = lin(3 * H, C)
    return raw


def prepare_params(raw, F, H, C, f_pad=128, h_pad=128, c_pad=128, eps=1e-5):
    """Fold BN(eval) into weights, zero-pad all hidden dims to lane width (128),
    pack the six conv-MLP biases, split wl1 into 3 row blocks, cast to bf16."""
    bf16 = jnp.bfloat16

    def fold(lin_wb, bn_p):
        w, b = lin_wb
        gamma, beta, mean, var = bn_p
        s = gamma / jnp.sqrt(var + eps)
        return w * s[None, :], b * s + beta - mean * s

    def pad2(w, r, c):
        return jnp.zeros((r, c), jnp.float32).at[:w.shape[0], :w.shape[1]].set(w)

    def pad_bias(b, c):
        return jnp.zeros((1, c), jnp.float32).at[0, :b.shape[0]].set(b)

    # lin0 + bn0: (F, F) -> (F, f_pad); padded output columns stay 0 (bias 0)
    w0, b0 = fold(raw["lin0"], raw["bn0"])
    w0p, b0p = pad2(w0, F, f_pad), pad_bias(b0, f_pad)

    conv_w, conv_b = [], []
    for i in (1, 2, 3):
        wa, ba = fold(raw[f"conv{i}_a"], raw[f"conv{i}_bn"])
        wb, bb = raw[f"conv{i}_b"]
        din_pad = f_pad if i == 1 else h_pad
        conv_w += [pad2(wa, din_pad, h_pad), pad2(wb, h_pad, h_pad)]
        conv_b += [pad_bias(ba, h_pad)[0], pad_bias(bb, h_pad)[0]]
    # pack the six conv-MLP biases into a single (8, Hp) f32 array (rows 6,7 unused)
    bmlp = jnp.zeros((8, h_pad), jnp.float32).at[:6, :].set(jnp.stack(conv_b, axis=0))

    wl1, bl1 = raw["lin1"]                 # (3H, 3H), (3H,)
    wl1a = pad2(wl1[:H, :], h_pad, c_pad)
    wl1b = pad2(wl1[H:2 * H, :], h_pad, c_pad)
    wl1c = pad2(wl1[2 * H:, :], h_pad, c_pad)
    bl1p = pad_bias(bl1, c_pad)

    wl2, bl2 = raw["lin2"]                 # (3H, C), (C,)
    wl2p = pad2(wl2, c_pad, c_pad)
    bl2p = pad_bias(bl2, c_pad)

    return (
        w0p.astype(bf16), b0p,
        conv_w[0].astype(bf16), conv_w[1].astype(bf16),
        conv_w[2].astype(bf16), conv_w[3].astype(bf16),
        conv_w[4].astype(bf16), conv_w[5].astype(bf16),
        bmlp,
        wl1a.astype(bf16), wl1b.astype(bf16), wl1c.astype(bf16),
        bl1p,
        wl2p.astype(bf16), bl2p,
    )


def build_graph_blocks(x, edge_index, batch, num_nodes, num_graphs,
                       nodes_per_graph, graphs_per_block):
    """Pack GB graphs per block: stacked features, block-diagonal A_hat = A + I,
    and a (GB, M) pooling mask that zeroes padded nodes / padded graphs."""
    del batch  # node -> graph mapping is implied by the contiguous layout
    F = x.shape[1]
    GB = graphs_per_block
    npg = nodes_per_graph
    B = -(-num_graphs // GB)               # ceil
    G_pad = B * GB
    M = GB * npg

    # features, with padded node rows (and padded graphs) zeroed
    x3 = jnp.zeros((G_pad, npg, F), jnp.float32)
    x3 = x3.at[:num_graphs].set(x.reshape(num_graphs, npg, F))
    nn = jnp.zeros((G_pad,), jnp.int32).at[:num_graphs].set(num_nodes)
    node_valid = (jnp.arange(npg)[None, :] < nn[:, None])            # (G_pad, npg)
    x3 = x3 * node_valid.astype(jnp.float32)[:, :, None]
    xb = x3.reshape(B, M, F)

    # block-diagonal A_hat = A + I (GIN eps=0 self term); off-diag blocks exactly 0
    src, dst = edge_index[0], edge_index[1]
    blk = src // M
    Ab = jnp.zeros((B, M, M), jnp.float32)
    Ab = Ab.at[blk, dst - blk * M, src - blk * M].add(1.0)
    Ab = Ab + jnp.eye(M, dtype=jnp.float32)[None]
    # NOTE: bf16 A_hat is exact while (degree + 1) <= 256; keep f32 otherwise.

    # per-graph pooling mask: row k of a block selects graph k's valid nodes
    validb = node_valid.reshape(B, GB, npg).astype(jnp.float32)
    mb = jnp.zeros((B, GB, GB, npg), jnp.float32)
    mb = mb.at[:, jnp.arange(GB), jnp.arange(GB), :].set(validb)
    mb = mb.reshape(B, GB, M)

    bf16 = jnp.bfloat16
    return xb.astype(bf16), Ab.astype(bf16), mb.astype(bf16)


# ----------------------------------------------------------------------------
# References
# ----------------------------------------------------------------------------
def reference_bf16(xb, Ab, mb, params, num_graphs, num_classes):
    """Pure-JAX mirror of the kernel math (same folding/padding + bf16 operands)."""
    (w0, b0, w1a, w1b, w2a, w2b, w3a, w3b, bmlp,
     wl1a, wl1b, wl1c, bl1, wl2p, bl2p) = params
    f32, bf16 = jnp.float32, jnp.bfloat16
    outs = []
    for bi in range(xb.shape[0]):
        x, A, m = xb[bi], Ab[bi], mb[bi]
        h = jnp.maximum(jnp.dot(x, w0, preferred_element_type=f32) + b0, 0.0).astype(bf16)

        def conv(hin, wa, ba, wb, bb):
            agg = jnp.dot(A, hin, preferred_element_type=f32).astype(bf16)
            z = jnp.maximum(jnp.dot(agg, wa, preferred_element_type=f32) + ba, 0.0).astype(bf16)
            return jnp.maximum(jnp.dot(z, wb, preferred_element_type=f32) + bb, 0.0).astype(bf16)

        h1 = conv(h, w1a, bmlp[0:1], w1b, bmlp[1:2])
        h2 = conv(h1, w2a, bmlp[2:3], w2b, bmlp[3:4])
        h3 = conv(h2, w3a, bmlp[4:5], w3b, bmlp[5:6])
        g1 = jnp.dot(m, h1, preferred_element_type=f32).astype(bf16)
        g2 = jnp.dot(m, h2, preferred_element_type=f32).astype(bf16)
        g3 = jnp.dot(m, h3, preferred_element_type=f32).astype(bf16)
        hh = (jnp.dot(g1, wl1a, preferred_element_type=f32)
              + jnp.dot(g2, wl1b, preferred_element_type=f32)
              + jnp.dot(g3, wl1c, preferred_element_type=f32) + bl1)
        hh = jnp.maximum(hh, 0.0).astype(bf16)
        outs.append(jnp.dot(hh, wl2p, preferred_element_type=f32) + bl2p)
    out = jnp.concatenate(outs, axis=0)
    return out[:num_graphs, :num_classes]


def reference_f32(x, edge_index, batch, num_nodes, raw, num_graphs,
                  nodes_per_graph, num_classes):
    """Full-f32 reference with explicit (unfolded) BatchNorm — original semantics."""
    N = x.shape[0]
    src, dst = edge_index[0], edge_index[1]
    A = jnp.zeros((N, N), jnp.float32).at[dst, src].add(1.0) + jnp.eye(N)

    def bn(y, p):
        gamma, beta, mean, var = p
        return (y - mean) / jnp.sqrt(var + 1e-5) * gamma + beta

    w0, b0 = raw["lin0"]
    h = jnp.maximum(bn(x @ w0 + b0, raw["bn0"]), 0.0)

    def conv(hin, i):
        wa, ba = raw[f"conv{i}_a"]
        wb, bb = raw[f"conv{i}_b"]
        z = jnp.maximum(bn((A @ hin) @ wa + ba, raw[f"conv{i}_bn"]), 0.0)
        return jnp.maximum(z @ wb + bb, 0.0)

    h1 = conv(h, 1); h2 = conv(h1, 2); h3 = conv(h2, 3)

    # global_add_pool restricted to valid (non-padded) nodes of each graph
    local = jnp.arange(N) % nodes_per_graph
    valid = (local < num_nodes[batch]).astype(jnp.float32)
    pool = ((batch[None, :] == jnp.arange(num_graphs)[:, None]).astype(jnp.float32)
            * valid[None, :])
    hh = jnp.concatenate([pool @ h1, pool @ h2, pool @ h3], axis=1)
    wl1, bl1 = raw["lin1"]
    wl2, bl2 = raw["lin2"]
    hh = jnp.maximum(hh @ wl1 + bl1, 0.0)
    return hh @ wl2 + bl2


# ----------------------------------------------------------------------------
# Demo / self-check
# ----------------------------------------------------------------------------
if __name__ == "__main__":
    num_node_features = 8
    hidden_channels = 32
    num_classes = 4
    nodes_per_graph = 16          # per-graph node budget (ragged graphs padded up)
    num_graphs = 16
    graphs_per_block = 8          # -> M = GB*npg = 128 nodes/step, 2 grid steps

    key = jax.random.PRNGKey(0)
    kx, kp = jax.random.split(key)

    N = num_graphs * nodes_per_graph
    x = jax.random.normal(kx, (N, num_node_features), jnp.float32)
    batch = jnp.repeat(jnp.arange(num_graphs, dtype=jnp.int32), nodes_per_graph)

    # ragged graphs: graph g has 12 + (g % 5) valid nodes; bidirectional ring edges
    num_nodes_list = [12 + (g % 5) for g in range(num_graphs)]
    srcs, dsts = [], []
    for g in range(num_graphs):
        base = g * nodes_per_graph
        n = num_nodes_list[g]
        for i in range(n):
            a, b = base + i, base + (i + 1) % n
            srcs += [a, b]
            dsts += [b, a]
    edge_index = jnp.array([srcs, dsts], dtype=jnp.int32)
    num_nodes = jnp.array(num_nodes_list, jnp.int32)

    raw = make_raw_params(kp, num_node_features, hidden_channels, num_classes)
    params = prepare_params(raw, num_node_features, hidden_channels, num_classes)
    xb, Ab, mb = build_graph_blocks(x, edge_index, batch, num_nodes, num_graphs,
                                    nodes_per_graph, graphs_per_block)

    out = gin_forward(xb, Ab, mb, params, num_graphs, num_classes)
    out = jax.block_until_ready(out)
    assert out.shape == (num_graphs, num_classes)

    ref_b = reference_bf16(xb, Ab, mb, params, num_graphs, num_classes)
    ref_f = reference_f32(x, edge_index, batch, num_nodes, raw, num_graphs,
                          nodes_per_graph, num_classes)
    err_b = float(jnp.max(jnp.abs(out - ref_b)))
    err_f = float(jnp.max(jnp.abs(out - ref_f)))
    assert jnp.allclose(out, ref_b, atol=1e-2, rtol=1e-2), f"bf16-mirror mismatch: {err_b}"
    assert jnp.allclose(out, ref_f, atol=1e-1, rtol=5e-2), f"f32-ref mismatch: {err_f}"

    # TODO(synk): for very large M, replace the dense block-diagonal A (bytes ~ M^2)
    # with a per-graph (GB, npg, npg) fori_loop aggregation or block-sparse A driven
    # by PrefetchScalarGridSpec scalar prefetch to stay under the HBM roofline
    # (v5e) and v7x's 64 MiB VMEM.
    print("KERNEL_OK")
</pallas_src>

<mosaic_0001>
module attributes {stable_mosaic.version = 11 : i64} {
  func.func @gin_kernel(%arg0: i32, %arg1: memref<1x128x8xbf16, #tpu.memory_space<vmem>>, %arg2: memref<1x128x128xbf16, #tpu.memory_space<vmem>>, %arg3: memref<1x8x128xbf16, #tpu.memory_space<vmem>>, %arg4: memref<8x128xbf16, #tpu.memory_space<vmem>>, %arg5: memref<1x128xf32, #tpu.memory_space<vmem>>, %arg6: memref<128x128xbf16, #tpu.memory_space<vmem>>, %arg7: memref<128x128xbf16, #tpu.memory_space<vmem>>, %arg8: memref<128x128xbf16, #tpu.memory_space<vmem>>, %arg9: memref<128x128xbf16, #tpu.memory_space<vmem>>, %arg10: memref<128x128xbf16, #tpu.memory_space<vmem>>, %arg11: memref<128x128xbf16, #tpu.memory_space<vmem>>, %arg12: memref<8x128xf32, #tpu.memory_space<vmem>>, %arg13: memref<128x128xbf16, #tpu.memory_space<vmem>>, %arg14: memref<128x128xbf16, #tpu.memory_space<vmem>>, %arg15: memref<128x128xbf16, #tpu.memory_space<vmem>>, %arg16: memref<1x128xf32, #tpu.memory_space<vmem>>, %arg17: memref<128x128xbf16, #tpu.memory_space<vmem>>, %arg18: memref<1x128xf32, #tpu.memory_space<vmem>>, %arg19: memref<1x8x128xf32, #tpu.memory_space<vmem>>) attributes {dimension_semantics = [#tpu.dimension_semantics<parallel>], iteration_bounds = array<i64: 2>, scalar_prefetch = 0 : i64, scratch_operands = 0 : i64, tpu.core_type = #tpu.core_type<tc>, window_params = [{transform_indices = @transform_0, window_bounds = array<i64: 1, 128, 8>}, {transform_indices = @transform_1, window_bounds = array<i64: 1, 128, 128>}, {transform_indices = @transform_2, window_bounds = array<i64: 1, 8, 128>}, {pipeline_mode = #tpu.pipeline_mode<synchronous>, transform_indices = @transform_3, window_bounds = array<i64: 8, 128>}, {pipeline_mode = #tpu.pipeline_mode<synchronous>, transform_indices = @transform_4, window_bounds = array<i64: 1, 128>}, {pipeline_mode = #tpu.pipeline_mode<synchronous>, transform_indices = @transform_5, window_bounds = array<i64: 128, 128>}, {pipeline_mode = #tpu.pipeline_mode<synchronous>, transform_indices = @transform_6, window_bounds = array<i64: 128, 128>}, {pipeline_mode = #tpu.pipeline_mode<synchronous>, transform_indices = @transform_7, window_bounds = array<i64: 128, 128>}, {pipeline_mode = #tpu.pipeline_mode<synchronous>, transform_indices = @transform_8, window_bounds = array<i64: 128, 128>}, {pipeline_mode = #tpu.pipeline_mode<synchronous>, transform_indices = @transform_9, window_bounds = array<i64: 128, 128>}, {pipeline_mode = #tpu.pipeline_mode<synchronous>, transform_indices = @transform_10, window_bounds = array<i64: 128, 128>}, {pipeline_mode = #tpu.pipeline_mode<synchronous>, transform_indices = @transform_11, window_bounds = array<i64: 8, 128>}, {pipeline_mode = #tpu.pipeline_mode<synchronous>, transform_indices = @transform_12, window_bounds = array<i64: 128, 128>}, {pipeline_mode = #tpu.pipeline_mode<synchronous>, transform_indices = @transform_13, window_bounds = array<i64: 128, 128>}, {pipeline_mode = #tpu.pipeline_mode<synchronous>, transform_indices = @transform_14, window_bounds = array<i64: 128, 128>}, {pipeline_mode = #tpu.pipeline_mode<synchronous>, transform_indices = @transform_15, window_bounds = array<i64: 1, 128>}, {pipeline_mode = #tpu.pipeline_mode<synchronous>, transform_indices = @transform_16, window_bounds = array<i64: 128, 128>}, {pipeline_mode = #tpu.pipeline_mode<synchronous>, transform_indices = @transform_17, window_bounds = array<i64: 1, 128>}, {transform_indices = @transform_18, window_bounds = array<i64: 1, 8, 128>}]} {
    %c0 = arith.constant 0 : index
    %c0_0 = arith.constant 0 : index
    %c0_1 = arith.constant 0 : index
    %0 = vector.load %arg1[%c0, %c0_0, %c0_1] : memref<1x128x8xbf16, #tpu.memory_space<vmem>>, vector<1x128x8xbf16>
    %1 = vector.shape_cast %0 : vector<1x128x8xbf16> to vector<128x8xbf16>
    %c0_2 = arith.constant 0 : index
    %c0_3 = arith.constant 0 : index
    %c0_4 = arith.constant 0 : index
    %2 = vector.load %arg2[%c0_2, %c0_3, %c0_4] : memref<1x128x128xbf16, #tpu.memory_space<vmem>>, vector<1x128x128xbf16>
    %3 = vector.shape_cast %2 : vector<1x128x128xbf16> to vector<128x128xbf16>
    %c0_5 = arith.constant 0 : index
    %c0_6 = arith.constant 0 : index
    %c0_7 = arith.constant 0 : index
    %4 = vector.load %arg3[%c0_5, %c0_6, %c0_7] : memref<1x8x128xbf16, #tpu.memory_space<vmem>>, vector<1x8x128xbf16>
    %5 = vector.shape_cast %4 : vector<1x8x128xbf16> to vector<8x128xbf16>
    %c0_8 = arith.constant 0 : index
    %c0_9 = arith.constant 0 : index
    %6 = vector.load %arg12[%c0_8, %c0_9] : memref<8x128xf32, #tpu.memory_space<vmem>>, vector<8x128xf32>
    %c0_10 = arith.constant 0 : index
    %c0_11 = arith.constant 0 : index
    %7 = vector.load %arg4[%c0_10, %c0_11] : memref<8x128xbf16, #tpu.memory_space<vmem>>, vector<8x128xbf16>
    %cst = arith.constant dense<0.000000e+00> : vector<128x128xf32>
    %8 = tpu.matmul %1, %7, %cst {dimension_numbers = #tpu.dot_dimension_numbers<[1], [0], [0], [1], [0, 0, 1, 1], [], []>} : vector<128x8xbf16>, vector<8x128xbf16>, vector<128x128xf32> -> vector<128x128xf32>
    %c0_12 = arith.constant 0 : index
    %c0_13 = arith.constant 0 : index
    %9 = vector.load %arg5[%c0_12, %c0_13] : memref<1x128xf32, #tpu.memory_space<vmem>>, vector<1x128xf32>
    %10 = vector.broadcast %9 : vector<1x128xf32> to vector<128x128xf32>
    %11 = arith.addf %8, %10 : vector<128x128xf32>
    %cst_14 = arith.constant 0.000000e+00 : f32
    %12 = vector.broadcast %cst_14 : f32 to vector<128x128xf32>
    %13 = arith.maximumf %11, %12 : vector<128x128xf32>
    %14 = arith.truncf %13 : vector<128x128xf32> to vector<128x128xbf16>
    %c0_15 = arith.constant 0 : index
    %c0_16 = arith.constant 0 : index
    %15 = vector.load %arg6[%c0_15, %c0_16] : memref<128x128xbf16, #tpu.memory_space<vmem>>, vector<128x128xbf16>
    %16 = vector.extract_strided_slice %6 {offsets = [0, 0], sizes = [1, 128], strides = [1, 1]} : vector<8x128xf32> to vector<1x128xf32>
    %c0_17 = arith.constant 0 : index
    %c0_18 = arith.constant 0 : index
    %17 = vector.load %arg7[%c0_17, %c0_18] : memref<128x128xbf16, #tpu.memory_space<vmem>>, vector<128x128xbf16>
    %18 = vector.extract_strided_slice %6 {offsets = [1, 0], sizes = [1, 128], strides = [1, 1]} : vector<8x128xf32> to vector<1x128xf32>
    %cst_19 = arith.constant dense<0.000000e+00> : vector<128x128xf32>
    %19 = tpu.matmul %3, %14, %cst_19 {dimension_numbers = #tpu.dot_dimension_numbers<[1], [0], [0], [1], [0, 0, 1, 1], [], []>} : vector<128x128xbf16>, vector<128x128xbf16>, vector<128x128xf32> -> vector<128x128xf32>
    %20 = arith.truncf %19 : vector<128x128xf32> to vector<128x128xbf16>
    %cst_20 = arith.constant dense<0.000000e+00> : vector<128x128xf32>
    %21 = tpu.matmul %20, %15, %cst_20 {dimension_numbers = #tpu.dot_dimension_numbers<[1], [0], [0], [1], [0, 0, 1, 1], [], []>} : vector<128x128xbf16>, vector<128x128xbf16>, vector<128x128xf32> -> vector<128x128xf32>
    %22 = vector.broadcast %16 : vector<1x128xf32> to vector<128x128xf32>
    %23 = arith.addf %21, %22 : vector<128x128xf32>
    %cst_21 = arith.constant 0.000000e+00 : f32
    %24 = vector.broadcast %cst_21 : f32 to vector<128x128xf32>
    %25 = arith.maximumf %23, %24 : vector<128x128xf32>
    %26 = arith.truncf %25 : vector<128x128xf32> to vector<128x128xbf16>
    %cst_22 = arith.constant dense<0.000000e+00> : vector<128x128xf32>
    %27 = tpu.matmul %26, %17, %cst_22 {dimension_numbers = #tpu.dot_dimension_numbers<[1], [0], [0], [1], [0, 0, 1, 1], [], []>} : vector<128x128xbf16>, vector<128x128xbf16>, vector<128x128xf32> -> vector<128x128xf32>
    %28 = vector.broadcast %18 : vector<1x128xf32> to vector<128x128xf32>
    %29 = arith.addf %27, %28 : vector<128x128xf32>
    %cst_23 = arith.constant 0.000000e+00 : f32
    %30 = vector.broadcast %cst_23 : f32 to vector<128x128xf32>
    %31 = arith.maximumf %29, %30 : vector<128x128xf32>
    %32 = arith.truncf %31 : vector<128x128xf32> to vector<128x128xbf16>
    %c0_24 = arith.constant 0 : index
    %c0_25 = arith.constant 0 : index
    %33 = vector.load %arg8[%c0_24, %c0_25] : memref<128x128xbf16, #tpu.memory_space<vmem>>, vector<128x128xbf16>
    %34 = vector.extract_strided_slice %6 {offsets = [2, 0], sizes = [1, 128], strides = [1, 1]} : vector<8x128xf32> to vector<1x128xf32>
    %c0_26 = arith.constant 0 : index
    %c0_27 = arith.constant 0 : index
    %35 = vector.load %arg9[%c0_26, %c0_27] : memref<128x128xbf16, #tpu.memory_space<vmem>>, vector<128x128xbf16>
    %36 = vector.extract_strided_slice %6 {offsets = [3, 0], sizes = [1, 128], strides = [1, 1]} : vector<8x128xf32> to vector<1x128xf32>
    %cst_28 = arith.constant dense<0.000000e+00> : vector<128x128xf32>
    %37 = tpu.matmul %3, %32, %cst_28 {dimension_numbers = #tpu.dot_dimension_numbers<[1], [0], [0], [1], [0, 0, 1, 1], [], []>} : vector<128x128xbf16>, vector<128x128xbf16>, vector<128x128xf32> -> vector<128x128xf32>
    %38 = arith.truncf %37 : vector<128x128xf32> to vector<128x128xbf16>
    %cst_29 = arith.constant dense<0.000000e+00> : vector<128x128xf32>
    %39 = tpu.matmul %38, %33, %cst_29 {dimension_numbers = #tpu.dot_dimension_numbers<[1], [0], [0], [1], [0, 0, 1, 1], [], []>} : vector<128x128xbf16>, vector<128x128xbf16>, vector<128x128xf32> -> vector<128x128xf32>
    %40 = vector.broadcast %34 : vector<1x128xf32> to vector<128x128xf32>
    %41 = arith.addf %39, %40 : vector<128x128xf32>
    %cst_30 = arith.constant 0.000000e+00 : f32
    %42 = vector.broadcast %cst_30 : f32 to vector<128x128xf32>
    %43 = arith.maximumf %41, %42 : vector<128x128xf32>
    %44 = arith.truncf %43 : vector<128x128xf32> to vector<128x128xbf16>
    %cst_31 = arith.constant dense<0.000000e+00> : vector<128x128xf32>
    %45 = tpu.matmul %44, %35, %cst_31 {dimension_numbers = #tpu.dot_dimension_numbers<[1], [0], [0], [1], [0, 0, 1, 1], [], []>} : vector<128x128xbf16>, vector<128x128xbf16>, vector<128x128xf32> -> vector<128x128xf32>
    %46 = vector.broadcast %36 : vector<1x128xf32> to vector<128x128xf32>
    %47 = arith.addf %45, %46 : vector<128x128xf32>
    %cst_32 = arith.constant 0.000000e+00 : f32
    %48 = vector.broadcast %cst_32 : f32 to vector<128x128xf32>
    %49 = arith.maximumf %47, %48 : vector<128x128xf32>
    %50 = arith.truncf %49 : vector<128x128xf32> to vector<128x128xbf16>
    %c0_33 = arith.constant 0 : index
    %c0_34 = arith.constant 0 : index
    %51 = vector.load %arg10[%c0_33, %c0_34] : memref<128x128xbf16, #tpu.memory_space<vmem>>, vector<128x128xbf16>
    %52 = vector.extract_strided_slice %6 {offsets = [4, 0], sizes = [1, 128], strides = [1, 1]} : vector<8x128xf32> to vector<1x128xf32>
    %c0_35 = arith.constant 0 : index
    %c0_36 = arith.constant 0 : index
    %53 = vector.load %arg11[%c0_35, %c0_36] : memref<128x128xbf16, #tpu.memory_space<vmem>>, vector<128x128xbf16>
    %54 = vector.extract_strided_slice %6 {offsets = [5, 0], sizes = [1, 128], strides = [1, 1]} : vector<8x128xf32> to vector<1x128xf32>
    %cst_37 = arith.constant dense<0.000000e+00> : vector<128x128xf32>
    %55 = tpu.matmul %3, %50, %cst_37 {dimension_numbers = #tpu.dot_dimension_numbers<[1], [0], [0], [1], [0, 0, 1, 1], [], []>} : vector<128x128xbf16>, vector<128x128xbf16>, vector<128x128xf32> -> vector<128x128xf32>
    %56 = arith.truncf %55 : vector<128x128xf32> to vector<128x128xbf16>
    %cst_38 = arith.constant dense<0.000000e+00> : vector<128x128xf32>
    %57 = tpu.matmul %56, %51, %cst_38 {dimension_numbers = #tpu.dot_dimension_numbers<[1], [0], [0], [1], [0, 0, 1, 1], [], []>} : vector<128x128xbf16>, vector<128x128xbf16>, vector<128x128xf32> -> vector<128x128xf32>
    %58 = vector.broadcast %52 : vector<1x128xf32> to vector<128x128xf32>
    %59 = arith.addf %57, %58 : vector<128x128xf32>
    %cst_39 = arith.constant 0.000000e+00 : f32
    %60 = vector.broadcast %cst_39 : f32 to vector<128x128xf32>
    %61 = arith.maximumf %59, %60 : vector<128x128xf32>
    %62 = arith.truncf %61 : vector<128x128xf32> to vector<128x128xbf16>
    %cst_40 = arith.constant dense<0.000000e+00> : vector<128x128xf32>
    %63 = tpu.matmul %62, %53, %cst_40 {dimension_numbers = #tpu.dot_dimension_numbers<[1], [0], [0], [1], [0, 0, 1, 1], [], []>} : vector<128x128xbf16>, vector<128x128xbf16>, vector<128x128xf32> -> vector<128x128xf32>
    %64 = vector.broadcast %54 : vector<1x128xf32> to vector<128x128xf32>
    %65 = arith.addf %63, %64 : vector<128x128xf32>
    %cst_41 = arith.constant 0.000000e+00 : f32
    %66 = vector.broadcast %cst_41 : f32 to vector<128x128xf32>
    %67 = arith.maximumf %65, %66 : vector<128x128xf32>
    %68 = arith.truncf %67 : vector<128x128xf32> to vector<128x128xbf16>
    %cst_42 = arith.constant dense<0.000000e+00> : vector<8x128xf32>
    %69 = tpu.matmul %5, %32, %cst_42 {dimension_numbers = #tpu.dot_dimension_numbers<[1], [0], [0], [1], [0, 0, 1, 1], [], []>} : vector<8x128xbf16>, vector<128x128xbf16>, vector<8x128xf32> -> vector<8x128xf32>
    %70 = arith.truncf %69 : vector<8x128xf32> to vector<8x128xbf16>
    %cst_43 = arith.constant dense<0.000000e+00> : vector<8x128xf32>
    %71 = tpu.matmul %5, %50, %cst_43 {dimension_numbers = #tpu.dot_dimension_numbers<[1], [0], [0], [1], [0, 0, 1, 1], [], []>} : vector<8x128xbf16>, vector<128x128xbf16>, vector<8x128xf32> -> vector<8x128xf32>
    %72 = arith.truncf %71 : vector<8x128xf32> to vector<8x128xbf16>
    %cst_44 = arith.constant dense<0.000000e+00> : vector<8x128xf32>
    %73 = tpu.matmul %5, %68, %cst_44 {dimension_numbers = #tpu.dot_dimension_numbers<[1], [0], [0], [1], [0, 0, 1, 1], [], []>} : vector<8x128xbf16>, vector<128x128xbf16>, vector<8x128xf32> -> vector<8x128xf32>
    %74 = arith.truncf %73 : vector<8x128xf32> to vector<8x128xbf16>
    %c0_45 = arith.constant 0 : index
    %c0_46 = arith.constant 0 : index
    %75 = vector.load %arg13[%c0_45, %c0_46] : memref<128x128xbf16, #tpu.memory_space<vmem>>, vector<128x128xbf16>
    %cst_47 = arith.constant dense<0.000000e+00> : vector<8x128xf32>
    %76 = tpu.matmul %70, %75, %cst_47 {dimension_numbers = #tpu.dot_dimension_numbers<[1], [0], [0], [1], [0, 0, 1, 1], [], []>} : vector<8x128xbf16>, vector<128x128xbf16>, vector<8x128xf32> -> vector<8x128xf32>
    %c0_48 = arith.constant 0 : index
    %c0_49 = arith.constant 0 : index
    %77 = vector.load %arg14[%c0_48, %c0_49] : memref<128x128xbf16, #tpu.memory_space<vmem>>, vector<128x128xbf16>
    %cst_50 = arith.constant dense<0.000000e+00> : vector<8x128xf32>
    %78 = tpu.matmul %72, %77, %cst_50 {dimension_numbers = #tpu.dot_dimension_numbers<[1], [0], [0], [1], [0, 0, 1, 1], [], []>} : vector<8x128xbf16>, vector<128x128xbf16>, vector<8x128xf32> -> vector<8x128xf32>
    %79 = arith.addf %76, %78 : vector<8x128xf32>
    %c0_51 = arith.constant 0 : index
    %c0_52 = arith.constant 0 : index
    %80 = vector.load %arg15[%c0_51, %c0_52] : memref<128x128xbf16, #tpu.memory_space<vmem>>, vector<128x128xbf16>
    %cst_53 = arith.constant dense<0.000000e+00> : vector<8x128xf32>
    %81 = tpu.matmul %74, %80, %cst_53 {dimension_numbers = #tpu.dot_dimension_numbers<[1], [0], [0], [1], [0, 0, 1, 1], [], []>} : vector<8x128xbf16>, vector<128x128xbf16>, vector<8x128xf32> -> vector<8x128xf32>
    %82 = arith.addf %79, %81 : vector<8x128xf32>
    %c0_54 = arith.constant 0 : index
    %c0_55 = arith.constant 0 : index
    %83 = vector.load %arg16[%c0_54, %c0_55] : memref<1x128xf32, #tpu.memory_space<vmem>>, vector<1x128xf32>
    %84 = vector.broadcast %83 : vector<1x128xf32> to vector<8x128xf32>
    %85 = arith.addf %82, %84 : vector<8x128xf32>
    %cst_56 = arith.constant 0.000000e+00 : f32
    %86 = vector.broadcast %cst_56 : f32 to vector<8x128xf32>
    %87 = arith.maximumf %85, %86 : vector<8x128xf32>
    %88 = arith.truncf %87 : vector<8x128xf32> to vector<8x128xbf16>
    %c0_57 = arith.constant 0 : index
    %c0_58 = arith.constant 0 : index
    %89 = vector.load %arg17[%c0_57, %c0_58] : memref<128x128xbf16, #tpu.memory_space<vmem>>, vector<128x128xbf16>
    %cst_59 = arith.constant dense<0.000000e+00> : vector<8x128xf32>
    %90 = tpu.matmul %88, %89, %cst_59 {dimension_numbers = #tpu.dot_dimension_numbers<[1], [0], [0], [1], [0, 0, 1, 1], [], []>} : vector<8x128xbf16>, vector<128x128xbf16>, vector<8x128xf32> -> vector<8x128xf32>
    %c0_60 = arith.constant 0 : index
    %c0_61 = arith.constant 0 : index
    %91 = vector.load %arg18[%c0_60, %c0_61] : memref<1x128xf32, #tpu.memory_space<vmem>>, vector<1x128xf32>
    %92 = vector.broadcast %91 : vector<1x128xf32> to vector<8x128xf32>
    %93 = arith.addf %90, %92 : vector<8x128xf32>
    %c0_62 = arith.constant 0 : index
    %c0_63 = arith.constant 0 : index
    %c0_64 = arith.constant 0 : index
    %94 = vector.load %arg19[%c0_62, %c0_63, %c0_64] : memref<1x8x128xf32, #tpu.memory_space<vmem>>, vector<1x8x128xf32>
    %95 = vector.shape_cast %94 : vector<1x8x128xf32> to vector<8x128xf32>
    %96 = vector.shape_cast %93 : vector<8x128xf32> to vector<1x8x128xf32>
    tpu.vector_store %arg19[%c0_62, %c0_63, %c0_64], %96 {strides = array<i32>} : memref<1x8x128xf32, #tpu.memory_space<vmem>>, vector<1x8x128xf32>,
    return
  }
  func.func @transform_0(%arg0: i32) -> (i32, i32, i32) {
    %c0_i32 = arith.constant 0 : i32
    %c0_i32_0 = arith.constant 0 : i32
    %c0_i32_1 = arith.constant 0 : i32
    return %arg0, %c0_i32, %c0_i32_0 : i32, i32, i32
  }
  func.func @transform_1(%arg0: i32) -> (i32, i32, i32) {
    %c0_i32 = arith.constant 0 : i32
    %c0_i32_0 = arith.constant 0 : i32
    %c0_i32_1 = arith.constant 0 : i32
    return %arg0, %c0_i32, %c0_i32_0 : i32, i32, i32
  }
  func.func @transform_2(%arg0: i32) -> (i32, i32, i32) {
    %c0_i32 = arith.constant 0 : i32
    %c0_i32_0 = arith.constant 0 : i32
    %c0_i32_1 = arith.constant 0 : i32
    return %arg0, %c0_i32, %c0_i32_0 : i32, i32, i32
  }
  func.func @transform_3(%arg0: i32) -> (i32, i32) {
    %c0_i32 = arith.constant 0 : i32
    %c0_i32_0 = arith.constant 0 : i32
    %c0_i32_1 = arith.constant 0 : i32
    return %c0_i32, %c0_i32_0 : i32, i32
  }
  func.func @transform_4(%arg0: i32) -> (i32, i32) {
    %c0_i32 = arith.constant 0 : i32
    %c0_i32_0 = arith.constant 0 : i32
    %c0_i32_1 = arith.constant 0 : i32
    return %c0_i32, %c0_i32_0 : i32, i32
  }
  func.func @transform_5(%arg0: i32) -> (i32, i32) {
    %c0_i32 = arith.constant 0 : i32
    %c0_i32_0 = arith.constant 0 : i32
    %c0_i32_1 = arith.constant 0 : i32
    return %c0_i32, %c0_i32_0 : i32, i32
  }
  func.func @transform_6(%arg0: i32) -> (i32, i32) {
    %c0_i32 = arith.constant 0 : i32
    %c0_i32_0 = arith.constant 0 : i32
    %c0_i32_1 = arith.constant 0 : i32
    return %c0_i32, %c0_i32_0 : i32, i32
  }
  func.func @transform_7(%arg0: i32) -> (i32, i32) {
    %c0_i32 = arith.constant 0 : i32
    %c0_i32_0 = arith.constant 0 : i32
    %c0_i32_1 = arith.constant 0 : i32
    return %c0_i32, %c0_i32_0 : i32, i32
  }
  func.func @transform_8(%arg0: i32) -> (i32, i32) {
    %c0_i32 = arith.constant 0 : i32
    %c0_i32_0 = arith.constant 0 : i32
    %c0_i32_1 = arith.constant 0 : i32
    return %c0_i32, %c0_i32_0 : i32, i32
  }
  func.func @transform_9(%arg0: i32) -> (i32, i32) {
    %c0_i32 = arith.constant 0 : i32
    %c0_i32_0 = arith.constant 0 : i32
    %c0_i32_1 = arith.constant 0 : i32
    return %c0_i32, %c0_i32_0 : i32, i32
  }
  func.func @transform_10(%arg0: i32) -> (i32, i32) {
    %c0_i32 = arith.constant 0 : i32
    %c0_i32_0 = arith.constant 0 : i32
    %c0_i32_1 = arith.constant 0 : i32
    return %c0_i32, %c0_i32_0 : i32, i32
  }
  func.func @transform_11(%arg0: i32) -> (i32, i32) {
    %c0_i32 = arith.constant 0 : i32
    %c0_i32_0 = arith.constant 0 : i32
    %c0_i32_1 = arith.constant 0 : i32
    return %c0_i32, %c0_i32_0 : i32, i32
  }
  func.func @transform_12(%arg0: i32) -> (i32, i32) {
    %c0_i32 = arith.constant 0 : i32
    %c0_i32_0 = arith.constant 0 : i32
    %c0_i32_1 = arith.constant 0 : i32
    return %c0_i32, %c0_i32_0 : i32, i32
  }
  func.func @transform_13(%arg0: i32) -> (i32, i32) {
    %c0_i32 = arith.constant 0 : i32
    %c0_i32_0 = arith.constant 0 : i32
    %c0_i32_1 = arith.constant 0 : i32
    return %c0_i32, %c0_i32_0 : i32, i32
  }
  func.func @transform_14(%arg0: i32) -> (i32, i32) {
    %c0_i32 = arith.constant 0 : i32
    %c0_i32_0 = arith.constant 0 : i32
    %c0_i32_1 = arith.constant 0 : i32
    return %c0_i32, %c0_i32_0 : i32, i32
  }
  func.func @transform_15(%arg0: i32) -> (i32, i32) {
    %c0_i32 = arith.constant 0 : i32
    %c0_i32_0 = arith.constant 0 : i32
    %c0_i32_1 = arith.constant 0 : i32
    return %c0_i32, %c0_i32_0 : i32, i32
  }
  func.func @transform_16(%arg0: i32) -> (i32, i32) {
    %c0_i32 = arith.constant 0 : i32
    %c0_i32_0 = arith.constant 0 : i32
    %c0_i32_1 = arith.constant 0 : i32
    return %c0_i32, %c0_i32_0 : i32, i32
  }
  func.func @transform_17(%arg0: i32) -> (i32, i32) {
    %c0_i32 = arith.constant 0 : i32
    %c0_i32_0 = arith.constant 0 : i32
    %c0_i32_1 = arith.constant 0 : i32
    return %c0_i32, %c0_i32_0 : i32, i32
  }
  func.func @transform_18(%arg0: i32) -> (i32, i32, i32) {
    %c0_i32 = arith.constant 0 : i32
    %c0_i32_0 = arith.constant 0 : i32
    %c0_i32_1 = arith.constant 0 : i32
    return %arg0, %c0_i32, %c0_i32_0 : i32, i32, i32
  }
}

</mosaic_0001>

<llo_original>
// kernel: tpu_custom_call.1
$region0: #{tpu_custom_call.1}
  #allocation0 [shape = 'u32[]', space=smem, size = 0x4, offset = 0x4, fixed_abs, tag = 'smem constant byte address 0x4 - core index']
  #allocation1 [shape = 'u32[144,128]{1,0:T(1,128)}', space=vmem, size = 0x12000, scoped, tag = 'internal scratch']
  %s0 = inlined_call_operand.vmem [shape: bf16[2,128,8], index: 0, kind: input, shape index: {}]
  %s1 = inlined_call_operand.vmem [shape: bf16[2,128,128], index: 1, kind: input, shape index: {}]
  %s2 = inlined_call_operand.hbm [shape: bf16[2,8,128], index: 2, kind: input, shape index: {}]
  %s3 = inlined_call_operand.hbm [shape: bf16[8,128], index: 3, kind: input, shape index: {}]
  %s4 = inlined_call_operand.hbm [shape: f32[1,128], index: 4, kind: input, shape index: {}]
  %s5 = inlined_call_operand.hbm [shape: bf16[128,128], index: 5, kind: input, shape index: {}]
  %s6 = inlined_call_operand.hbm [shape: bf16[128,128], index: 6, kind: input, shape index: {}]
  %s7 = inlined_call_operand.hbm [shape: bf16[128,128], index: 7, kind: input, shape index: {}]
  %s8 = inlined_call_operand.hbm [shape: bf16[128,128], index: 8, kind: input, shape index: {}]
  %s9 = inlined_call_operand.hbm [shape: bf16[128,128], index: 9, kind: input, shape index: {}]
  %s10 = inlined_call_operand.hbm [shape: bf16[128,128], index: 10, kind: input, shape index: {}]
  %s11 = inlined_call_operand.hbm [shape: f32[8,128], index: 11, kind: input, shape index: {}]
  %s12 = inlined_call_operand.hbm [shape: bf16[128,128], index: 12, kind: input, shape index: {}]
  %s13 = inlined_call_operand.hbm [shape: bf16[128,128], index: 13, kind: input, shape index: {}]
  %s14 = inlined_call_operand.hbm [shape: bf16[128,128], index: 14, kind: input, shape index: {}]
  %s15 = inlined_call_operand.hbm [shape: f32[1,128], index: 15, kind: input, shape index: {}]
  %s16 = inlined_call_operand.vmem [shape: bf16[128,128], index: 16, kind: input, shape index: {}]
  %s17 = inlined_call_operand.vmem [shape: f32[1,128], index: 17, kind: input, shape index: {}]
  %s18 = inlined_call_operand.hbm [shape: f32[2,8,128], index: 18, kind: output, shape index: {}]
  %s19 = sld [smem:[#allocation0]]
  $region161: #{tpu_custom_call.1} parent=0
    _
  %s21 = ssub.s32 1, %s19
  %s22 = scalar_select 0, %s21, %s19
  $region1: #{tpu_custom_call.1} parent=0
    #allocation2 [shape = 'u8[4096]{0}', space=vmem, size = 0x1000, scoped, tag = 'input window, operand 2']
    #allocation3 [shape = 's32[2]{0}', space=sflag, size = 0x8, scoped, tag = 'scoped memory for tpu_custom_call.1']
    #allocation4 [shape = 's32[2]{0}', space=sflag, size = 0x8, scoped, tag = 'scoped memory for tpu_custom_call.1']
    #allocation5 [shape = 'u8[2048]{0}', space=vmem, size = 0x800, scoped, tag = 'input window, operand 3, single buffered']
    #allocation6 [shape = 's32[1]{0}', space=sflag, size = 0x4, scoped, tag = 'scoped memory for tpu_custom_call.1']
    #allocation7 [shape = 'u8[512]{0}', space=vmem, size = 0x400, scoped, tag = 'input window, operand 4, single buffered']
    #allocation8 [shape = 'u8[32768]{0}', space=vmem, size = 0x8000, scoped, tag = 'input window, operand 5, single buffered']
    #allocation9 [shape = 's32[1]{0}', space=sflag, size = 0x4, scoped, tag = 'scoped memory for tpu_custom_call.1']
    #allocation10 [shape = 'u8[32768]{0}', space=vmem, size = 0x8000, scoped, tag = 'input window, operand 6, single buffered']
    #allocation11 [shape = 'u8[32768]{0}', space=vmem, size = 0x8000, scoped, tag = 'input window, operand 7, single buffered']
    #allocation12 [shape = 's32[1]{0}', space=sflag, size = 0x4, scoped, tag = 'scoped memory for tpu_custom_call.1']
    #allocation13 [shape = 'u8[32768]{0}', space=vmem, size = 0x8000, scoped, tag = 'input window, operand 8, single buffered']
    #allocation14 [shape = 'u8[32768]{0}', space=vmem, size = 0x8000, scoped, tag = 'input window, operand 9, single buffered']
    #allocation15 [shape = 's32[1]{0}', space=sflag, size = 0x4, scoped, tag = 'scoped memory for tpu_custom_call.1']
    #allocation16 [shape = 'u8[32768]{0}', space=vmem, size = 0x8000, scoped, tag = 'input window, operand 10, single buffered']
    #allocation17 [shape = 'u8[4096]{0}', space=vmem, size = 0x1000, scoped, tag = 'input window, operand 11, single buffered']
    #allocation18 [shape = 's32[1]{0}', space=sflag, size = 0x4, scoped, tag = 'scoped memory for tpu_custom_call.1']
    #allocation19 [shape = 'u8[32768]{0}', space=vmem, size = 0x8000, scoped, tag = 'input window, operand 12, single buffered']
    #allocation20 [shape = 'u8[32768]{0}', space=vmem, size = 0x8000, scoped, tag = 'input window, operand 13, single buffered']
    #allocation21 [shape = 's32[1]{0}', space=sflag, size = 0x4, scoped, tag = 'scoped memory for tpu_custom_call.1']
    #allocation22 [shape = 'u8[32768]{0}', space=vmem, size = 0x8000, scoped, tag = 'input window, operand 14, single buffered']
    #allocation23 [shape = 'u8[512]{0}', space=vmem, size = 0x400, scoped, tag = 'input window, operand 15, single buffered']
    #allocation24 [shape = 's32[1]{0}', space=sflag, size = 0x4, scoped, tag = 'scoped memory for tpu_custom_call.1']
    #allocation25 [shape = 'u8[8192]{0}', space=vmem, size = 0x2000, scoped, tag = 'output window, operand 0']
    %23 = vsyncpa [#allocation3], 0
    %s24 = scalar_lea.sflag [#allocation3], 1
    %25 = vsyncpa %s24, 0
    %26 = vsyncpa [#allocation6], 0
    %27 = vsyncpa [#allocation9], 0
    %28 = vsyncpa [#allocation12], 0
    %29 = vsyncpa [#allocation15], 0
    %30 = vsyncpa [#allocation18], 0
    %31 = vsyncpa [#allocation21], 0
    %32 = vsyncpa [#allocation24], 0
    %33 = vsyncpa [#allocation4], 0
    %s34 = scalar_lea.sflag [#allocation4], 1
    %35 = vsyncpa %s34, 0
    loop: start=0, step=1, limit=4
    $region2: #{tpu_custom_call.1} parent=1 // loop_pre_header
      _
    $region3: #{tpu_custom_call.1} parent=1 // loop_header
      %s37 = sphi 0, %s41
      %p38 = scmp.ge.s32.totalorder %s37, 4
      %s47 = sphi 0, %s49
      %s50 = sphi 0, %s47
      %s51 = sphi 0, %s50
      %s67 = sphi 0, %s51
      %s73 = sphi 0, %s75
      %s76 = sphi 0, %s73
      %s77 = sphi 0, %s76
      %s93 = sphi 0, %s77
      %s99 = sphi 0, %s101
      %s102 = sphi 0, %s99
      %s103 = sphi 0, %s102
      %s119 = sphi 0, %s103
      %s123 = sphi 0, %s123
      %s125 = sphi 0, %s123
      %s126 = sphi 0, %s125
      %s140 = sphi 0, %s126
      %s144 = sphi 0, %s144
      %s146 = sphi 0, %s144
      %s147 = sphi 0, %s146
      %s161 = sphi 0, %s147
      %s165 = sphi 0, %s165
      %s167 = sphi 0, %s165
      %s168 = sphi 0, %s167
      %s182 = sphi 0, %s168
      %s186 = sphi 0, %s186
      %s188 = sphi 0, %s186
      %s189 = sphi 0, %s188
      %s203 = sphi 0, %s189
      %s207 = sphi 0, %s207
      %s209 = sphi 0, %s207
      %s210 = sphi 0, %s209
      %s224 = sphi 0, %s210
      %s228 = sphi 0, %s228
      %s230 = sphi 0, %s228
      %s231 = sphi 0, %s230
      %s245 = sphi 0, %s231
      %s249 = sphi 0, %s249
      %s251 = sphi 0, %s249
      %s252 = sphi 0, %s251
      %s266 = sphi 0, %s252
      %s270 = sphi 0, %s270
      %s272 = sphi 0, %s270
      %s273 = sphi 0, %s272
      %s287 = sphi 0, %s273
      %s291 = sphi 0, %s291
      %s293 = sphi 0, %s291
      %s294 = sphi 0, %s293
      %s308 = sphi 0, %s294
      %s312 = sphi 0, %s312
      %s314 = sphi 0, %s312
      %s315 = sphi 0, %s314
      %s329 = sphi 0, %s315
      %s333 = sphi 0, %s333
      %s335 = sphi 0, %s333
      %s336 = sphi 0, %s335
      %s350 = sphi 0, %s336
      %s354 = sphi 0, %s354
      %s356 = sphi 0, %s354
      %s357 = sphi 0, %s356
      %s371 = sphi 0, %s357
      %s375 = sphi 0, %s375
      %s377 = sphi 0, %s375
      %s378 = sphi 0, %s377
      %s392 = sphi 0, %s378
      %s396 = sphi 0, %s396
      %s398 = sphi 0, %s396
      %s399 = sphi 0, %s398
      %s413 = sphi 0, %s399
      %s417 = sphi 0, %s417
      %s419 = sphi 0, %s417
      %s420 = sphi 0, %s419
      %s434 = sphi 0, %s420
      %s440 = sphi 0, %s442
      %s443 = sphi 0, %s440
      %s444 = sphi 0, %s443
      %s460 = sphi 0, %s444
    $region4: #{tpu_custom_call.1} parent=1 // loop_header_branch
      %40 = sbr.rel (%p38) target = $region8
    $region5: #{tpu_custom_call.1} parent=1 // loop_body
      %s42 = ssub.s32 %s37, 1
      %s43 = ssub.s32 %s37, 2
      %s44 = sadd.s32 %s37, 1
      %s45 = ssub.s32 %s37, %s44
      %p46 = scmp.eq.s32.totalorder %s45, 0
      %s48 = sadd.s32 %s47, 1
      %s49 = scalar_select %p46, %s47, %s48
      %p52 = pneg %p46
      %p53 = scmp.eq.s32.totalorder %s37, 1
      %p54 = por %p52, %p53
      %p55 = scmp.ne.s32.totalorder %s47, %s50
      %p56 = scmp.eq.s32.totalorder %s37, 0
      %p57 = por %p55, %p56
      %p58 = scmp.ne.s32.totalorder %s47, %s50
      %p59 = scmp.eq.s32.totalorder %s42, 1
      %p60 = por %p58, %p59
      %p61 = scmp.ne.s32.totalorder %s50, %s51
      %p62 = scmp.eq.s32.totalorder %s42, 0
      %p63 = por %p61, %p62
      %p64 = scmp.ne.s32.totalorder %s50, %s51
      %p65 = scmp.eq.s32.totalorder %s43, 1
      %p66 = por %p64, %p65
      %p68 = scmp.ne.s32.totalorder %s51, %s67
      %p69 = scmp.eq.s32.totalorder %s43, 0
      %p70 = por %p68, %p69
      %s71 = ssub.s32 %s37, %s44
      %p72 = scmp.eq.s32.totalorder %s71, 0
      %s74 = sadd.s32 %s73, 1
      %s75 = scalar_select %p72, %s73, %s74
      %p78 = pneg %p72
      %p79 = scmp.eq.s32.totalorder %s37, 1
      %p80 = por %p78, %p79
      %p81 = scmp.ne.s32.totalorder %s73, %s76
      %p82 = scmp.eq.s32.totalorder %s37, 0
      %p83 = por %p81, %p82
      %p84 = scmp.ne.s32.totalorder %s73, %s76
      %p85 = scmp.eq.s32.totalorder %s42, 1
      %p86 = por %p84, %p85
      %p87 = scmp.ne.s32.totalorder %s76, %s77
      %p88 = scmp.eq.s32.totalorder %s42, 0
      %p89 = por %p87, %p88
      %p90 = scmp.ne.s32.totalorder %s76, %s77
      %p91 = scmp.eq.s32.totalorder %s43, 1
      %p92 = por %p90, %p91
      %p94 = scmp.ne.s32.totalorder %s77, %s93
      %p95 = scmp.eq.s32.totalorder %s43, 0
      %p96 = por %p94, %p95
      %s97 = ssub.s32 %s37, %s44
      %p98 = scmp.eq.s32.totalorder %s97, 0
      %s100 = sadd.s32 %s99, 1
      %s101 = scalar_select %p98, %s99, %s100
      %p104 = pneg %p98
      %p105 = scmp.eq.s32.totalorder %s37, 1
      %p106 = por %p104, %p105
      %p107 = scmp.ne.s32.totalorder %s99, %s102
      %p108 = scmp.eq.s32.totalorder %s37, 0
      %p109 = por %p107, %p108
      %p110 = scmp.ne.s32.totalorder %s99, %s102
      %p111 = scmp.eq.s32.totalorder %s42, 1
      %p112 = por %p110, %p111
      %p113 = scmp.ne.s32.totalorder %s102, %s103
      %p114 = scmp.eq.s32.totalorder %s42, 0
      %p115 = por %p113, %p114
      %p116 = scmp.ne.s32.totalorder %s102, %s103
      %p117 = scmp.eq.s32.totalorder %s43, 1
      %p118 = por %p116, %p117
      %p120 = scmp.ne.s32.totalorder %s103, %s119
      %p121 = scmp.eq.s32.totalorder %s43, 0
      %p122 = por %p120, %p121
      %s124 = sadd.s32 %s123, 1
      %p127 = scmp.eq.s32.totalorder %s37, 1
      %p128 = scmp.ne.s32.totalorder %s123, %s125
      %p129 = scmp.eq.s32.totalorder %s37, 0
      %p130 = por %p128, %p129
      %p131 = scmp.ne.s32.totalorder %s123, %s125
      %p132 = scmp.eq.s32.totalorder %s42, 1
      %p133 = por %p131, %p132
      %p134 = scmp.ne.s32.totalorder %s125, %s126
      %p135 = scmp.eq.s32.totalorder %s42, 0
      %p136 = por %p134, %p135
      %p137 = scmp.ne.s32.totalorder %s125, %s126
      %p138 = scmp.eq.s32.totalorder %s43, 1
      %p139 = por %p137, %p138
      %p141 = scmp.ne.s32.totalorder %s126, %s140
      %p142 = scmp.eq.s32.totalorder %s43, 0
      %p143 = por %p141, %p142
      %s145 = sadd.s32 %s144, 1
      %p148 = scmp.eq.s32.totalorder %s37, 1
      %p149 = scmp.ne.s32.totalorder %s144, %s146
      %p150 = scmp.eq.s32.totalorder %s37, 0
      %p151 = por %p149, %p150
      %p152 = scmp.ne.s32.totalorder %s144, %s146
      %p153 = scmp.eq.s32.totalorder %s42, 1
      %p154 = por %p152, %p153
      %p155 = scmp.ne.s32.totalorder %s146, %s147
      %p156 = scmp.eq.s32.totalorder %s42, 0
      %p157 = por %p155, %p156
      %p158 = scmp.ne.s32.totalorder %s146, %s147
      %p159 = scmp.eq.s32.totalorder %s43, 1
      %p160 = por %p158, %p159
      %p162 = scmp.ne.s32.totalorder %s147, %s161
      %p163 = scmp.eq.s32.totalorder %s43, 0
      %p164 = por %p162, %p163
      %s166 = sadd.s32 %s165, 1
      %p169 = scmp.eq.s32.totalorder %s37, 1
      %p170 = scmp.ne.s32.totalorder %s165, %s167
      %p171 = scmp.eq.s32.totalorder %s37, 0
      %p172 = por %p170, %p171
      %p173 = scmp.ne.s32.totalorder %s165, %s167
      %p174 = scmp.eq.s32.totalorder %s42, 1
      %p175 = por %p173, %p174
      %p176 = scmp.ne.s32.totalorder %s167, %s168
      %p177 = scmp.eq.s32.totalorder %s42, 0
      %p178 = por %p176, %p177
      %p179 = scmp.ne.s32.totalorder %s167, %s168
      %p180 = scmp.eq.s32.totalorder %s43, 1
      %p181 = por %p179, %p180
      %p183 = scmp.ne.s32.totalorder %s168, %s182
      %p184 = scmp.eq.s32.totalorder %s43, 0
      %p185 = por %p183, %p184
      %s187 = sadd.s32 %s186, 1
      %p190 = scmp.eq.s32.totalorder %s37, 1
      %p191 = scmp.ne.s32.totalorder %s186, %s188
      %p192 = scmp.eq.s32.totalorder %s37, 0
      %p193 = por %p191, %p192
      %p194 = scmp.ne.s32.totalorder %s186, %s188
      %p195 = scmp.eq.s32.totalorder %s42, 1
      %p196 = por %p194, %p195
      %p197 = scmp.ne.s32.totalorder %s188, %s189
      %p198 = scmp.eq.s32.totalorder %s42, 0
      %p199 = por %p197, %p198
      %p200 = scmp.ne.s32.totalorder %s188, %s189
      %p201 = scmp.eq.s32.totalorder %s43, 1
      %p202 = por %p200, %p201
      %p204 = scmp.ne.s32.totalorder %s189, %s203
      %p205 = scmp.eq.s32.totalorder %s43, 0
      %p206 = por %p204, %p205
      %s208 = sadd.s32 %s207, 1
      %p211 = scmp.eq.s32.totalorder %s37, 1
      %p212 = scmp.ne.s32.totalorder %s207, %s209
      %p213 = scmp.eq.s32.totalorder %s37, 0
      %p214 = por %p212, %p213
      %p215 = scmp.ne.s32.totalorder %s207, %s209
      %p216 = scmp.eq.s32.totalorder %s42, 1
      %p217 = por %p215, %p216
      %p218 = scmp.ne.s32.totalorder %s209, %s210
      %p219 = scmp.eq.s32.totalorder %s42, 0
      %p220 = por %p218, %p219
      %p221 = scmp.ne.s32.totalorder %s209, %s210
      %p222 = scmp.eq.s32.totalorder %s43, 1
      %p223 = por %p221, %p222
      %p225 = scmp.ne.s32.totalorder %s210, %s224
      %p226 = scmp.eq.s32.totalorder %s43, 0
      %p227 = por %p225, %p226
      %s229 = sadd.s32 %s228, 1
      %p232 = scmp.eq.s32.totalorder %s37, 1
      %p233 = scmp.ne.s32.totalorder %s228, %s230
      %p234 = scmp.eq.s32.totalorder %s37, 0
      %p235 = por %p233, %p234
      %p236 = scmp.ne.s32.totalorder %s228, %s230
      %p237 = scmp.eq.s32.totalorder %s42, 1
      %p238 = por %p236, %p237
      %p239 = scmp.ne.s32.totalorder %s230, %s231
      %p240 = scmp.eq.s32.totalorder %s42, 0
      %p241 = por %p239, %p240
      %p242 = scmp.ne.s32.totalorder %s230, %s231
      %p243 = scmp.eq.s32.totalorder %s43, 1
      %p244 = por %p242, %p243
      %p246 = scmp.ne.s32.totalorder %s231, %s245
      %p247 = scmp.eq.s32.totalorder %s43, 0
      %p248 = por %p246, %p247
      %s250 = sadd.s32 %s249, 1
      %p253 = scmp.eq.s32.totalorder %s37, 1
      %p254 = scmp.ne.s32.totalorder %s249, %s251
      %p255 = scmp.eq.s32.totalorder %s37, 0
      %p256 = por %p254, %p255
      %p257 = scmp.ne.s32.totalorder %s249, %s251
      %p258 = scmp.eq.s32.totalorder %s42, 1
      %p259 = por %p257, %p258
      %p260 = scmp.ne.s32.totalorder %s251, %s252
      %p261 = scmp.eq.s32.totalorder %s42, 0
      %p262 = por %p260, %p261
      %p263 = scmp.ne.s32.totalorder %s251, %s252
      %p264 = scmp.eq.s32.totalorder %s43, 1
      %p265 = por %p263, %p264
      %p267 = scmp.ne.s32.totalorder %s252, %s266
      %p268 = scmp.eq.s32.totalorder %s43, 0
      %p269 = por %p267, %p268
      %s271 = sadd.s32 %s270, 1
      %p274 = scmp.eq.s32.totalorder %s37, 1
      %p275 = scmp.ne.s32.totalorder %s270, %s272
      %p276 = scmp.eq.s32.totalorder %s37, 0
      %p277 = por %p275, %p276
      %p278 = scmp.ne.s32.totalorder %s270, %s272
      %p279 = scmp.eq.s32.totalorder %s42, 1
      %p280 = por %p278, %p279
      %p281 = scmp.ne.s32.totalorder %s272, %s273
      %p282 = scmp.eq.s32.totalorder %s42, 0
      %p283 = por %p281, %p282
      %p284 = scmp.ne.s32.totalorder %s272, %s273
      %p285 = scmp.eq.s32.totalorder %s43, 1
      %p286 = por %p284, %p285
      %p288 = scmp.ne.s32.totalorder %s273, %s287
      %p289 = scmp.eq.s32.totalorder %s43, 0
      %p290 = por %p288, %p289
      %s292 = sadd.s32 %s291, 1
      %p295 = scmp.eq.s32.totalorder %s37, 1
      %p296 = scmp.ne.s32.totalorder %s291, %s293
      %p297 = scmp.eq.s32.totalorder %s37, 0
      %p298 = por %p296, %p297
      %p299 = scmp.ne.s32.totalorder %s291, %s293
      %p300 = scmp.eq.s32.totalorder %s42, 1
      %p301 = por %p299, %p300
      %p302 = scmp.ne.s32.totalorder %s293, %s294
      %p303 = scmp.eq.s32.totalorder %s42, 0
      %p304 = por %p302, %p303
      %p305 = scmp.ne.s32.totalorder %s293, %s294
      %p306 = scmp.eq.s32.totalorder %s43, 1
      %p307 = por %p305, %p306
      %p309 = scmp.ne.s32.totalorder %s294, %s308
      %p310 = scmp.eq.s32.totalorder %s43, 0
      %p311 = por %p309, %p310
      %s313 = sadd.s32 %s312, 1
      %p316 = scmp.eq.s32.totalorder %s37, 1
      %p317 = scmp.ne.s32.totalorder %s312, %s314
      %p318 = scmp.eq.s32.totalorder %s37, 0
      %p319 = por %p317, %p318
      %p320 = scmp.ne.s32.totalorder %s312, %s314
      %p321 = scmp.eq.s32.totalorder %s42, 1
      %p322 = por %p320, %p321
      %p323 = scmp.ne.s32.totalorder %s314, %s315
      %p324 = scmp.eq.s32.totalorder %s42, 0
      %p325 = por %p323, %p324
      %p326 = scmp.ne.s32.totalorder %s314, %s315
      %p327 = scmp.eq.s32.totalorder %s43, 1
      %p328 = por %p326, %p327
      %p330 = scmp.ne.s32.totalorder %s315, %s329
      %p331 = scmp.eq.s32.totalorder %s43, 0
      %p332 = por %p330, %p331
      %s334 = sadd.s32 %s333, 1
      %p337 = scmp.eq.s32.totalorder %s37, 1
      %p338 = scmp.ne.s32.totalorder %s333, %s335
      %p339 = scmp.eq.s32.totalorder %s37, 0
      %p340 = por %p338, %p339
      %p341 = scmp.ne.s32.totalorder %s333, %s335
      %p342 = scmp.eq.s32.totalorder %s42, 1
      %p343 = por %p341, %p342
      %p344 = scmp.ne.s32.totalorder %s335, %s336
      %p345 = scmp.eq.s32.totalorder %s42, 0
      %p346 = por %p344, %p345
      %p347 = scmp.ne.s32.totalorder %s335, %s336
      %p348 = scmp.eq.s32.totalorder %s43, 1
      %p349 = por %p347, %p348
      %p351 = scmp.ne.s32.totalorder %s336, %s350
      %p352 = scmp.eq.s32.totalorder %s43, 0
      %p353 = por %p351, %p352
      %s355 = sadd.s32 %s354, 1
      %p358 = scmp.eq.s32.totalorder %s37, 1
      %p359 = scmp.ne.s32.totalorder %s354, %s356
      %p360 = scmp.eq.s32.totalorder %s37, 0
      %p361 = por %p359, %p360
      %p362 = scmp.ne.s32.totalorder %s354, %s356
      %p363 = scmp.eq.s32.totalorder %s42, 1
      %p364 = por %p362, %p363
      %p365 = scmp.ne.s32.totalorder %s356, %s357
      %p366 = scmp.eq.s32.totalorder %s42, 0
      %p367 = por %p365, %p366
      %p368 = scmp.ne.s32.totalorder %s356, %s357
      %p369 = scmp.eq.s32.totalorder %s43, 1
      %p370 = por %p368, %p369
      %p372 = scmp.ne.s32.totalorder %s357, %s371
      %p373 = scmp.eq.s32.totalorder %s43, 0
      %p374 = por %p372, %p373
      %s376 = sadd.s32 %s375, 1
      %p379 = scmp.eq.s32.totalorder %s37, 1
      %p380 = scmp.ne.s32.totalorder %s375, %s377
      %p381 = scmp.eq.s32.totalorder %s37, 0
      %p382 = por %p380, %p381
      %p383 = scmp.ne.s32.totalorder %s375, %s377
      %p384 = scmp.eq.s32.totalorder %s42, 1
      %p385 = por %p383, %p384
      %p386 = scmp.ne.s32.totalorder %s377, %s378
      %p387 = scmp.eq.s32.totalorder %s42, 0
      %p388 = por %p386, %p387
      %p389 = scmp.ne.s32.totalorder %s377, %s378
      %p390 = scmp.eq.s32.totalorder %s43, 1
      %p391 = por %p389, %p390
      %p393 = scmp.ne.s32.totalorder %s378, %s392
      %p394 = scmp.eq.s32.totalorder %s43, 0
      %p395 = por %p393, %p394
      %s397 = sadd.s32 %s396, 1
      %p400 = scmp.eq.s32.totalorder %s37, 1
      %p401 = scmp.ne.s32.totalorder %s396, %s398
      %p402 = scmp.eq.s32.totalorder %s37, 0
      %p403 = por %p401, %p402
      %p404 = scmp.ne.s32.totalorder %s396, %s398
      %p405 = scmp.eq.s32.totalorder %s42, 1
      %p406 = por %p404, %p405
      %p407 = scmp.ne.s32.totalorder %s398, %s399
      %p408 = scmp.eq.s32.totalorder %s42, 0
      %p409 = por %p407, %p408
      %p410 = scmp.ne.s32.totalorder %s398, %s399
      %p411 = scmp.eq.s32.totalorder %s43, 1
      %p412 = por %p410, %p411
      %p414 = scmp.ne.s32.totalorder %s399, %s413
      %p415 = scmp.eq.s32.totalorder %s43, 0
      %p416 = por %p414, %p415
      %s418 = sadd.s32 %s417, 1
      %p421 = scmp.eq.s32.totalorder %s37, 1
      %p422 = scmp.ne.s32.totalorder %s417, %s419
      %p423 = scmp.eq.s32.totalorder %s37, 0
      %p424 = por %p422, %p423
      %p425 = scmp.ne.s32.totalorder %s417, %s419
      %p426 = scmp.eq.s32.totalorder %s42, 1
      %p427 = por %p425, %p426
      %p428 = scmp.ne.s32.totalorder %s419, %s420
      %p429 = scmp.eq.s32.totalorder %s42, 0
      %p430 = por %p428, %p429
      %p431 = scmp.ne.s32.totalorder %s419, %s420
      %p432 = scmp.eq.s32.totalorder %s43, 1
      %p433 = por %p431, %p432
      %p435 = scmp.ne.s32.totalorder %s420, %s434
      %p436 = scmp.eq.s32.totalorder %s43, 0
      %p437 = por %p435, %p436
      %s438 = ssub.s32 %s37, %s44
      %p439 = scmp.eq.s32.totalorder %s438, 0
      %s441 = sadd.s32 %s440, 1
      %s442 = scalar_select %p439, %s440, %s441
      %p445 = pneg %p439
      %p446 = scmp.eq.s32.totalorder %s37, 1
      %p447 = por %p445, %p446
      %p448 = scmp.ne.s32.totalorder %s440, %s443
      %p449 = scmp.eq.s32.totalorder %s37, 0
      %p450 = por %p448, %p449
      %p451 = scmp.ne.s32.totalorder %s440, %s443
      %p452 = scmp.eq.s32.totalorder %s42, 1
      %p453 = por %p451, %p452
      %p454 = scmp.ne.s32.totalorder %s443, %s444
      %p455 = scmp.eq.s32.totalorder %s42, 0
      %p456 = por %p454, %p455
      %p457 = scmp.ne.s32.totalorder %s443, %s444
      %p458 = scmp.eq.s32.totalorder %s43, 1
      %p459 = por %p457, %p458
      %p461 = scmp.ne.s32.totalorder %s444, %s460
      %p462 = scmp.eq.s32.totalorder %s43, 0
      %p463 = por %p461, %p462
      %p464 = scmp.le.s32.totalorder 1, %s37
      %p465 = scmp.lt.s32.totalorder %s37, 3
      %p466 = pnand %p464, %p465
      %p467 = pneg %p466
      // Predicated region
      $region9: #{tpu_custom_call.1} parent=5 // pred_check
        _
      $region10: #{tpu_custom_call.1} parent=5 // pred_check_branch
        %469 = sbr.rel (%p466) target = $region12
      $region11: #{tpu_custom_call.1} parent=5 // pred_region
        %s470 = ssub.s32 %s37, 1
        // Predicated region
        $region13: #{tpu_custom_call.1} parent=11 // pred_check
          %p471 = pneg %p136
        $region14: #{tpu_custom_call.1} parent=11 // pred_check_branch
          %473 = sbr.rel (%p471) target = $region16
        $region15: #{tpu_custom_call.1} parent=11 // pred_region
          %s475 = ssub.s32 64, 64
          %476 = vsyncadd [#allocation6], %s475
          %s478 = sshll.u32 [#allocation5], 4
          %s479 = int_to_ptr.vmem [resolvable:$true] %s478
          %481 = dma.hbm_to_vmem [thread:$0]  %s3, 64, %s479, [#allocation6]
        $region16: #{tpu_custom_call.1} parent=11 // pred_fallthru
          _
        // Predicated region
        $region17: #{tpu_custom_call.1} parent=11 // pred_check
          %p482 = pneg %p157
        $region18: #{tpu_custom_call.1} parent=11 // pred_check_branch
          %484 = sbr.rel (%p482) target = $region20
        $region19: #{tpu_custom_call.1} parent=11 // pred_region
          %s486 = ssub.s32 16, 16
          %487 = vsyncadd [#allocation6], %s486
          %s489 = sshll.u32 [#allocation7], 4
          %s490 = int_to_ptr.vmem [resolvable:$true] %s489
          %492 = dma.hbm_to_vmem [thread:$0]  %s4, 16, %s490, [#allocation6]
        $region20: #{tpu_custom_call.1} parent=11 // pred_fallthru
          _
        // Predicated region
        $region21: #{tpu_custom_call.1} parent=11 // pred_check
          %p493 = pneg %p178
        $region22: #{tpu_custom_call.1} parent=11 // pred_check_branch
          %495 = sbr.rel (%p493) target = $region24
        $region23: #{tpu_custom_call.1} parent=11 // pred_region
          %s497 = ssub.s32 1024, 1024
          %498 = vsyncadd [#allocation9], %s497
          %s499 = sshll.u32 [#allocation8], 4
          %s500 = int_to_ptr.vmem [resolvable:$true] %s499
          %505 = dma.hbm_to_vmem [thread:$0]  %s5, 1024, %s500, [#allocation9], 64, 64, 4
        $region24: #{tpu_custom_call.1} parent=11 // pred_fallthru
          _
        // Predicated region
        $region25: #{tpu_custom_call.1} parent=11 // pred_check
          %p506 = pneg %p199
        $region26: #{tpu_custom_call.1} parent=11 // pred_check_branch
          %508 = sbr.rel (%p506) target = $region28
        $region27: #{tpu_custom_call.1} parent=11 // pred_region
          %s510 = ssub.s32 1024, 1024
          %511 = vsyncadd [#allocation9], %s510
          %s512 = sshll.u32 [#allocation10], 4
          %s513 = int_to_ptr.vmem [resolvable:$true] %s512
          %518 = dma.hbm_to_vmem [thread:$0]  %s6, 1024, %s513, [#allocation9], 64, 64, 4
        $region28: #{tpu_custom_call.1} parent=11 // pred_fallthru
          _
        // Predicated region
        $region29: #{tpu_custom_call.1} parent=11 // pred_check
          %p519 = pneg %p220
        $region30: #{tpu_custom_call.1} parent=11 // pred_check_branch
          %521 = sbr.rel (%p519) target = $region32
        $region31: #{tpu_custom_call.1} parent=11 // pred_region
          %s523 = ssub.s32 1024, 1024
          %524 = vsyncadd [#allocation12], %s523
          %s525 = sshll.u32 [#allocation11], 4
          %s526 = int_to_ptr.vmem [resolvable:$true] %s525
          %531 = dma.hbm_to_vmem [thread:$0]  %s7, 1024, %s526, [#allocation12], 64, 64, 4
        $region32: #{tpu_custom_call.1} parent=11 // pred_fallthru
          _
        // Predicated region
        $region33: #{tpu_custom_call.1} parent=11 // pred_check
          %p532 = pneg %p241
        $region34: #{tpu_custom_call.1} parent=11 // pred_check_branch
          %534 = sbr.rel (%p532) target = $region36
        $region35: #{tpu_custom_call.1} parent=11 // pred_region
          %s536 = ssub.s32 1024, 1024
          %537 = vsyncadd [#allocation12], %s536
          %s538 = sshll.u32 [#allocation13], 4
          %s539 = int_to_ptr.vmem [resolvable:$true] %s538
          %544 = dma.hbm_to_vmem [thread:$0]  %s8, 1024, %s539, [#allocation12], 64, 64, 4
        $region36: #{tpu_custom_call.1} parent=11 // pred_fallthru
          _
        // Predicated region
        $region37: #{tpu_custom_call.1} parent=11 // pred_check
          %p545 = pneg %p262
        $region38: #{tpu_custom_call.1} parent=11 // pred_check_branch
          %547 = sbr.rel (%p545) target = $region40
        $region39: #{tpu_custom_call.1} parent=11 // pred_region
          %s549 = ssub.s32 1024, 1024
          %550 = vsyncadd [#allocation15], %s549
          %s551 = sshll.u32 [#allocation14], 4
          %s552 = int_to_ptr.vmem [resolvable:$true] %s551
          %557 = dma.hbm_to_vmem [thread:$0]  %s9, 1024, %s552, [#allocation15], 64, 64, 4
        $region40: #{tpu_custom_call.1} parent=11 // pred_fallthru
          _
        // Predicated region
        $region41: #{tpu_custom_call.1} parent=11 // pred_check
          %p558 = pneg %p283
        $region42: #{tpu_custom_call.1} parent=11 // pred_check_branch
          %560 = sbr.rel (%p558) target = $region44
        $region43: #{tpu_custom_call.1} parent=11 // pred_region
          %s562 = ssub.s32 1024, 1024
          %563 = vsyncadd [#allocation15], %s562
          %s564 = sshll.u32 [#allocation16], 4
          %s565 = int_to_ptr.vmem [resolvable:$true] %s564
          %570 = dma.hbm_to_vmem [thread:$0]  %s10, 1024, %s565, [#allocation15], 64, 64, 4
        $region44: #{tpu_custom_call.1} parent=11 // pred_fallthru
          _
        // Predicated region
        $region45: #{tpu_custom_call.1} parent=11 // pred_check
          %p571 = pneg %p304
        $region46: #{tpu_custom_call.1} parent=11 // pred_check_branch
          %573 = sbr.rel (%p571) target = $region48
        $region47: #{tpu_custom_call.1} parent=11 // pred_region
          %s575 = ssub.s32 128, 128
          %576 = vsyncadd [#allocation18], %s575
          %s578 = sshll.u32 [#allocation17], 4
          %s579 = int_to_ptr.vmem [resolvable:$true] %s578
          %581 = dma.hbm_to_vmem [thread:$0]  %s11, 128, %s579, [#allocation18]
        $region48: #{tpu_custom_call.1} parent=11 // pred_fallthru
          _
        // Predicated region
        $region49: #{tpu_custom_call.1} parent=11 // pred_check
          %p582 = pneg %p325
        $region50: #{tpu_custom_call.1} parent=11 // pred_check_branch
          %584 = sbr.rel (%p582) target = $region52
        $region51: #{tpu_custom_call.1} parent=11 // pred_region
          %s586 = ssub.s32 1024, 1024
          %587 = vsyncadd [#allocation18], %s586
          %s588 = sshll.u32 [#allocation19], 4
          %s589 = int_to_ptr.vmem [resolvable:$true] %s588
          %594 = dma.hbm_to_vmem [thread:$0]  %s12, 1024, %s589, [#allocation18], 64, 64, 4
        $region52: #{tpu_custom_call.1} parent=11 // pred_fallthru
          _
        // Predicated region
        $region53: #{tpu_custom_call.1} parent=11 // pred_check
          %p595 = pneg %p346
        $region54: #{tpu_custom_call.1} parent=11 // pred_check_branch
          %597 = sbr.rel (%p595) target = $region56
        $region55: #{tpu_custom_call.1} parent=11 // pred_region
          %s599 = ssub.s32 1024, 1024
          %600 = vsyncadd [#allocation21], %s599
          %s601 = sshll.u32 [#allocation20], 4
          %s602 = int_to_ptr.vmem [resolvable:$true] %s601
          %607 = dma.hbm_to_vmem [thread:$0]  %s13, 1024, %s602, [#allocation21], 64, 64, 4
        $region56: #{tpu_custom_call.1} parent=11 // pred_fallthru
          _
        // Predicated region
        $region57: #{tpu_custom_call.1} parent=11 // pred_check
          %p608 = pneg %p367
        $region58: #{tpu_custom_call.1} parent=11 // pred_check_branch
          %610 = sbr.rel (%p608) target = $region60
        $region59: #{tpu_custom_call.1} parent=11 // pred_region
          %s612 = ssub.s32 1024, 1024
          %613 = vsyncadd [#allocation21], %s612
          %s614 = sshll.u32 [#allocation22], 4
          %s615 = int_to_ptr.vmem [resolvable:$true] %s614
          %620 = dma.hbm_to_vmem [thread:$0]  %s14, 1024, %s615, [#allocation21], 64, 64, 4
        $region60: #{tpu_custom_call.1} parent=11 // pred_fallthru
          _
        // Predicated region
        $region61: #{tpu_custom_call.1} parent=11 // pred_check
          %p621 = pneg %p388
        $region62: #{tpu_custom_call.1} parent=11 // pred_check_branch
          %623 = sbr.rel (%p621) target = $region64
        $region63: #{tpu_custom_call.1} parent=11 // pred_region
          %s625 = ssub.s32 16, 16
          %626 = vsyncadd [#allocation24], %s625
          %s628 = sshll.u32 [#allocation23], 4
          %s629 = int_to_ptr.vmem [resolvable:$true] %s628
          %631 = dma.hbm_to_vmem [thread:$0]  %s15, 16, %s629, [#allocation24]
        $region64: #{tpu_custom_call.1} parent=11 // pred_fallthru
          _
        // Predicated region
        $region65: #{tpu_custom_call.1} parent=11 // pred_check
          %p632 = pneg %p409
        $region66: #{tpu_custom_call.1} parent=11 // pred_check_branch
          %634 = sbr.rel (%p632) target = $region68
        $region67: #{tpu_custom_call.1} parent=11 // pred_region
          _
        $region68: #{tpu_custom_call.1} parent=11 // pred_fallthru
          _
        // Predicated region
        $region69: #{tpu_custom_call.1} parent=11 // pred_check
          %p635 = pneg %p430
        $region70: #{tpu_custom_call.1} parent=11 // pred_check_branch
          %637 = sbr.rel (%p635) target = $region72
        $region71: #{tpu_custom_call.1} parent=11 // pred_region
          _
        $region72: #{tpu_custom_call.1} parent=11 // pred_fallthru
          _
      $region12: #{tpu_custom_call.1} parent=5 // pred_fallthru
        _
      %p638 = scmp.lt.s32.totalorder %s37, 2
      // Predicated region
      $region73: #{tpu_custom_call.1} parent=5 // pred_check
        %p639 = pneg %p638
      $region74: #{tpu_custom_call.1} parent=5 // pred_check_branch
        %641 = sbr.rel (%p639) target = $region76
      $region75: #{tpu_custom_call.1} parent=5 // pred_region
        // Predicated region
        $region77: #{tpu_custom_call.1} parent=75 // pred_check
          %p642 = pneg %p57
        $region78: #{tpu_custom_call.1} parent=75 // pred_check_branch
          %644 = sbr.rel (%p642) target = $region80
        $region79: #{tpu_custom_call.1} parent=75 // pred_region
          %p645 = scmp.lt.s32.totalorder %s37, 1
          %s646 = scalar_select %p645, %s37, 1
          %s647 = smul.addr %s646, 16
          %s648 = smul.addr %s647, 4
          %s649 = scalar_lea.vmem %s0, %s648
        $region80: #{tpu_custom_call.1} parent=75 // pred_fallthru
          _
        // Predicated region
        $region81: #{tpu_custom_call.1} parent=75 // pred_check
          %p650 = pneg %p83
        $region82: #{tpu_custom_call.1} parent=75 // pred_check_branch
          %652 = sbr.rel (%p650) target = $region84
        $region83: #{tpu_custom_call.1} parent=75 // pred_region
          %p653 = scmp.lt.s32.totalorder %s37, 1
          %s654 = scalar_select %p653, %s37, 1
          %s655 = smul.addr %s654, 16
          %s656 = smul.addr %s655, 4
          %s657 = scalar_lea.vmem %s1, %s656
        $region84: #{tpu_custom_call.1} parent=75 // pred_fallthru
          _
        // Predicated region
        $region85: #{tpu_custom_call.1} parent=75 // pred_check
          %p658 = pneg %p109
        $region86: #{tpu_custom_call.1} parent=75 // pred_check_branch
          %660 = sbr.rel (%p658) target = $region88
        $region87: #{tpu_custom_call.1} parent=75 // pred_region
          %s661 = sand.u32 %s99, 1
          %s662 = scalar_lea.sflag [#allocation3], %s661
          %s663 = sand.u32 %s99, 1
          %s664 = smul.addr %s663, 4
          %s665 = scalar_lea.vmem [#allocation2], %s664
          %s667 = ssub.s32 64, 64
          %668 = vsyncadd %s662, %s667
          %s669 = smul.addr %s37, 64
          %s670 = scalar_lea.hbm %s2, %s669
          %s672 = sshll.u32 %s665, 4
          %s673 = int_to_ptr.vmem [resolvable:$true] %s672
          %675 = dma.hbm_to_vmem [thread:$0]  %s670, 64, %s673, %s662
        $region88: #{tpu_custom_call.1} parent=75 // pred_fallthru
          _
      $region76: #{tpu_custom_call.1} parent=5 // pred_fallthru
        _
      %p676 = scmp.le.s32.totalorder 1, %s37
      %p677 = scmp.lt.s32.totalorder %s37, 3
      %p678 = pnand %p676, %p677
      %p679 = pneg %p678
      // Predicated region
      $region89: #{tpu_custom_call.1} parent=5 // pred_check
        _
      $region90: #{tpu_custom_call.1} parent=5 // pred_check_branch
        %681 = sbr.rel (%p678) target = $region92
      $region91: #{tpu_custom_call.1} parent=5 // pred_region
        %s682 = ssub.s32 %s37, 1
        %s683 = sand.u32 %s102, 1
        %s684 = scalar_lea.sflag [#allocation3], %s683
        %s685 = sand.u32 %s102, 1
        %s686 = smul.addr %s685, 4
        %s687 = scalar_lea.vmem [#allocation2], %s686
        // Predicated region
        $region93: #{tpu_custom_call.1} parent=91 // pred_check
          %p688 = pneg %p115
        $region94: #{tpu_custom_call.1} parent=91 // pred_check_branch
          %690 = sbr.rel (%p688) target = $region96
        $region95: #{tpu_custom_call.1} parent=91 // pred_region
          %691 = dma.done %s684, 64
        $region96: #{tpu_custom_call.1} parent=91 // pred_fallthru
          _
        // Predicated region
        $region97: #{tpu_custom_call.1} parent=91 // pred_check
          %p692 = pneg %p136
        $region98: #{tpu_custom_call.1} parent=91 // pred_check_branch
          %694 = sbr.rel (%p692) target = $region100
        $region99: #{tpu_custom_call.1} parent=91 // pred_region
          %695 = dma.done [#allocation6], 64
        $region100: #{tpu_custom_call.1} parent=91 // pred_fallthru
          _
        // Predicated region
        $region101: #{tpu_custom_call.1} parent=91 // pred_check
          %p696 = pneg %p157
        $region102: #{tpu_custom_call.1} parent=91 // pred_check_branch
          %698 = sbr.rel (%p696) target = $region104
        $region103: #{tpu_custom_call.1} parent=91 // pred_region
          %699 = dma.done [#allocation6], 16
        $region104: #{tpu_custom_call.1} parent=91 // pred_fallthru
          _
        // Predicated region
        $region105: #{tpu_custom_call.1} parent=91 // pred_check
          %p700 = pneg %p178
        $region106: #{tpu_custom_call.1} parent=91 // pred_check_branch
          %702 = sbr.rel (%p700) target = $region108
        $region107: #{tpu_custom_call.1} parent=91 // pred_region
          %703 = dma.done [#allocation9], 1024
        $region108: #{tpu_custom_call.1} parent=91 // pred_fallthru
          _
        // Predicated region
        $region109: #{tpu_custom_call.1} parent=91 // pred_check
          %p704 = pneg %p199
        $region110: #{tpu_custom_call.1} parent=91 // pred_check_branch
          %706 = sbr.rel (%p704) target = $region112
        $region111: #{tpu_custom_call.1} parent=91 // pred_region
          %707 = dma.done [#allocation9], 1024
        $region112: #{tpu_custom_call.1} parent=91 // pred_fallthru
          _
        // Predicated region
        $region113: #{tpu_custom_call.1} parent=91 // pred_check
          %p708 = pneg %p220
        $region114: #{tpu_custom_call.1} parent=91 // pred_check_branch
          %710 = sbr.rel (%p708) target = $region116
        $region115: #{tpu_custom_call.1} parent=91 // pred_region
          %711 = dma.done [#allocation12], 1024
        $region116: #{tpu_custom_call.1} parent=91 // pred_fallthru
          _
        // Predicated region
        $region117: #{tpu_custom_call.1} parent=91 // pred_check
          %p712 = pneg %p241
        $region118: #{tpu_custom_call.1} parent=91 // pred_check_branch
          %714 = sbr.rel (%p712) target = $region120
        $region119: #{tpu_custom_call.1} parent=91 // pred_region
          %715 = dma.done [#allocation12], 1024
        $region120: #{tpu_custom_call.1} parent=91 // pred_fallthru
          _
        // Predicated region
        $region121: #{tpu_custom_call.1} parent=91 // pred_check
          %p716 = pneg %p262
        $region122: #{tpu_custom_call.1} parent=91 // pred_check_branch
          %718 = sbr.rel (%p716) target = $region124
        $region123: #{tpu_custom_call.1} parent=91 // pred_region
          %719 = dma.done [#allocation15], 1024
        $region124: #{tpu_custom_call.1} parent=91 // pred_fallthru
          _
        // Predicated region
        $region125: #{tpu_custom_call.1} parent=91 // pred_check
          %p720 = pneg %p283
        $region126: #{tpu_custom_call.1} parent=91 // pred_check_branch
          %722 = sbr.rel (%p720) target = $region128
        $region127: #{tpu_custom_call.1} parent=91 // pred_region
          %723 = dma.done [#allocation15], 1024
        $region128: #{tpu_custom_call.1} parent=91 // pred_fallthru
          _
        // Predicated region
        $region129: #{tpu_custom_call.1} parent=91 // pred_check
          %p724 = pneg %p304
        $region130: #{tpu_custom_call.1} parent=91 // pred_check_branch
          %726 = sbr.rel (%p724) target = $region132
        $region131: #{tpu_custom_call.1} parent=91 // pred_region
          %727 = dma.done [#allocation18], 128
        $region132: #{tpu_custom_call.1} parent=91 // pred_fallthru
          _
        // Predicated region
        $region133: #{tpu_custom_call.1} parent=91 // pred_check
          %p728 = pneg %p325
        $region134: #{tpu_custom_call.1} parent=91 // pred_check_branch
          %730 = sbr.rel (%p728) target = $region136
        $region135: #{tpu_custom_call.1} parent=91 // pred_region
          %731 = dma.done [#allocation18], 1024
        $region136: #{tpu_custom_call.1} parent=91 // pred_fallthru
          _
        // Predicated region
        $region137: #{tpu_custom_call.1} parent=91 // pred_check
          %p732 = pneg %p346
        $region138: #{tpu_custom_call.1} parent=91 // pred_check_branch
          %734 = sbr.rel (%p732) target = $region140
        $region139: #{tpu_custom_call.1} parent=91 // pred_region
          %735 = dma.done [#allocation21], 1024
        $region140: #{tpu_custom_call.1} parent=91 // pred_fallthru
          _
        // Predicated region
        $region141: #{tpu_custom_call.1} parent=91 // pred_check
          %p736 = pneg %p367
        $region142: #{tpu_custom_call.1} parent=91 // pred_check_branch
          %738 = sbr.rel (%p736) target = $region144
        $region143: #{tpu_custom_call.1} parent=91 // pred_region
          %739 = dma.done [#allocation21], 1024
        $region144: #{tpu_custom_call.1} parent=91 // pred_fallthru
          _
        // Predicated region
        $region145: #{tpu_custom_call.1} parent=91 // pred_check
          %p740 = pneg %p388
        $region146: #{tpu_custom_call.1} parent=91 // pred_check_branch
          %742 = sbr.rel (%p740) target = $region148
        $region147: #{tpu_custom_call.1} parent=91 // pred_region
          %743 = dma.done [#allocation24], 16
        $region148: #{tpu_custom_call.1} parent=91 // pred_fallthru
          _
        %p744 = scmp.lt.s32.totalorder %s42, 1
        %s745 = scalar_select %p744, %s42, 1
        %s746 = smul.addr %s745, 16
        %s747 = smul.addr %s746, 4
        %s748 = scalar_lea.vmem %s0, %s747
        %p749 = pneg %p63
        %p750 = pneg %p60
        %p751 = scmp.lt.s32.totalorder %s42, 1
        %s752 = scalar_select %p751, %s42, 1
        %s753 = smul.addr %s752, 16
        %s754 = smul.addr %s753, 4
        %s755 = scalar_lea.vmem %s1, %s754
        %p756 = pneg %p89
        %p757 = pneg %p86
        %s758 = sand.u32 %s102, 1
        %s759 = scalar_lea.sflag [#allocation3], %s758
        %s760 = sand.u32 %s102, 1
        %s761 = smul.addr %s760, 4
        %s762 = scalar_lea.vmem [#allocation2], %s761
        %p763 = pneg %p115
        %p764 = pneg %p112
        %p765 = pneg %p136
        %p766 = pneg %p133
        %p767 = pneg %p157
        %p768 = pneg %p154
        %p769 = pneg %p178
        %p770 = pneg %p175
        %p771 = pneg %p199
        %p772 = pneg %p196
        %p773 = pneg %p220
        %p774 = pneg %p217
        %p775 = pneg %p241
        %p776 = pneg %p238
        %p777 = pneg %p262
        %p778 = pneg %p259
        %p779 = pneg %p283
        %p780 = pneg %p280
        %p781 = pneg %p304
        %p782 = pneg %p301
        %p783 = pneg %p325
        %p784 = pneg %p322
        %p785 = pneg %p346
        %p786 = pneg %p343
        %p787 = pneg %p367
        %p788 = pneg %p364
        %p789 = pneg %p388
        %p790 = pneg %p385
        %p791 = pneg %p409
        %p792 = pneg %p406
        %p793 = pneg %p430
        %p794 = pneg %p427
        %p795 = pneg %p456
        %p796 = pneg %p453
        %s797 = sand.u32 %s443, 1
        %s798 = scalar_lea.sflag [#allocation4], %s797
        %s799 = sand.u32 %s443, 1
        %s800 = smul.addr %s799, 8
        %s801 = scalar_lea.vmem [#allocation25], %s800
        %p802 = scmp.lt.s32.totalorder %s42, 1
        %s803 = scalar_select %p802, %s42, 1
        %s804 = smul.addr %s803, 16
        %s805 = smul.addr %s804, 4
        %s806 = scalar_lea.vmem %s0, %s805
        %p807 = scmp.lt.s32.totalorder %s42, 1
        %s808 = scalar_select %p807, %s42, 1
        %s809 = smul.addr %s808, 16
        %s810 = smul.addr %s809, 4
        %s811 = scalar_lea.vmem %s1, %s810
        %v813 = vld [vmem:[%s806] sm:$0xf]
        %v814 = vld [vmem:[%s806 + $0x4] sm:$0xf]
        %v815 = vld [vmem:[%s806 + $0x8] sm:$0xf]
        %v816 = vld [vmem:[%s806 + $0xc] sm:$0xf]
        %v817 = vld [vmem:[%s806 + $0x10] sm:$0xf]
        %v818 = vld [vmem:[%s806 + $0x14] sm:$0xf]
        %v819 = vld [vmem:[%s806 + $0x18] sm:$0xf]
        %v820 = vld [vmem:[%s806 + $0x1c] sm:$0xf]
        %v821 = vld [vmem:[%s806 + $0x20] sm:$0xf]
        %v822 = vld [vmem:[%s806 + $0x24] sm:$0xf]
        %v823 = vld [vmem:[%s806 + $0x28] sm:$0xf]
        %v824 = vld [vmem:[%s806 + $0x2c] sm:$0xf]
        %v825 = vld [vmem:[%s806 + $0x30] sm:$0xf]
        %v826 = vld [vmem:[%s806 + $0x34] sm:$0xf]
        %v827 = vld [vmem:[%s806 + $0x38] sm:$0xf]
        %v828 = vld [vmem:[%s806 + $0x3c] sm:$0xf]
        %v829 = vld [vmem:[%s811] sm:$0xf]
        %v830 = vld [vmem:[%s811 + $0x4] sm:$0xf]
        %v831 = vld [vmem:[%s811 + $0x8] sm:$0xf]
        %v832 = vld [vmem:[%s811 + $0xc] sm:$0xf]
        %v833 = vld [vmem:[%s811 + $0x10] sm:$0xf]
        %v834 = vld [vmem:[%s811 + $0x14] sm:$0xf]
        %v835 = vld [vmem:[%s811 + $0x18] sm:$0xf]
        %v836 = vld [vmem:[%s811 + $0x1c] sm:$0xf]
        %v837 = vld [vmem:[%s811 + $0x20] sm:$0xf]
        %v838 = vld [vmem:[%s811 + $0x24] sm:$0xf]
        %v839 = vld [vmem:[%s811 + $0x28] sm:$0xf]
        %v840 = vld [vmem:[%s811 + $0x2c] sm:$0xf]
        %v841 = vld [vmem:[%s811 + $0x30] sm:$0xf]
        %v842 = vld [vmem:[%s811 + $0x34] sm:$0xf]
        %v843 = vld [vmem:[%s811 + $0x38] sm:$0xf]
        %v844 = vld [vmem:[%s811 + $0x3c] sm:$0xf]
        %v845 = vld [vmem:[%s687] sm:$0xf]
        %v846 = vld [vmem:[#allocation17] sm:$0xff]
        %v847 = vld [vmem:[#allocation5] sm:$0xf]
        %v848 = vld [vmem:[#allocation7] sm:$0x1]
        %v850 = vlaneseq
        %v851 = vshrl.u32 %v850, 7
        %v852 = vsub.s32 0, %v851
        %v853 = vrot.slane %v848, %v852
        %v871 = vunpack.c.l.b16 %v813
        %v872 = vunpack.c.l.b16 %v814
        %v873 = vunpack.c.l.b16 %v815
        %v874 = vunpack.c.l.b16 %v816
        %v875 = vunpack.c.l.b16 %v817
        %v876 = vunpack.c.l.b16 %v818
        %v877 = vunpack.c.l.b16 %v819
        %v878 = vunpack.c.l.b16 %v820
        %v879 = vunpack.c.l.b16 %v821
        %v880 = vunpack.c.l.b16 %v822
        %v881 = vunpack.c.l.b16 %v823
        %v882 = vunpack.c.l.b16 %v824
        %v883 = vunpack.c.l.b16 %v825
        %v884 = vunpack.c.l.b16 %v826
        %v885 = vunpack.c.l.b16 %v827
        %v886 = vunpack.c.l.b16 %v828
        %v887 = vpack.c.b16 %v872, %v871
        %v888 = vpack.c.b16 %v874, %v873
        %v889 = vpack.c.b16 %v876, %v875
        %v890 = vpack.c.b16 %v878, %v877
        %v891 = vpack.c.b16 %v880, %v879
        %v892 = vpack.c.b16 %v882, %v881
        %v893 = vpack.c.b16 %v884, %v883
        %v894 = vpack.c.b16 %v886, %v885
        %vm895 = vcmask 64512
        %v897 = vsel %vm895, %v887, 0
        %v900 = vsel %vm895, %v888, 0
        %v903 = vsel %vm895, %v889, 0
        %v906 = vsel %vm895, %v890, 0
        %v909 = vsel %vm895, %v891, 0
        %v912 = vsel %vm895, %v892, 0
        %v915 = vsel %vm895, %v893, 0
        %v918 = vsel %vm895, %v894, 0
        %vm920 = vcmask 1043456
        %v922 = vsel %vm920, %v847, 0
        %924 = vmatprep.subr.bf16.mxu0 0
        %925 = vmatpush1.bf16.msra.mxu0 %v922
        %926 = vmatprep.subr.bf16.mxu0 0
        %927 = vmatpush1.bf16.msra.mxu0 0
        %928 = vmatprep.subr.bf16.mxu0 0
        %929 = vmatpush1.bf16.msra.mxu0 0
        %930 = vmatprep.subr.bf16.mxu0 0
        %931 = vmatpush1.bf16.msra.mxu0 0
        %932 = vmatprep.subr.bf16.mxu0 0
        %933 = vmatpush1.bf16.msra.mxu0 0
        %934 = vmatprep.subr.bf16.mxu0 0
        %935 = vmatpush1.bf16.msra.mxu0 0
        %936 = vmatprep.subr.bf16.mxu0 0
        %937 = vmatpush1.bf16.msra.mxu0 0
        %938 = vmatprep.subr.bf16.mxu0 0
        %939 = vmatpush1.bf16.msra.mxu0 0
        %940 = vmatprep.subr.bf16.mxu0 0
        %941 = vmatpush1.bf16.msra.mxu0 0
        %942 = vmatprep.subr.bf16.mxu0 0
        %943 = vmatpush1.bf16.msra.mxu0 0
        %944 = vmatprep.subr.bf16.mxu0 0
        %945 = vmatpush1.bf16.msra.mxu0 0
        %946 = vmatprep.subr.bf16.mxu0 0
        %947 = vmatpush1.bf16.msra.mxu0 0
        %948 = vmatprep.subr.bf16.mxu0 0
        %949 = vmatpush1.bf16.msra.mxu0 0
        %950 = vmatprep.subr.bf16.mxu0 0
        %951 = vmatpush1.bf16.msra.mxu0 0
        %952 = vmatprep.subr.bf16.mxu0 0
        %953 = vmatpush1.bf16.msra.mxu0 0
        %954 = vmatprep.subr.bf16.mxu0 0
        %955 = vmatpush1.bf16.msra.mxu0 0
        %956 = vmatprep.mubr.bf16.mxu0 0
        %957 = vmatmul.mubr.bf16.gmra.mrb[0].mxu0 %v897
        %v958 = vpop.f32.mrb[0].mxu0
        %v959 = vadd.f32 %v853, %v958
        %v960 = vpop.f32.mrb[0].mxu0
        %v961 = vpop.f32.mrb[0].mxu0
        %v962 = vadd.f32 %v853, %v961
        %v963 = vpop.f32.mrb[0].mxu0
        %964 = vmatprep.mubr.bf16.mxu0 0
        %965 = vmatmul.mubr.bf16.gmra.mrb[0].mxu0 %v900
        %v966 = vpop.f32.mrb[0].mxu0
        %v967 = vadd.f32 %v853, %v966
        %v968 = vpop.f32.mrb[0].mxu0
        %v969 = vpop.f32.mrb[0].mxu0
        %v970 = vadd.f32 %v853, %v969
        %v971 = vpop.f32.mrb[0].mxu0
        %972 = vmatprep.mubr.bf16.mxu0 0
        %973 = vmatmul.mubr.bf16.gmra.mrb[0].mxu0 %v903
        %v974 = vpop.f32.mrb[0].mxu0
        %v975 = vadd.f32 %v853, %v974
        %v976 = vpop.f32.mrb[0].mxu0
        %v977 = vpop.f32.mrb[0].mxu0
        %v978 = vadd.f32 %v853, %v977
        %v979 = vpop.f32.mrb[0].mxu0
        %980 = vmatprep.mubr.bf16.mxu0 0
        %981 = vmatmul.mubr.bf16.gmra.mrb[0].mxu0 %v906
        %v982 = vpop.f32.mrb[0].mxu0
        %v983 = vadd.f32 %v853, %v982
        %v984 = vpop.f32.mrb[0].mxu0
        %v985 = vpop.f32.mrb[0].mxu0
        %v986 = vadd.f32 %v853, %v985
        %v987 = vpop.f32.mrb[0].mxu0
        %988 = vmatprep.mubr.bf16.mxu0 0
        %989 = vmatmul.mubr.bf16.gmra.mrb[0].mxu0 %v909
        %v990 = vpop.f32.mrb[0].mxu0
        %v991 = vadd.f32 %v853, %v990
        %v992 = vpop.f32.mrb[0].mxu0
        %v993 = vpop.f32.mrb[0].mxu0
        %v994 = vadd.f32 %v853, %v993
        %v995 = vpop.f32.mrb[0].mxu0
        %996 = vmatprep.mubr.bf16.mxu0 0
        %997 = vmatmul.mubr.bf16.gmra.mrb[0].mxu0 %v912
        %v998 = vpop.f32.mrb[0].mxu0
        %v999 = vadd.f32 %v853, %v998
        %v1000 = vpop.f32.mrb[0].mxu0
        %v1001 = vpop.f32.mrb[0].mxu0
        %v1002 = vadd.f32 %v853, %v1001
        %v1003 = vpop.f32.mrb[0].mxu0
        %1004 = vmatprep.mubr.bf16.mxu0 0
        %1005 = vmatmul.mubr.bf16.gmra.mrb[0].mxu0 %v915
        %v1006 = vpop.f32.mrb[0].mxu0
        %v1007 = vadd.f32 %v853, %v1006
        %v1008 = vpop.f32.mrb[0].mxu0
        %v1009 = vpop.f32.mrb[0].mxu0
        %v1010 = vadd.f32 %v853, %v1009
        %v1011 = vpop.f32.mrb[0].mxu0
        %1012 = vmatprep.mubr.bf16.mxu0 0
        %1013 = vmatmul.mubr.bf16.gmra.mrb[0].mxu0 %v918
        %v1014 = vpop.f32.mrb[0].mxu0
        %v1015 = vadd.f32 %v853, %v1014
        %v1016 = vpop.f32.mrb[0].mxu0
        %v1017 = vpop.f32.mrb[0].mxu0
        %v1018 = vadd.f32 %v853, %v1017
        %v1019 = vpop.f32.mrb[0].mxu0
        %1020 = vdwg.mxu0
        %v1021 = vmax.f32 %v959, 0.0
        %v1022 = vmax.f32 %v962, 0.0
        %v1023 = vmax.f32 %v967, 0.0
        %v1024 = vmax.f32 %v970, 0.0
        %v1025 = vmax.f32 %v975, 0.0
        %v1026 = vmax.f32 %v978, 0.0
        %v1027 = vmax.f32 %v983, 0.0
        %v1028 = vmax.f32 %v986, 0.0
        %v1029 = vmax.f32 %v991, 0.0
        %v1030 = vmax.f32 %v994, 0.0
        %v1031 = vmax.f32 %v999, 0.0
        %v1032 = vmax.f32 %v1002, 0.0
        %v1033 = vmax.f32 %v1007, 0.0
        %v1034 = vmax.f32 %v1010, 0.0
        %v1035 = vmax.f32 %v1015, 0.0
        %v1036 = vmax.f32 %v1018, 0.0
        %v1037 = vpack.c.bf16 %v1022, %v1021
        %v1038 = vpack.c.bf16 %v1024, %v1023
        %v1039 = vpack.c.bf16 %v1026, %v1025
        %v1040 = vpack.c.bf16 %v1028, %v1027
        %v1041 = vpack.c.bf16 %v1030, %v1029
        %v1042 = vpack.c.bf16 %v1032, %v1031
        %v1043 = vpack.c.bf16 %v1034, %v1033
        %v1044 = vpack.c.bf16 %v1036, %v1035
        %v1045 = vld [vmem:[#allocation8] sm:$0xf]
        %v1046 = vld [vmem:[#allocation8 + $0x4] sm:$0xf]
        %v1047 = vld [vmem:[#allocation8 + $0x8] sm:$0xf]
        %v1048 = vld [vmem:[#allocation8 + $0xc] sm:$0xf]
        %v1049 = vld [vmem:[#allocation8 + $0x10] sm:$0xf]
        %v1050 = vld [vmem:[#allocation8 + $0x14] sm:$0xf]
        %v1051 = vld [vmem:[#allocation8 + $0x18] sm:$0xf]
        %v1052 = vld [vmem:[#allocation8 + $0x1c] sm:$0xf]
        %v1053 = vld [vmem:[#allocation8 + $0x20] sm:$0xf]
        %v1054 = vld [vmem:[#allocation8 + $0x24] sm:$0xf]
        %v1055 = vld [vmem:[#allocation8 + $0x28] sm:$0xf]
        %v1056 = vld [vmem:[#allocation8 + $0x2c] sm:$0xf]
        %v1057 = vld [vmem:[#allocation8 + $0x30] sm:$0xf]
        %v1058 = vld [vmem:[#allocation8 + $0x34] sm:$0xf]
        %v1059 = vld [vmem:[#allocation8 + $0x38] sm:$0xf]
        %v1060 = vld [vmem:[#allocation8 + $0x3c] sm:$0xf]
        %v1061 = vld [vmem:[#allocation10] sm:$0xf]
        %v1062 = vld [vmem:[#allocation10 + $0x4] sm:$0xf]
        %v1063 = vld [vmem:[#allocation10 + $0x8] sm:$0xf]
        %v1064 = vld [vmem:[#allocation10 + $0xc] sm:$0xf]
        %v1065 = vld [vmem:[#allocation10 + $0x10] sm:$0xf]
        %v1066 = vld [vmem:[#allocation10 + $0x14] sm:$0xf]
        %v1067 = vld [vmem:[#allocation10 + $0x18] sm:$0xf]
        %v1068 = vld [vmem:[#allocation10 + $0x1c] sm:$0xf]
        %v1069 = vld [vmem:[#allocation10 + $0x20] sm:$0xf]
        %v1070 = vld [vmem:[#allocation10 + $0x24] sm:$0xf]
        %v1071 = vld [vmem:[#allocation10 + $0x28] sm:$0xf]
        %v1072 = vld [vmem:[#allocation10 + $0x2c] sm:$0xf]
        %v1073 = vld [vmem:[#allocation10 + $0x30] sm:$0xf]
        %v1074 = vld [vmem:[#allocation10 + $0x34] sm:$0xf]
        %v1075 = vld [vmem:[#allocation10 + $0x38] sm:$0xf]
        %v1076 = vld [vmem:[#allocation10 + $0x3c] sm:$0xf]
        %v1093 = vunpack.c.l.b16 %v829
        %v1094 = vunpack.c.l.b16 %v830
        %v1095 = vunpack.c.l.b16 %v831
        %v1096 = vunpack.c.l.b16 %v832
        %v1097 = vunpack.c.l.b16 %v833
        %v1098 = vunpack.c.l.b16 %v834
        %v1099 = vunpack.c.l.b16 %v835
        %v1100 = vunpack.c.l.b16 %v836
        %v1101 = vunpack.c.l.b16 %v837
        %v1102 = vunpack.c.l.b16 %v838
        %v1103 = vunpack.c.l.b16 %v839
        %v1104 = vunpack.c.l.b16 %v840
        %v1105 = vunpack.c.l.b16 %v841
        %v1106 = vunpack.c.l.b16 %v842
        %v1107 = vunpack.c.l.b16 %v843
        %v1108 = vunpack.c.l.b16 %v844
        %v1109 = vpack.c.b16 %v1094, %v1093
        %v1110 = vpack.c.b16 %v1096, %v1095
        %v1111 = vpack.c.b16 %v1098, %v1097
        %v1112 = vpack.c.b16 %v1100, %v1099
        %v1113 = vpack.c.b16 %v1102, %v1101
        %v1114 = vpack.c.b16 %v1104, %v1103
        %v1115 = vpack.c.b16 %v1106, %v1105
        %v1116 = vpack.c.b16 %v1108, %v1107
        %1125 = vmatprep.subr.bf16.mxu0 0
        %1126 = vmatpush1.bf16.msra.mxu0 %v1037
        %1127 = vmatprep.subr.bf16.mxu0 0
        %1128 = vmatpush1.bf16.msra.mxu0 %v1038
        %1129 = vmatprep.subr.bf16.mxu0 0
        %1130 = vmatpush1.bf16.msra.mxu0 %v1039
        %1131 = vmatprep.subr.bf16.mxu0 0
        %1132 = vmatpush1.bf16.msra.mxu0 %v1040
        %1133 = vmatprep.subr.bf16.mxu0 0
        %1134 = vmatpush1.bf16.msra.mxu0 %v1041
        %1135 = vmatprep.subr.bf16.mxu0 0
        %1136 = vmatpush1.bf16.msra.mxu0 %v1042
        %1137 = vmatprep.subr.bf16.mxu0 0
        %1138 = vmatpush1.bf16.msra.mxu0 %v1043
        %1139 = vmatprep.subr.bf16.mxu0 0
        %1140 = vmatpush1.bf16.msra.mxu0 %v1044
        %1141 = vmatprep.subr.bf16.mxu0 0
        %1142 = vmatpush1.bf16.msra.mxu0 0
        %1143 = vmatprep.subr.bf16.mxu0 0
        %1144 = vmatpush1.bf16.msra.mxu0 0
        %1145 = vmatprep.subr.bf16.mxu0 0
        %1146 = vmatpush1.bf16.msra.mxu0 0
        %1147 = vmatprep.subr.bf16.mxu0 0
        %1148 = vmatpush1.bf16.msra.mxu0 0
        %1149 = vmatprep.subr.bf16.mxu0 0
        %1150 = vmatpush1.bf16.msra.mxu0 0
        %1151 = vmatprep.subr.bf16.mxu0 0
        %1152 = vmatpush1.bf16.msra.mxu0 0
        %1153 = vmatprep.subr.bf16.mxu0 0
        %1154 = vmatpush1.bf16.msra.mxu0 0
        %1155 = vmatprep.subr.bf16.mxu0 0
        %1156 = vmatpush1.bf16.msra.mxu0 0
        %1157 = vmatprep.mubr.bf16.mxu0 0
        %1158 = vmatmul.mubr.bf16.gmra.mrb[0].mxu0 %v1109
        %v1159 = vpop.f32.mrb[0].mxu0
        %v1160 = vadd.f32 0.0, %v1159
        %v1161 = vpop.f32.mrb[0].mxu0
        %v1162 = vpop.f32.mrb[0].mxu0
        %v1163 = vadd.f32 0.0, %v1162
        %v1164 = vpop.f32.mrb[0].mxu0
        %1165 = vmatprep.mubr.bf16.mxu0 0
        %1166 = vmatmul.mubr.bf16.gmra.mrb[0].mxu0 %v1110
        %v1167 = vpop.f32.mrb[0].mxu0
        %v1168 = vadd.f32 0.0, %v1167
        %v1169 = vpop.f32.mrb[0].mxu0
        %v1170 = vpop.f32.mrb[0].mxu0
        %v1171 = vadd.f32 0.0, %v1170
        %v1172 = vpop.f32.mrb[0].mxu0
        %1173 = vmatprep.mubr.bf16.mxu0 0
        %1174 = vmatmul.mubr.bf16.gmra.mrb[0].mxu0 %v1111
        %v1175 = vpop.f32.mrb[0].mxu0
        %v1176 = vadd.f32 0.0, %v1175
        %v1177 = vpop.f32.mrb[0].mxu0
        %v1178 = vpop.f32.mrb[0].mxu0
        %v1179 = vadd.f32 0.0, %v1178
        %v1180 = vpop.f32.mrb[0].mxu0
        %1181 = vmatprep.mubr.bf16.mxu0 0
        %1182 = vmatmul.mubr.bf16.gmra.mrb[0].mxu0 %v1112
        %v1183 = vpop.f32.mrb[0].mxu0
        %v1184 = vadd.f32 0.0, %v1183
        %v1185 = vpop.f32.mrb[0].mxu0
        %v1186 = vpop.f32.mrb[0].mxu0
        %v1187 = vadd.f32 0.0, %v1186
        %v1188 = vpop.f32.mrb[0].mxu0
        %1189 = vmatprep.mubr.bf16.mxu0 0
        %1190 = vmatmul.mubr.bf16.gmra.mrb[0].mxu0 %v1113
        %v1191 = vpop.f32.mrb[0].mxu0
        %v1192 = vadd.f32 0.0, %v1191
        %v1193 = vpop.f32.mrb[0].mxu0
        %v1194 = vpop.f32.mrb[0].mxu0
        %v1195 = vadd.f32 0.0, %v1194
        %v1196 = vpop.f32.mrb[0].mxu0
        %1197 = vmatprep.mubr.bf16.mxu0 0
        %1198 = vmatmul.mubr.bf16.gmra.mrb[0].mxu0 %v1114
        %v1199 = vpop.f32.mrb[0].mxu0
        %v1200 = vadd.f32 0.0, %v1199
        %v1201 = vpop.f32.mrb[0].mxu0
        %v1202 = vpop.f32.mrb[0].mxu0
        %v1203 = vadd.f32 0.0, %v1202
        %v1204 = vpop.f32.mrb[0].mxu0
        %1205 = vmatprep.mubr.bf16.mxu0 0
        %1206 = vmatmul.mubr.bf16.gmra.mrb[0].mxu0 %v1115
        %v1207 = vpop.f32.mrb[0].mxu0
        %v1208 = vadd.f32 0.0, %v1207
        %v1209 = vpop.f32.mrb[0].mxu0
        %v1210 = vpop.f32.mrb[0].mxu0
        %v1211 = vadd.f32 0.0, %v1210
        %v1212 = vpop.f32.mrb[0].mxu0
        %1213 = vmatprep.mubr.bf16.mxu0 0
        %1214 = vmatmul.mubr.bf16.gmra.mrb[0].mxu0 %v1116
        %v1215 = vpop.f32.mrb[0].mxu0
        %v1216 = vadd.f32 0.0, %v1215
        %v1217 = vpop.f32.mrb[0].mxu0
        %v1218 = vpop.f32.mrb[0].mxu0
        %v1219 = vadd.f32 0.0, %v1218
        %v1220 = vpop.f32.mrb[0].mxu0
        %1221 = vdwg.mxu0
        %v1222 = vpack.c.bf16 %v1163, %v1160
        %v1223 = vpack.c.bf16 %v1171, %v1168
        %v1224 = vpack.c.bf16 %v1179, %v1176
        %v1225 = vpack.c.bf16 %v1187, %v1184
        %v1226 = vpack.c.bf16 %v1195, %v1192
        %v1227 = vpack.c.bf16 %v1203, %v1200
        %v1228 = vpack.c.bf16 %v1211, %v1208
        %v1229 = vpack.c.bf16 %v1219, %v1216
        %v1230 = vlaneseq
        %v1231 = vshrl.u32 %v1230, 7
        %v1232 = vsub.s32 0, %v1231
        %v1233 = vrot.slane %v846, %v1232
        %v1250 = vunpack.c.l.b16 %v1045
        %v1251 = vunpack.c.l.b16 %v1046
        %v1252 = vunpack.c.l.b16 %v1047
        %v1253 = vunpack.c.l.b16 %v1048
        %v1254 = vunpack.c.l.b16 %v1049
        %v1255 = vunpack.c.l.b16 %v1050
        %v1256 = vunpack.c.l.b16 %v1051
        %v1257 = vunpack.c.l.b16 %v1052
        %v1258 = vunpack.c.l.b16 %v1053
        %v1259 = vunpack.c.l.b16 %v1054
        %v1260 = vunpack.c.l.b16 %v1055
        %v1261 = vunpack.c.l.b16 %v1056
        %v1262 = vunpack.c.l.b16 %v1057
        %v1263 = vunpack.c.l.b16 %v1058
        %v1264 = vunpack.c.l.b16 %v1059
        %v1265 = vunpack.c.l.b16 %v1060
        %v1266 = vpack.c.b16 %v1251, %v1250
        %v1267 = vpack.c.b16 %v1253, %v1252
        %v1268 = vpack.c.b16 %v1255, %v1254
        %v1269 = vpack.c.b16 %v1257, %v1256
        %v1270 = vpack.c.b16 %v1259, %v1258
        %v1271 = vpack.c.b16 %v1261, %v1260
        %v1272 = vpack.c.b16 %v1263, %v1262
        %v1273 = vpack.c.b16 %v1265, %v1264
        %1282 = vmatprep.subr.bf16.mxu0 0
        %1283 = vmatpush1.bf16.msra.mxu0 %v1266
        %1284 = vmatprep.subr.bf16.mxu0 0
        %1285 = vmatpush1.bf16.msra.mxu0 %v1267
        %1286 = vmatprep.subr.bf16.mxu0 0
        %1287 = vmatpush1.bf16.msra.mxu0 %v1268
        %1288 = vmatprep.subr.bf16.mxu0 0
        %1289 = vmatpush1.bf16.msra.mxu0 %v1269
        %1290 = vmatprep.subr.bf16.mxu0 0
        %1291 = vmatpush1.bf16.msra.mxu0 %v1270
        %1292 = vmatprep.subr.bf16.mxu0 0
        %1293 = vmatpush1.bf16.msra.mxu0 %v1271
        %1294 = vmatprep.subr.bf16.mxu0 0
        %1295 = vmatpush1.bf16.msra.mxu0 %v1272
        %1296 = vmatprep.subr.bf16.mxu0 0
        %1297 = vmatpush1.bf16.msra.mxu0 %v1273
        %1298 = vmatprep.subr.bf16.mxu0 0
        %1299 = vmatpush1.bf16.msra.mxu0 0
        %1300 = vmatprep.subr.bf16.mxu0 0
        %1301 = vmatpush1.bf16.msra.mxu0 0
        %1302 = vmatprep.subr.bf16.mxu0 0
        %1303 = vmatpush1.bf16.msra.mxu0 0
        %1304 = vmatprep.subr.bf16.mxu0 0
        %1305 = vmatpush1.bf16.msra.mxu0 0
        %1306 = vmatprep.subr.bf16.mxu0 0
        %1307 = vmatpush1.bf16.msra.mxu0 0
        %1308 = vmatprep.subr.bf16.mxu0 0
        %1309 = vmatpush1.bf16.msra.mxu0 0
        %1310 = vmatprep.subr.bf16.mxu0 0
        %1311 = vmatpush1.bf16.msra.mxu0 0
        %1312 = vmatprep.subr.bf16.mxu0 0
        %1313 = vmatpush1.bf16.msra.mxu0 0
        %1314 = vmatprep.mubr.bf16.mxu0 0
        %1315 = vmatmul.mubr.bf16.gmra.mrb[0].mxu0 %v1222
        %v1316 = vpop.f32.mrb[0].mxu0
        %v1317 = vadd.f32 %v1233, %v1316
        %v1318 = vpop.f32.mrb[0].mxu0
        %v1319 = vpop.f32.mrb[0].mxu0
        %v1320 = vadd.f32 %v1233, %v1319
        %v1321 = vpop.f32.mrb[0].mxu0
        %1322 = vmatprep.mubr.bf16.mxu0 0
        %1323 = vmatmul.mubr.bf16.gmra.mrb[0].mxu0 %v1223
        %v1324 = vpop.f32.mrb[0].mxu0
        %v1325 = vadd.f32 %v1233, %v1324
        %v1326 = vpop.f32.mrb[0].mxu0
        %v1327 = vpop.f32.mrb[0].mxu0
        %v1328 = vadd.f32 %v1233, %v1327
        %v1329 = vpop.f32.mrb[0].mxu0
        %1330 = vmatprep.mubr.bf16.mxu0 0
        %1331 = vmatmul.mubr.bf16.gmra.mrb[0].mxu0 %v1224
        %v1332 = vpop.f32.mrb[0].mxu0
        %v1333 = vadd.f32 %v1233, %v1332
        %v1334 = vpop.f32.mrb[0].mxu0
        %v1335 = vpop.f32.mrb[0].mxu0
        %v1336 = vadd.f32 %v1233, %v1335
        %v1337 = vpop.f32.mrb[0].mxu0
        %1338 = vmatprep.mubr.bf16.mxu0 0
        %1339 = vmatmul.mubr.bf16.gmra.mrb[0].mxu0 %v1225
        %v1340 = vpop.f32.mrb[0].mxu0
        %v1341 = vadd.f32 %v1233, %v1340
        %v1342 = vpop.f32.mrb[0].mxu0
        %v1343 = vpop.f32.mrb[0].mxu0
        %v1344 = vadd.f32 %v1233, %v1343
        %v1345 = vpop.f32.mrb[0].mxu0
        %1346 = vmatprep.mubr.bf16.mxu0 0
        %1347 = vmatmul.mubr.bf16.gmra.mrb[0].mxu0 %v1226
        %v1348 = vpop.f32.mrb[0].mxu0
        %v1349 = vadd.f32 %v1233, %v1348
        %v1350 = vpop.f32.mrb[0].mxu0
        %v1351 = vpop.f32.mrb[0].mxu0
        %v1352 = vadd.f32 %v1233, %v1351
        %v1353 = vpop.f32.mrb[0].mxu0
        %1354 = vmatprep.mubr.bf16.mxu0 0
        %1355 = vmatmul.mubr.bf16.gmra.mrb[0].mxu0 %v1227
        %v1356 = vpop.f32.mrb[0].mxu0
        %v1357 = vadd.f32 %v1233, %v1356
        %v1358 = vpop.f32.mrb[0].mxu0
        %v1359 = vpop.f32.mrb[0].mxu0
        %v1360 = vadd.f32 %v1233, %v1359
        %v1361 = vpop.f32.mrb[0].mxu0
        %1362 = vmatprep.mubr.bf16.mxu0 0
        %1363 = vmatmul.mubr.bf16.gmra.mrb[0].mxu0 %v1228
        %v1364 = vpop.f32.mrb[0].mxu0
        %v1365 = vadd.f32 %v1233, %v1364
        %v1366 = vpop.f32.mrb[0].mxu0
        %v1367 = vpop.f32.mrb[0].mxu0
        %v1368 = vadd.f32 %v1233, %v1367
        %v1369 = vpop.f32.mrb[0].mxu0
        %1370 = vmatprep.mubr.bf16.mxu0 0
        %1371 = vmatmul.mubr.bf16.gmra.mrb[0].mxu0 %v1229
        %v1372 = vpop.f32.mrb[0].mxu0
        %v1373 = vadd.f32 %v1233, %v1372
        %v1374 = vpop.f32.mrb[0].mxu0
        %v1375 = vpop.f32.mrb[0].mxu0
        %v1376 = vadd.f32 %v1233, %v1375
        %v1377 = vpop.f32.mrb[0].mxu0
        %1378 = vdwg.mxu0
        %v1379 = vmax.f32 %v1317, 0.0
        %v1380 = vmax.f32 %v1320, 0.0
        %v1381 = vmax.f32 %v1325, 0.0
        %v1382 = vmax.f32 %v1328, 0.0
        %v1383 = vmax.f32 %v1333, 0.0
        %v1384 = vmax.f32 %v1336, 0.0
        %v1385 = vmax.f32 %v1341, 0.0
        %v1386 = vmax.f32 %v1344, 0.0
        %v1387 = vmax.f32 %v1349, 0.0
        %v1388 = vmax.f32 %v1352, 0.0
        %v1389 = vmax.f32 %v1357, 0.0
        %v1390 = vmax.f32 %v1360, 0.0
        %v1391 = vmax.f32 %v1365, 0.0
        %v1392 = vmax.f32 %v1368, 0.0
        %v1393 = vmax.f32 %v1373, 0.0
        %v1394 = vmax.f32 %v1376, 0.0
        %v1395 = vpack.c.bf16 %v1380, %v1379
        %v1396 = vpack.c.bf16 %v1382, %v1381
        %v1397 = vpack.c.bf16 %v1384, %v1383
        %v1398 = vpack.c.bf16 %v1386, %v1385
        %v1399 = vpack.c.bf16 %v1388, %v1387
        %v1400 = vpack.c.bf16 %v1390, %v1389
        %v1401 = vpack.c.bf16 %v1392, %v1391
        %v1402 = vpack.c.bf16 %v1394, %v1393
        %v1403 = vlaneseq
        %v1404 = vshrl.u32 %v1403, 7
        %v1405 = vsub.s32 1, %v1404
        %v1406 = vrot.slane %v846, %v1405
        %v1423 = vunpack.c.l.b16 %v1061
        %v1424 = vunpack.c.l.b16 %v1062
        %v1425 = vunpack.c.l.b16 %v1063
        %v1426 = vunpack.c.l.b16 %v1064
        %v1427 = vunpack.c.l.b16 %v1065
        %v1428 = vunpack.c.l.b16 %v1066
        %v1429 = vunpack.c.l.b16 %v1067
        %v1430 = vunpack.c.l.b16 %v1068
        %v1431 = vunpack.c.l.b16 %v1069
        %v1432 = vunpack.c.l.b16 %v1070
        %v1433 = vunpack.c.l.b16 %v1071
        %v1434 = vunpack.c.l.b16 %v1072
        %v1435 = vunpack.c.l.b16 %v1073
        %v1436 = vunpack.c.l.b16 %v1074
        %v1437 = vunpack.c.l.b16 %v1075
        %v1438 = vunpack.c.l.b16 %v1076
        %v1439 = vpack.c.b16 %v1424, %v1423
        %v1440 = vpack.c.b16 %v1426, %v1425
        %v1441 = vpack.c.b16 %v1428, %v1427
        %v1442 = vpack.c.b16 %v1430, %v1429
        %v1443 = vpack.c.b16 %v1432, %v1431
        %v1444 = vpack.c.b16 %v1434, %v1433
        %v1445 = vpack.c.b16 %v1436, %v1435
        %v1446 = vpack.c.b16 %v1438, %v1437
        %1455 = vmatprep.subr.bf16.mxu0 0
        %1456 = vmatpush1.bf16.msra.mxu0 %v1439
        %1457 = vmatprep.subr.bf16.mxu0 0
        %1458 = vmatpush1.bf16.msra.mxu0 %v1440
        %1459 = vmatprep.subr.bf16.mxu0 0
        %1460 = vmatpush1.bf16.msra.mxu0 %v1441
        %1461 = vmatprep.subr.bf16.mxu0 0
        %1462 = vmatpush1.bf16.msra.mxu0 %v1442
        %1463 = vmatprep.subr.bf16.mxu0 0
        %1464 = vmatpush1.bf16.msra.mxu0 %v1443
        %1465 = vmatprep.subr.bf16.mxu0 0
        %1466 = vmatpush1.bf16.msra.mxu0 %v1444
        %1467 = vmatprep.subr.bf16.mxu0 0
        %1468 = vmatpush1.bf16.msra.mxu0 %v1445
        %1469 = vmatprep.subr.bf16.mxu0 0
        %1470 = vmatpush1.bf16.msra.mxu0 %v1446
        %1471 = vmatprep.subr.bf16.mxu0 0
        %1472 = vmatpush1.bf16.msra.mxu0 0
        %1473 = vmatprep.subr.bf16.mxu0 0
        %1474 = vmatpush1.bf16.msra.mxu0 0
        %1475 = vmatprep.subr.bf16.mxu0 0
        %1476 = vmatpush1.bf16.msra.mxu0 0
        %1477 = vmatprep.subr.bf16.mxu0 0
        %1478 = vmatpush1.bf16.msra.mxu0 0
        %1479 = vmatprep.subr.bf16.mxu0 0
        %1480 = vmatpush1.bf16.msra.mxu0 0
        %1481 = vmatprep.subr.bf16.mxu0 0
        %1482 = vmatpush1.bf16.msra.mxu0 0
        %1483 = vmatprep.subr.bf16.mxu0 0
        %1484 = vmatpush1.bf16.msra.mxu0 0
        %1485 = vmatprep.subr.bf16.mxu0 0
        %1486 = vmatpush1.bf16.msra.mxu0 0
        %1487 = vmatprep.mubr.bf16.mxu0 0
        %1488 = vmatmul.mubr.bf16.gmra.mrb[0].mxu0 %v1395
        %v1489 = vpop.f32.mrb[0].mxu0
        %v1490 = vadd.f32 %v1406, %v1489
        %v1491 = vpop.f32.mrb[0].mxu0
        %v1492 = vpop.f32.mrb[0].mxu0
        %v1493 = vadd.f32 %v1406, %v1492
        %v1494 = vpop.f32.mrb[0].mxu0
        %1495 = vmatprep.mubr.bf16.mxu0 0
        %1496 = vmatmul.mubr.bf16.gmra.mrb[0].mxu0 %v1396
        %v1497 = vpop.f32.mrb[0].mxu0
        %v1498 = vadd.f32 %v1406, %v1497
        %v1499 = vpop.f32.mrb[0].mxu0
        %v1500 = vpop.f32.mrb[0].mxu0
        %v1501 = vadd.f32 %v1406, %v1500
        %v1502 = vpop.f32.mrb[0].mxu0
        %1503 = vmatprep.mubr.bf16.mxu0 0
        %1504 = vmatmul.mubr.bf16.gmra.mrb[0].mxu0 %v1397
        %v1505 = vpop.f32.mrb[0].mxu0
        %v1506 = vadd.f32 %v1406, %v1505
        %v1507 = vpop.f32.mrb[0].mxu0
        %v1508 = vpop.f32.mrb[0].mxu0
        %v1509 = vadd.f32 %v1406, %v1508
        %v1510 = vpop.f32.mrb[0].mxu0
        %1511 = vmatprep.mubr.bf16.mxu0 0
        %1512 = vmatmul.mubr.bf16.gmra.mrb[0].mxu0 %v1398
        %v1513 = vpop.f32.mrb[0].mxu0
        %v1514 = vadd.f32 %v1406, %v1513
        %v1515 = vpop.f32.mrb[0].mxu0
        %v1516 = vpop.f32.mrb[0].mxu0
        %v1517 = vadd.f32 %v1406, %v1516
        %v1518 = vpop.f32.mrb[0].mxu0
        %1519 = vmatprep.mubr.bf16.mxu0 0
        %1520 = vmatmul.mubr.bf16.gmra.mrb[0].mxu0 %v1399
        %v1521 = vpop.f32.mrb[0].mxu0
        %v1522 = vadd.f32 %v1406, %v1521
        %v1523 = vpop.f32.mrb[0].mxu0
        %v1524 = vpop.f32.mrb[0].mxu0
        %v1525 = vadd.f32 %v1406, %v1524
        %v1526 = vpop.f32.mrb[0].mxu0
        %1527 = vmatprep.mubr.bf16.mxu0 0
        %1528 = vmatmul.mubr.bf16.gmra.mrb[0].mxu0 %v1400
        %v1529 = vpop.f32.mrb[0].mxu0
        %v1530 = vadd.f32 %v1406, %v1529
        %v1531 = vpop.f32.mrb[0].mxu0
        %v1532 = vpop.f32.mrb[0].mxu0
        %v1533 = vadd.f32 %v1406, %v1532
        %v1534 = vpop.f32.mrb[0].mxu0
        %1535 = vmatprep.mubr.bf16.mxu0 0
        %1536 = vmatmul.mubr.bf16.gmra.mrb[0].mxu0 %v1401
        %v1537 = vpop.f32.mrb[0].mxu0
        %v1538 = vadd.f32 %v1406, %v1537
        %v1539 = vpop.f32.mrb[0].mxu0
        %v1540 = vpop.f32.mrb[0].mxu0
        %v1541 = vadd.f32 %v1406, %v1540
        %v1542 = vpop.f32.mrb[0].mxu0
        %1543 = vmatprep.mubr.bf16.mxu0 0
        %1544 = vmatmul.mubr.bf16.gmra.mrb[0].mxu0 %v1402
        %v1545 = vpop.f32.mrb[0].mxu0
        %v1546 = vadd.f32 %v1406, %v1545
        %v1547 = vpop.f32.mrb[0].mxu0
        %v1548 = vpop.f32.mrb[0].mxu0
        %v1549 = vadd.f32 %v1406, %v1548
        %v1550 = vpop.f32.mrb[0].mxu0
        %1551 = vdwg.mxu0
        %v1552 = vmax.f32 %v1490, 0.0
        %v1553 = vmax.f32 %v1493, 0.0
        %v1554 = vmax.f32 %v1498, 0.0
        %v1555 = vmax.f32 %v1501, 0.0
        %v1556 = vmax.f32 %v1506, 0.0
        %v1557 = vmax.f32 %v1509, 0.0
        %v1558 = vmax.f32 %v1514, 0.0
        %v1559 = vmax.f32 %v1517, 0.0
        %v1560 = vmax.f32 %v1522, 0.0
        %v1561 = vmax.f32 %v1525, 0.0
        %v1562 = vmax.f32 %v1530, 0.0
        %v1563 = vmax.f32 %v1533, 0.0
        %v1564 = vmax.f32 %v1538, 0.0
        %v1565 = vmax.f32 %v1541, 0.0
        %v1566 = vmax.f32 %v1546, 0.0
        %v1567 = vmax.f32 %v1549, 0.0
        %v1568 = vpack.c.bf16 %v1553, %v1552
        %v1569 = vpack.c.bf16 %v1555, %v1554
        %v1570 = vpack.c.bf16 %v1557, %v1556
        %v1571 = vpack.c.bf16 %v1559, %v1558
        %v1572 = vpack.c.bf16 %v1561, %v1560
        %v1573 = vpack.c.bf16 %v1563, %v1562
        %v1574 = vpack.c.bf16 %v1565, %v1564
        %v1575 = vpack.c.bf16 %v1567, %v1566
        %v1576 = vld [vmem:[#allocation11] sm:$0xf]
        %v1577 = vld [vmem:[#allocation11 + $0x4] sm:$0xf]
        %v1578 = vld [vmem:[#allocation11 + $0x8] sm:$0xf]
        %v1579 = vld [vmem:[#allocation11 + $0xc] sm:$0xf]
        %v1580 = vld [vmem:[#allocation11 + $0x10] sm:$0xf]
        %v1581 = vld [vmem:[#allocation11 + $0x14] sm:$0xf]
        %v1582 = vld [vmem:[#allocation11 + $0x18] sm:$0xf]
        %v1583 = vld [vmem:[#allocation11 + $0x1c] sm:$0xf]
        %v1584 = vld [vmem:[#allocation11 + $0x20] sm:$0xf]
        %v1585 = vld [vmem:[#allocation11 + $0x24] sm:$0xf]
        %v1586 = vld [vmem:[#allocation11 + $0x28] sm:$0xf]
        %v1587 = vld [vmem:[#allocation11 + $0x2c] sm:$0xf]
        %v1588 = vld [vmem:[#allocation11 + $0x30] sm:$0xf]
        %v1589 = vld [vmem:[#allocation11 + $0x34] sm:$0xf]
        %v1590 = vld [vmem:[#allocation11 + $0x38] sm:$0xf]
        %v1591 = vld [vmem:[#allocation11 + $0x3c] sm:$0xf]
        %v1592 = vld [vmem:[#allocation13] sm:$0xf]
        %v1593 = vld [vmem:[#allocation13 + $0x4] sm:$0xf]
        %v1594 = vld [vmem:[#allocation13 + $0x8] sm:$0xf]
        %v1595 = vld [vmem:[#allocation13 + $0xc] sm:$0xf]
        %v1596 = vld [vmem:[#allocation13 + $0x10] sm:$0xf]
        %v1597 = vld [vmem:[#allocation13 + $0x14] sm:$0xf]
        %v1598 = vld [vmem:[#allocation13 + $0x18] sm:$0xf]
        %v1599 = vld [vmem:[#allocation13 + $0x1c] sm:$0xf]
        %v1600 = vld [vmem:[#allocation13 + $0x20] sm:$0xf]
        %v1601 = vld [vmem:[#allocation13 + $0x24] sm:$0xf]
        %v1602 = vld [vmem:[#allocation13 + $0x28] sm:$0xf]
        %v1603 = vld [vmem:[#allocation13 + $0x2c] sm:$0xf]
        %v1604 = vld [vmem:[#allocation13 + $0x30] sm:$0xf]
        %v1605 = vld [vmem:[#allocation13 + $0x34] sm:$0xf]
        %v1606 = vld [vmem:[#allocation13 + $0x38] sm:$0xf]
        %v1607 = vld [vmem:[#allocation13 + $0x3c] sm:$0xf]
        %1608 = vmatprep.subr.bf16.mxu0 0
        %1609 = vmatpush1.bf16.msra.mxu0 %v1568
        %1610 = vmatprep.subr.bf16.mxu0 0
        %1611 = vmatpush1.bf16.msra.mxu0 %v1569
        %1612 = vmatprep.subr.bf16.mxu0 0
        %1613 = vmatpush1.bf16.msra.mxu0 %v1570
        %1614 = vmatprep.subr.bf16.mxu0 0
        %1615 = vmatpush1.bf16.msra.mxu0 %v1571
        %1616 = vmatprep.subr.bf16.mxu0 0
        %1617 = vmatpush1.bf16.msra.mxu0 %v1572
        %1618 = vmatprep.subr.bf16.mxu0 0
        %1619 = vmatpush1.bf16.msra.mxu0 %v1573
        %1620 = vmatprep.subr.bf16.mxu0 0
        %1621 = vmatpush1.bf16.msra.mxu0 %v1574
        %1622 = vmatprep.subr.bf16.mxu0 0
        %1623 = vmatpush1.bf16.msra.mxu0 %v1575
        %1624 = vmatprep.subr.bf16.mxu0 0
        %1625 = vmatpush1.bf16.msra.mxu0 0
        %1626 = vmatprep.subr.bf16.mxu0 0
        %1627 = vmatpush1.bf16.msra.mxu0 0
        %1628 = vmatprep.subr.bf16.mxu0 0
        %1629 = vmatpush1.bf16.msra.mxu0 0
        %1630 = vmatprep.subr.bf16.mxu0 0
        %1631 = vmatpush1.bf16.msra.mxu0 0
        %1632 = vmatprep.subr.bf16.mxu0 0
        %1633 = vmatpush1.bf16.msra.mxu0 0
        %1634 = vmatprep.subr.bf16.mxu0 0
        %1635 = vmatpush1.bf16.msra.mxu0 0
        %1636 = vmatprep.subr.bf16.mxu0 0
        %1637 = vmatpush1.bf16.msra.mxu0 0
        %1638 = vmatprep.subr.bf16.mxu0 0
        %1639 = vmatpush1.bf16.msra.mxu0 0
        %1640 = vmatprep.mubr.bf16.mxu0 0
        %1641 = vmatmul.mubr.bf16.gmra.mrb[0].mxu0 %v1109
        %v1642 = vpop.f32.mrb[0].mxu0
        %v1643 = vadd.f32 0.0, %v1642
        %v1644 = vpop.f32.mrb[0].mxu0
        %v1645 = vpop.f32.mrb[0].mxu0
        %v1646 = vadd.f32 0.0, %v1645
        %v1647 = vpop.f32.mrb[0].mxu0
        %1648 = vmatprep.mubr.bf16.mxu0 0
        %1649 = vmatmul.mubr.bf16.gmra.mrb[0].mxu0 %v1110
        %v1650 = vpop.f32.mrb[0].mxu0
        %v1651 = vadd.f32 0.0, %v1650
        %v1652 = vpop.f32.mrb[0].mxu0
        %v1653 = vpop.f32.mrb[0].mxu0
        %v1654 = vadd.f32 0.0, %v1653
        %v1655 = vpop.f32.mrb[0].mxu0
        %1656 = vmatprep.mubr.bf16.mxu0 0
        %1657 = vmatmul.mubr.bf16.gmra.mrb[0].mxu0 %v1111
        %v1658 = vpop.f32.mrb[0].mxu0
        %v1659 = vadd.f32 0.0, %v1658
        %v1660 = vpop.f32.mrb[0].mxu0
        %v1661 = vpop.f32.mrb[0].mxu0
        %v1662 = vadd.f32 0.0, %v1661
        %v1663 = vpop.f32.mrb[0].mxu0
        %1664 = vmatprep.mubr.bf16.mxu0 0
        %1665 = vmatmul.mubr.bf16.gmra.mrb[0].mxu0 %v1112
        %v1666 = vpop.f32.mrb[0].mxu0
        %v1667 = vadd.f32 0.0, %v1666
        %v1668 = vpop.f32.mrb[0].mxu0
        %v1669 = vpop.f32.mrb[0].mxu0
        %v1670 = vadd.f32 0.0, %v1669
        %v1671 = vpop.f32.mrb[0].mxu0
        %1672 = vmatprep.mubr.bf16.mxu0 0
        %1673 = vmatmul.mubr.bf16.gmra.mrb[0].mxu0 %v1113
        %v1674 = vpop.f32.mrb[0].mxu0
        %v1675 = vadd.f32 0.0, %v1674
        %v1676 = vpop.f32.mrb[0].mxu0
        %v1677 = vpop.f32.mrb[0].mxu0
        %v1678 = vadd.f32 0.0, %v1677
        %v1679 = vpop.f32.mrb[0].mxu0
        %1680 = vmatprep.mubr.bf16.mxu0 0
        %1681 = vmatmul.mubr.bf16.gmra.mrb[0].mxu0 %v1114
        %v1682 = vpop.f32.mrb[0].mxu0
        %v1683 = vadd.f32 0.0, %v1682
        %v1684 = vpop.f32.mrb[0].mxu0
        %v1685 = vpop.f32.mrb[0].mxu0
        %v1686 = vadd.f32 0.0, %v1685
        %v1687 = vpop.f32.mrb[0].mxu0
        %1688 = vmatprep.mubr.bf16.mxu0 0
        %1689 = vmatmul.mubr.bf16.gmra.mrb[0].mxu0 %v1115
        %v1690 = vpop.f32.mrb[0].mxu0
        %v1691 = vadd.f32 0.0, %v1690
        %v1692 = vpop.f32.mrb[0].mxu0
        %v1693 = vpop.f32.mrb[0].mxu0
        %v1694 = vadd.f32 0.0, %v1693
        %v1695 = vpop.f32.mrb[0].mxu0
        %1696 = vmatprep.mubr.bf16.mxu0 0
        %1697 = vmatmul.mubr.bf16.gmra.mrb[0].mxu0 %v1116
        %v1698 = vpop.f32.mrb[0].mxu0
        %v1699 = vadd.f32 0.0, %v1698
        %v1700 = vpop.f32.mrb[0].mxu0
        %v1701 = vpop.f32.mrb[0].mxu0
        %v1702 = vadd.f32 0.0, %v1701
        %v1703 = vpop.f32.mrb[0].mxu0
        %1704 = vdwg.mxu0
        %v1705 = vpack.c.bf16 %v1646, %v1643
        %v1706 = vpack.c.bf16 %v1654, %v1651
        %v1707 = vpack.c.bf16 %v1662, %v1659
        %v1708 = vpack.c.bf16 %v1670, %v1667
        %v1709 = vpack.c.bf16 %v1678, %v1675
        %v1710 = vpack.c.bf16 %v1686, %v1683
        %v1711 = vpack.c.bf16 %v1694, %v1691
        %v1712 = vpack.c.bf16 %v1702, %v1699
        %v1713 = vlaneseq
        %v1714 = vshrl.u32 %v1713, 7
        %v1715 = vsub.s32 2, %v1714
        %v1716 = vrot.slane %v846, %v1715
        %v1733 = vunpack.c.l.b16 %v1576
        %v1734 = vunpack.c.l.b16 %v1577
        %v1735 = vunpack.c.l.b16 %v1578
        %v1736 = vunpack.c.l.b16 %v1579
        %v1737 = vunpack.c.l.b16 %v1580
        %v1738 = vunpack.c.l.b16 %v1581
        %v1739 = vunpack.c.l.b16 %v1582
        %v1740 = vunpack.c.l.b16 %v1583
        %v1741 = vunpack.c.l.b16 %v1584
        %v1742 = vunpack.c.l.b16 %v1585
        %v1743 = vunpack.c.l.b16 %v1586
        %v1744 = vunpack.c.l.b16 %v1587
        %v1745 = vunpack.c.l.b16 %v1588
        %v1746 = vunpack.c.l.b16 %v1589
        %v1747 = vunpack.c.l.b16 %v1590
        %v1748 = vunpack.c.l.b16 %v1591
        %v1749 = vpack.c.b16 %v1734, %v1733
        %v1750 = vpack.c.b16 %v1736, %v1735
        %v1751 = vpack.c.b16 %v1738, %v1737
        %v1752 = vpack.c.b16 %v1740, %v1739
        %v1753 = vpack.c.b16 %v1742, %v1741
        %v1754 = vpack.c.b16 %v1744, %v1743
        %v1755 = vpack.c.b16 %v1746, %v1745
        %v1756 = vpack.c.b16 %v1748, %v1747
        %1765 = vmatprep.subr.bf16.mxu0 0
        %1766 = vmatpush1.bf16.msra.mxu0 %v1749
        %1767 = vmatprep.subr.bf16.mxu0 0
        %1768 = vmatpush1.bf16.msra.mxu0 %v1750
        %1769 = vmatprep.subr.bf16.mxu0 0
        %1770 = vmatpush1.bf16.msra.mxu0 %v1751
        %1771 = vmatprep.subr.bf16.mxu0 0
        %1772 = vmatpush1.bf16.msra.mxu0 %v1752
        %1773 = vmatprep.subr.bf16.mxu0 0
        %1774 = vmatpush1.bf16.msra.mxu0 %v1753
        %1775 = vmatprep.subr.bf16.mxu0 0
        %1776 = vmatpush1.bf16.msra.mxu0 %v1754
        %1777 = vmatprep.subr.bf16.mxu0 0
        %1778 = vmatpush1.bf16.msra.mxu0 %v1755
        %1779 = vmatprep.subr.bf16.mxu0 0
        %1780 = vmatpush1.bf16.msra.mxu0 %v1756
        %1781 = vmatprep.subr.bf16.mxu0 0
        %1782 = vmatpush1.bf16.msra.mxu0 0
        %1783 = vmatprep.subr.bf16.mxu0 0
        %1784 = vmatpush1.bf16.msra.mxu0 0
        %1785 = vmatprep.subr.bf16.mxu0 0
        %1786 = vmatpush1.bf16.msra.mxu0 0
        %1787 = vmatprep.subr.bf16.mxu0 0
        %1788 = vmatpush1.bf16.msra.mxu0 0
        %1789 = vmatprep.subr.bf16.mxu0 0
        %1790 = vmatpush1.bf16.msra.mxu0 0
        %1791 = vmatprep.subr.bf16.mxu0 0
        %1792 = vmatpush1.bf16.msra.mxu0 0
        %1793 = vmatprep.subr.bf16.mxu0 0
        %1794 = vmatpush1.bf16.msra.mxu0 0
        %1795 = vmatprep.subr.bf16.mxu0 0
        %1796 = vmatpush1.bf16.msra.mxu0 0
        %1797 = vmatprep.mubr.bf16.mxu0 0
        %1798 = vmatmul.mubr.bf16.gmra.mrb[0].mxu0 %v1705
        %v1799 = vpop.f32.mrb[0].mxu0
        %v1800 = vadd.f32 %v1716, %v1799
        %v1801 = vpop.f32.mrb[0].mxu0
        %v1802 = vpop.f32.mrb[0].mxu0
        %v1803 = vadd.f32 %v1716, %v1802
        %v1804 = vpop.f32.mrb[0].mxu0
        %1805 = vmatprep.mubr.bf16.mxu0 0
        %1806 = vmatmul.mubr.bf16.gmra.mrb[0].mxu0 %v1706
        %v1807 = vpop.f32.mrb[0].mxu0
        %v1808 = vadd.f32 %v1716, %v1807
        %v1809 = vpop.f32.mrb[0].mxu0
        %v1810 = vpop.f32.mrb[0].mxu0
        %v1811 = vadd.f32 %v1716, %v1810
        %v1812 = vpop.f32.mrb[0].mxu0
        %1813 = vmatprep.mubr.bf16.mxu0 0
        %1814 = vmatmul.mubr.bf16.gmra.mrb[0].mxu0 %v1707
        %v1815 = vpop.f32.mrb[0].mxu0
        %v1816 = vadd.f32 %v1716, %v1815
        %v1817 = vpop.f32.mrb[0].mxu0
        %v1818 = vpop.f32.mrb[0].mxu0
        %v1819 = vadd.f32 %v1716, %v1818
        %v1820 = vpop.f32.mrb[0].mxu0
        %1821 = vmatprep.mubr.bf16.mxu0 0
        %1822 = vmatmul.mubr.bf16.gmra.mrb[0].mxu0 %v1708
        %v1823 = vpop.f32.mrb[0].mxu0
        %v1824 = vadd.f32 %v1716, %v1823
        %v1825 = vpop.f32.mrb[0].mxu0
        %v1826 = vpop.f32.mrb[0].mxu0
        %v1827 = vadd.f32 %v1716, %v1826
        %v1828 = vpop.f32.mrb[0].mxu0
        %1829 = vmatprep.mubr.bf16.mxu0 0
        %1830 = vmatmul.mubr.bf16.gmra.mrb[0].mxu0 %v1709
        %v1831 = vpop.f32.mrb[0].mxu0
        %v1832 = vadd.f32 %v1716, %v1831
        %v1833 = vpop.f32.mrb[0].mxu0
        %v1834 = vpop.f32.mrb[0].mxu0
        %v1835 = vadd.f32 %v1716, %v1834
        %v1836 = vpop.f32.mrb[0].mxu0
        %1837 = vmatprep.mubr.bf16.mxu0 0
        %1838 = vmatmul.mubr.bf16.gmra.mrb[0].mxu0 %v1710
        %v1839 = vpop.f32.mrb[0].mxu0
        %v1840 = vadd.f32 %v1716, %v1839
        %v1841 = vpop.f32.mrb[0].mxu0
        %v1842 = vpop.f32.mrb[0].mxu0
        %v1843 = vadd.f32 %v1716, %v1842
        %v1844 = vpop.f32.mrb[0].mxu0
        %1845 = vmatprep.mubr.bf16.mxu0 0
        %1846 = vmatmul.mubr.bf16.gmra.mrb[0].mxu0 %v1711
        %v1847 = vpop.f32.mrb[0].mxu0
        %v1848 = vadd.f32 %v1716, %v1847
        %v1849 = vpop.f32.mrb[0].mxu0
        %v1850 = vpop.f32.mrb[0].mxu0
        %v1851 = vadd.f32 %v1716, %v1850
        %v1852 = vpop.f32.mrb[0].mxu0
        %1853 = vmatprep.mubr.bf16.mxu0 0
        %1854 = vmatmul.mubr.bf16.gmra.mrb[0].mxu0 %v1712
        %v1855 = vpop.f32.mrb[0].mxu0
        %v1856 = vadd.f32 %v1716, %v1855
        %v1857 = vpop.f32.mrb[0].mxu0
        %v1858 = vpop.f32.mrb[0].mxu0
        %v1859 = vadd.f32 %v1716, %v1858
        %v1860 = vpop.f32.mrb[0].mxu0
        %1861 = vdwg.mxu0
        %v1862 = vmax.f32 %v1800, 0.0
        %v1863 = vmax.f32 %v1803, 0.0
        %v1864 = vmax.f32 %v1808, 0.0
        %v1865 = vmax.f32 %v1811, 0.0
        %v1866 = vmax.f32 %v1816, 0.0
        %v1867 = vmax.f32 %v1819, 0.0
        %v1868 = vmax.f32 %v1824, 0.0
        %v1869 = vmax.f32 %v1827, 0.0
        %v1870 = vmax.f32 %v1832, 0.0
        %v1871 = vmax.f32 %v1835, 0.0
        %v1872 = vmax.f32 %v1840, 0.0
        %v1873 = vmax.f32 %v1843, 0.0
        %v1874 = vmax.f32 %v1848, 0.0
        %v1875 = vmax.f32 %v1851, 0.0
        %v1876 = vmax.f32 %v1856, 0.0
        %v1877 = vmax.f32 %v1859, 0.0
        %v1878 = vpack.c.bf16 %v1863, %v1862
        %v1879 = vpack.c.bf16 %v1865, %v1864
        %v1880 = vpack.c.bf16 %v1867, %v1866
        %v1881 = vpack.c.bf16 %v1869, %v1868
        %v1882 = vpack.c.bf16 %v1871, %v1870
        %v1883 = vpack.c.bf16 %v1873, %v1872
        %v1884 = vpack.c.bf16 %v1875, %v1874
        %v1885 = vpack.c.bf16 %v1877, %v1876
        %v1886 = vlaneseq
        %v1887 = vshrl.u32 %v1886, 7
        %v1888 = vsub.s32 3, %v1887
        %v1889 = vrot.slane %v846, %v1888
        %v1906 = vunpack.c.l.b16 %v1592
        %v1907 = vunpack.c.l.b16 %v1593
        %v1908 = vunpack.c.l.b16 %v1594
        %v1909 = vunpack.c.l.b16 %v1595
        %v1910 = vunpack.c.l.b16 %v1596
        %v1911 = vunpack.c.l.b16 %v1597
        %v1912 = vunpack.c.l.b16 %v1598
        %v1913 = vunpack.c.l.b16 %v1599
        %v1914 = vunpack.c.l.b16 %v1600
        %v1915 = vunpack.c.l.b16 %v1601
        %v1916 = vunpack.c.l.b16 %v1602
        %v1917 = vunpack.c.l.b16 %v1603
        %v1918 = vunpack.c.l.b16 %v1604
        %v1919 = vunpack.c.l.b16 %v1605
        %v1920 = vunpack.c.l.b16 %v1606
        %v1921 = vunpack.c.l.b16 %v1607
        %v1922 = vpack.c.b16 %v1907, %v1906
        %v1923 = vpack.c.b16 %v1909, %v1908
        %v1924 = vpack.c.b16 %v1911, %v1910
        %v1925 = vpack.c.b16 %v1913, %v1912
        %v1926 = vpack.c.b16 %v1915, %v1914
        %v1927 = vpack.c.b16 %v1917, %v1916
        %v1928 = vpack.c.b16 %v1919, %v1918
        %v1929 = vpack.c.b16 %v1921, %v1920
        %1938 = vmatprep.subr.bf16.mxu0 0
        %1939 = vmatpush1.bf16.msra.mxu0 %v1922
        %1940 = vmatprep.subr.bf16.mxu0 0
        %1941 = vmatpush1.bf16.msra.mxu0 %v1923
        %1942 = vmatprep.subr.bf16.mxu0 0
        %1943 = vmatpush1.bf16.msra.mxu0 %v1924
        %1944 = vmatprep.subr.bf16.mxu0 0
        %1945 = vmatpush1.bf16.msra.mxu0 %v1925
        %1946 = vmatprep.subr.bf16.mxu0 0
        %1947 = vmatpush1.bf16.msra.mxu0 %v1926
        %1948 = vmatprep.subr.bf16.mxu0 0
        %1949 = vmatpush1.bf16.msra.mxu0 %v1927
        %1950 = vmatprep.subr.bf16.mxu0 0
        %1951 = vmatpush1.bf16.msra.mxu0 %v1928
        %1952 = vmatprep.subr.bf16.mxu0 0
        %1953 = vmatpush1.bf16.msra.mxu0 %v1929
        %1954 = vmatprep.subr.bf16.mxu0 0
        %1955 = vmatpush1.bf16.msra.mxu0 0
        %1956 = vmatprep.subr.bf16.mxu0 0
        %1957 = vmatpush1.bf16.msra.mxu0 0
        %1958 = vmatprep.subr.bf16.mxu0 0
        %1959 = vmatpush1.bf16.msra.mxu0 0
        %1960 = vmatprep.subr.bf16.mxu0 0
        %1961 = vmatpush1.bf16.msra.mxu0 0
        %1962 = vmatprep.subr.bf16.mxu0 0
        %1963 = vmatpush1.bf16.msra.mxu0 0
        %1964 = vmatprep.subr.bf16.mxu0 0
        %1965 = vmatpush1.bf16.msra.mxu0 0
        %1966 = vmatprep.subr.bf16.mxu0 0
        %1967 = vmatpush1.bf16.msra.mxu0 0
        %1968 = vmatprep.subr.bf16.mxu0 0
        %1969 = vmatpush1.bf16.msra.mxu0 0
        %1970 = vmatprep.mubr.bf16.mxu0 0
        %1971 = vmatmul.mubr.bf16.gmra.mrb[0].mxu0 %v1878
        %v1972 = vpop.f32.mrb[0].mxu0
        %v1973 = vadd.f32 %v1889, %v1972
        %v1974 = vpop.f32.mrb[0].mxu0
        %v1975 = vpop.f32.mrb[0].mxu0
        %v1976 = vadd.f32 %v1889, %v1975
        %v1977 = vpop.f32.mrb[0].mxu0
        %1978 = vmatprep.mubr.bf16.mxu0 0
        %1979 = vmatmul.mubr.bf16.gmra.mrb[0].mxu0 %v1879
        %v1980 = vpop.f32.mrb[0].mxu0
        %v1981 = vadd.f32 %v1889, %v1980
        %v1982 = vpop.f32.mrb[0].mxu0
        %v1983 = vpop.f32.mrb[0].mxu0
        %v1984 = vadd.f32 %v1889, %v1983
        %v1985 = vpop.f32.mrb[0].mxu0
        %1986 = vmatprep.mubr.bf16.mxu0 0
        %1987 = vmatmul.mubr.bf16.gmra.mrb[0].mxu0 %v1880
        %v1988 = vpop.f32.mrb[0].mxu0
        %v1989 = vadd.f32 %v1889, %v1988
        %v1990 = vpop.f32.mrb[0].mxu0
        %v1991 = vpop.f32.mrb[0].mxu0
        %v1992 = vadd.f32 %v1889, %v1991
        %v1993 = vpop.f32.mrb[0].mxu0
        %1994 = vmatprep.mubr.bf16.mxu0 0
        %1995 = vmatmul.mubr.bf16.gmra.mrb[0].mxu0 %v1881
        %v1996 = vpop.f32.mrb[0].mxu0
        %v1997 = vadd.f32 %v1889, %v1996
        %v1998 = vpop.f32.mrb[0].mxu0
        %v1999 = vpop.f32.mrb[0].mxu0
        %v2000 = vadd.f32 %v1889, %v1999
        %v2001 = vpop.f32.mrb[0].mxu0
        %2002 = vmatprep.mubr.bf16.mxu0 0
        %2003 = vmatmul.mubr.bf16.gmra.mrb[0].mxu0 %v1882
        %v2004 = vpop.f32.mrb[0].mxu0
        %v2005 = vadd.f32 %v1889, %v2004
        %v2006 = vpop.f32.mrb[0].mxu0
        %v2007 = vpop.f32.mrb[0].mxu0
        %v2008 = vadd.f32 %v1889, %v2007
        %v2009 = vpop.f32.mrb[0].mxu0
        %2010 = vmatprep.mubr.bf16.mxu0 0
        %2011 = vmatmul.mubr.bf16.gmra.mrb[0].mxu0 %v1883
        %v2012 = vpop.f32.mrb[0].mxu0
        %v2013 = vadd.f32 %v1889, %v2012
        %v2014 = vpop.f32.mrb[0].mxu0
        %v2015 = vpop.f32.mrb[0].mxu0
        %v2016 = vadd.f32 %v1889, %v2015
        %v2017 = vpop.f32.mrb[0].mxu0
        %2018 = vmatprep.mubr.bf16.mxu0 0
        %2019 = vmatmul.mubr.bf16.gmra.mrb[0].mxu0 %v1884
        %v2020 = vpop.f32.mrb[0].mxu0
        %v2021 = vadd.f32 %v1889, %v2020
        %v2022 = vpop.f32.mrb[0].mxu0
        %v2023 = vpop.f32.mrb[0].mxu0
        %v2024 = vadd.f32 %v1889, %v2023
        %v2025 = vpop.f32.mrb[0].mxu0
        %2026 = vmatprep.mubr.bf16.mxu0 0
        %2027 = vmatmul.mubr.bf16.gmra.mrb[0].mxu0 %v1885
        %v2028 = vpop.f32.mrb[0].mxu0
        %v2029 = vadd.f32 %v1889, %v2028
        %v2030 = vpop.f32.mrb[0].mxu0
        %v2031 = vpop.f32.mrb[0].mxu0
        %v2032 = vadd.f32 %v1889, %v2031
        %v2033 = vpop.f32.mrb[0].mxu0
        %2034 = vdwg.mxu0
        %v2035 = vmax.f32 %v1973, 0.0
        %v2036 = vmax.f32 %v1976, 0.0
        %v2037 = vmax.f32 %v1981, 0.0
        %v2038 = vmax.f32 %v1984, 0.0
        %v2039 = vmax.f32 %v1989, 0.0
        %v2040 = vmax.f32 %v1992, 0.0
        %v2041 = vmax.f32 %v1997, 0.0
        %v2042 = vmax.f32 %v2000, 0.0
        %v2043 = vmax.f32 %v2005, 0.0
        %v2044 = vmax.f32 %v2008, 0.0
        %v2045 = vmax.f32 %v2013, 0.0
        %v2046 = vmax.f32 %v2016, 0.0
        %v2047 = vmax.f32 %v2021, 0.0
        %v2048 = vmax.f32 %v2024, 0.0
        %v2049 = vmax.f32 %v2029, 0.0
        %v2050 = vmax.f32 %v2032, 0.0
        %v2051 = vpack.c.bf16 %v2036, %v2035
        %v2052 = vpack.c.bf16 %v2038, %v2037
        %v2053 = vpack.c.bf16 %v2040, %v2039
        %v2054 = vpack.c.bf16 %v2042, %v2041
        %v2055 = vpack.c.bf16 %v2044, %v2043
        %v2056 = vpack.c.bf16 %v2046, %v2045
        %v2057 = vpack.c.bf16 %v2048, %v2047
        %v2058 = vpack.c.bf16 %v2050, %v2049
        %v2059 = vld [vmem:[#allocation14] sm:$0xf]
        %v2060 = vld [vmem:[#allocation14 + $0x4] sm:$0xf]
        %v2061 = vld [vmem:[#allocation14 + $0x8] sm:$0xf]
        %v2062 = vld [vmem:[#allocation14 + $0xc] sm:$0xf]
        %v2063 = vld [vmem:[#allocation14 + $0x10] sm:$0xf]
        %v2064 = vld [vmem:[#allocation14 + $0x14] sm:$0xf]
        %v2065 = vld [vmem:[#allocation14 + $0x18] sm:$0xf]
        %v2066 = vld [vmem:[#allocation14 + $0x1c] sm:$0xf]
        %v2067 = vld [vmem:[#allocation14 + $0x20] sm:$0xf]
        %v2068 = vld [vmem:[#allocation14 + $0x24] sm:$0xf]
        %v2069 = vld [vmem:[#allocation14 + $0x28] sm:$0xf]
        %v2070 = vld [vmem:[#allocation14 + $0x2c] sm:$0xf]
        %v2071 = vld [vmem:[#allocation14 + $0x30] sm:$0xf]
        %v2072 = vld [vmem:[#allocation14 + $0x34] sm:$0xf]
        %v2073 = vld [vmem:[#allocation14 + $0x38] sm:$0xf]
        %v2074 = vld [vmem:[#allocation14 + $0x3c] sm:$0xf]
        %v2075 = vld [vmem:[#allocation16] sm:$0xf]
        %v2076 = vld [vmem:[#allocation16 + $0x4] sm:$0xf]
        %v2077 = vld [vmem:[#allocation16 + $0x8] sm:$0xf]
        %v2078 = vld [vmem:[#allocation16 + $0xc] sm:$0xf]
        %v2079 = vld [vmem:[#allocation16 + $0x10] sm:$0xf]
        %v2080 = vld [vmem:[#allocation16 + $0x14] sm:$0xf]
        %v2081 = vld [vmem:[#allocation16 + $0x18] sm:$0xf]
        %v2082 = vld [vmem:[#allocation16 + $0x1c] sm:$0xf]
        %v2083 = vld [vmem:[#allocation16 + $0x20] sm:$0xf]
        %v2084 = vld [vmem:[#allocation16 + $0x24] sm:$0xf]
        %v2085 = vld [vmem:[#allocation16 + $0x28] sm:$0xf]
        %v2086 = vld [vmem:[#allocation16 + $0x2c] sm:$0xf]
        %v2087 = vld [vmem:[#allocation16 + $0x30] sm:$0xf]
        %v2088 = vld [vmem:[#allocation16 + $0x34] sm:$0xf]
        %v2089 = vld [vmem:[#allocation16 + $0x38] sm:$0xf]
        %v2090 = vld [vmem:[#allocation16 + $0x3c] sm:$0xf]
        %2091 = vmatprep.subr.bf16.mxu0 0
        %2092 = vmatpush1.bf16.msra.mxu0 %v2051
        %2093 = vmatprep.subr.bf16.mxu0 0
        %2094 = vmatpush1.bf16.msra.mxu0 %v2052
        %2095 = vmatprep.subr.bf16.mxu0 0
        %2096 = vmatpush1.bf16.msra.mxu0 %v2053
        %2097 = vmatprep.subr.bf16.mxu0 0
        %2098 = vmatpush1.bf16.msra.mxu0 %v2054
        %2099 = vmatprep.subr.bf16.mxu0 0
        %2100 = vmatpush1.bf16.msra.mxu0 %v2055
        %2101 = vmatprep.subr.bf16.mxu0 0
        %2102 = vmatpush1.bf16.msra.mxu0 %v2056
        %2103 = vmatprep.subr.bf16.mxu0 0
        %2104 = vmatpush1.bf16.msra.mxu0 %v2057
        %2105 = vmatprep.subr.bf16.mxu0 0
        %2106 = vmatpush1.bf16.msra.mxu0 %v2058
        %2107 = vmatprep.subr.bf16.mxu0 0
        %2108 = vmatpush1.bf16.msra.mxu0 0
        %2109 = vmatprep.subr.bf16.mxu0 0
        %2110 = vmatpush1.bf16.msra.mxu0 0
        %2111 = vmatprep.subr.bf16.mxu0 0
        %2112 = vmatpush1.bf16.msra.mxu0 0
        %2113 = vmatprep.subr.bf16.mxu0 0
        %2114 = vmatpush1.bf16.msra.mxu0 0
        %2115 = vmatprep.subr.bf16.mxu0 0
        %2116 = vmatpush1.bf16.msra.mxu0 0
        %2117 = vmatprep.subr.bf16.mxu0 0
        %2118 = vmatpush1.bf16.msra.mxu0 0
        %2119 = vmatprep.subr.bf16.mxu0 0
        %2120 = vmatpush1.bf16.msra.mxu0 0
        %2121 = vmatprep.subr.bf16.mxu0 0
        %2122 = vmatpush1.bf16.msra.mxu0 0
        %2123 = vmatprep.mubr.bf16.mxu0 0
        %2124 = vmatmul.mubr.bf16.gmra.mrb[0].mxu0 %v1109
        %v2125 = vpop.f32.mrb[0].mxu0
        %v2126 = vadd.f32 0.0, %v2125
        %v2127 = vpop.f32.mrb[0].mxu0
        %v2128 = vpop.f32.mrb[0].mxu0
        %v2129 = vadd.f32 0.0, %v2128
        %v2130 = vpop.f32.mrb[0].mxu0
        %2131 = vmatprep.mubr.bf16.mxu0 0
        %2132 = vmatmul.mubr.bf16.gmra.mrb[0].mxu0 %v1110
        %v2133 = vpop.f32.mrb[0].mxu0
        %v2134 = vadd.f32 0.0, %v2133
        %v2135 = vpop.f32.mrb[0].mxu0
        %v2136 = vpop.f32.mrb[0].mxu0
        %v2137 = vadd.f32 0.0, %v2136
        %v2138 = vpop.f32.mrb[0].mxu0
        %2139 = vmatprep.mubr.bf16.mxu0 0
        %2140 = vmatmul.mubr.bf16.gmra.mrb[0].mxu0 %v1111
        %v2141 = vpop.f32.mrb[0].mxu0
        %v2142 = vadd.f32 0.0, %v2141
        %v2143 = vpop.f32.mrb[0].mxu0
        %v2144 = vpop.f32.mrb[0].mxu0
        %v2145 = vadd.f32 0.0, %v2144
        %v2146 = vpop.f32.mrb[0].mxu0
        %2147 = vmatprep.mubr.bf16.mxu0 0
        %2148 = vmatmul.mubr.bf16.gmra.mrb[0].mxu0 %v1112
        %v2149 = vpop.f32.mrb[0].mxu0
        %v2150 = vadd.f32 0.0, %v2149
        %v2151 = vpop.f32.mrb[0].mxu0
        %v2152 = vpop.f32.mrb[0].mxu0
        %v2153 = vadd.f32 0.0, %v2152
        %v2154 = vpop.f32.mrb[0].mxu0
        %2155 = vmatprep.mubr.bf16.mxu0 0
        %2156 = vmatmul.mubr.bf16.gmra.mrb[0].mxu0 %v1113
        %v2157 = vpop.f32.mrb[0].mxu0
        %v2158 = vadd.f32 0.0, %v2157
        %v2159 = vpop.f32.mrb[0].mxu0
        %v2160 = vpop.f32.mrb[0].mxu0
        %v2161 = vadd.f32 0.0, %v2160
        %v2162 = vpop.f32.mrb[0].mxu0
        %2163 = vmatprep.mubr.bf16.mxu0 0
        %2164 = vmatmul.mubr.bf16.gmra.mrb[0].mxu0 %v1114
        %v2165 = vpop.f32.mrb[0].mxu0
        %v2166 = vadd.f32 0.0, %v2165
        %v2167 = vpop.f32.mrb[0].mxu0
        %v2168 = vpop.f32.mrb[0].mxu0
        %v2169 = vadd.f32 0.0, %v2168
        %v2170 = vpop.f32.mrb[0].mxu0
        %2171 = vmatprep.mubr.bf16.mxu0 0
        %2172 = vmatmul.mubr.bf16.gmra.mrb[0].mxu0 %v1115
        %v2173 = vpop.f32.mrb[0].mxu0
        %v2174 = vadd.f32 0.0, %v2173
        %v2175 = vpop.f32.mrb[0].mxu0
        %v2176 = vpop.f32.mrb[0].mxu0
        %v2177 = vadd.f32 0.0, %v2176
        %v2178 = vpop.f32.mrb[0].mxu0
        %2179 = vmatprep.mubr.bf16.mxu0 0
        %2180 = vmatmul.mubr.bf16.gmra.mrb[0].mxu0 %v1116
        %v2181 = vpop.f32.mrb[0].mxu0
        %v2182 = vadd.f32 0.0, %v2181
        %v2183 = vpop.f32.mrb[0].mxu0
        %v2184 = vpop.f32.mrb[0].mxu0
        %v2185 = vadd.f32 0.0, %v2184
        %v2186 = vpop.f32.mrb[0].mxu0
        %2187 = vdwg.mxu0
        %v2188 = vpack.c.bf16 %v2129, %v2126
        %v2189 = vpack.c.bf16 %v2137, %v2134
        %v2190 = vpack.c.bf16 %v2145, %v2142
        %v2191 = vpack.c.bf16 %v2153, %v2150
        %v2192 = vpack.c.bf16 %v2161, %v2158
        %v2193 = vpack.c.bf16 %v2169, %v2166
        %v2194 = vpack.c.bf16 %v2177, %v2174
        %v2195 = vpack.c.bf16 %v2185, %v2182
        %v2196 = vlaneseq
        %v2197 = vshrl.u32 %v2196, 7
        %v2198 = vsub.s32 4, %v2197
        %v2199 = vrot.slane %v846, %v2198
        %v2216 = vunpack.c.l.b16 %v2059
        %v2217 = vunpack.c.l.b16 %v2060
        %v2218 = vunpack.c.l.b16 %v2061
        %v2219 = vunpack.c.l.b16 %v2062
        %v2220 = vunpack.c.l.b16 %v2063
        %v2221 = vunpack.c.l.b16 %v2064
        %v2222 = vunpack.c.l.b16 %v2065
        %v2223 = vunpack.c.l.b16 %v2066
        %v2224 = vunpack.c.l.b16 %v2067
        %v2225 = vunpack.c.l.b16 %v2068
        %v2226 = vunpack.c.l.b16 %v2069
        %v2227 = vunpack.c.l.b16 %v2070
        %v2228 = vunpack.c.l.b16 %v2071
        %v2229 = vunpack.c.l.b16 %v2072
        %v2230 = vunpack.c.l.b16 %v2073
        %v2231 = vunpack.c.l.b16 %v2074
        %v2232 = vpack.c.b16 %v2217, %v2216
        %v2233 = vpack.c.b16 %v2219, %v2218
        %v2234 = vpack.c.b16 %v2221, %v2220
        %v2235 = vpack.c.b16 %v2223, %v2222
        %v2236 = vpack.c.b16 %v2225, %v2224
        %v2237 = vpack.c.b16 %v2227, %v2226
        %v2238 = vpack.c.b16 %v2229, %v2228
        %v2239 = vpack.c.b16 %v2231, %v2230
        %2248 = vmatprep.subr.bf16.mxu0 0
        %2249 = vmatpush1.bf16.msra.mxu0 %v2232
        %2250 = vmatprep.subr.bf16.mxu0 0
        %2251 = vmatpush1.bf16.msra.mxu0 %v2233
        %2252 = vmatprep.subr.bf16.mxu0 0
        %2253 = vmatpush1.bf16.msra.mxu0 %v2234
        %2254 = vmatprep.subr.bf16.mxu0 0
        %2255 = vmatpush1.bf16.msra.mxu0 %v2235
        %2256 = vmatprep.subr.bf16.mxu0 0
        %2257 = vmatpush1.bf16.msra.mxu0 %v2236
        %2258 = vmatprep.subr.bf16.mxu0 0
        %2259 = vmatpush1.bf16.msra.mxu0 %v2237
        %2260 = vmatprep.subr.bf16.mxu0 0
        %2261 = vmatpush1.bf16.msra.mxu0 %v2238
        %2262 = vmatprep.subr.bf16.mxu0 0
        %2263 = vmatpush1.bf16.msra.mxu0 %v2239
        %2264 = vmatprep.subr.bf16.mxu0 0
        %2265 = vmatpush1.bf16.msra.mxu0 0
        %2266 = vmatprep.subr.bf16.mxu0 0
        %2267 = vmatpush1.bf16.msra.mxu0 0
        %2268 = vmatprep.subr.bf16.mxu0 0
        %2269 = vmatpush1.bf16.msra.mxu0 0
        %2270 = vmatprep.subr.bf16.mxu0 0
        %2271 = vmatpush1.bf16.msra.mxu0 0
        %2272 = vmatprep.subr.bf16.mxu0 0
        %2273 = vmatpush1.bf16.msra.mxu0 0
        %2274 = vmatprep.subr.bf16.mxu0 0
        %2275 = vmatpush1.bf16.msra.mxu0 0
        %2276 = vmatprep.subr.bf16.mxu0 0
        %2277 = vmatpush1.bf16.msra.mxu0 0
        %2278 = vmatprep.subr.bf16.mxu0 0
        %2279 = vmatpush1.bf16.msra.mxu0 0
        %2280 = vmatprep.mubr.bf16.mxu0 0
        %2281 = vmatmul.mubr.bf16.gmra.mrb[0].mxu0 %v2188
        %v2282 = vpop.f32.mrb[0].mxu0
        %v2283 = vadd.f32 %v2199, %v2282
        %v2284 = vpop.f32.mrb[0].mxu0
        %v2285 = vpop.f32.mrb[0].mxu0
        %v2286 = vadd.f32 %v2199, %v2285
        %v2287 = vpop.f32.mrb[0].mxu0
        %2288 = vmatprep.mubr.bf16.mxu0 0
        %2289 = vmatmul.mubr.bf16.gmra.mrb[0].mxu0 %v2189
        %v2290 = vpop.f32.mrb[0].mxu0
        %v2291 = vadd.f32 %v2199, %v2290
        %v2292 = vpop.f32.mrb[0].mxu0
        %v2293 = vpop.f32.mrb[0].mxu0
        %v2294 = vadd.f32 %v2199, %v2293
        %v2295 = vpop.f32.mrb[0].mxu0
        %2296 = vmatprep.mubr.bf16.mxu0 0
        %2297 = vmatmul.mubr.bf16.gmra.mrb[0].mxu0 %v2190
        %v2298 = vpop.f32.mrb[0].mxu0
        %v2299 = vadd.f32 %v2199, %v2298
        %v2300 = vpop.f32.mrb[0].mxu0
        %v2301 = vpop.f32.mrb[0].mxu0
        %v2302 = vadd.f32 %v2199, %v2301
        %v2303 = vpop.f32.mrb[0].mxu0
        %2304 = vmatprep.mubr.bf16.mxu0 0
        %2305 = vmatmul.mubr.bf16.gmra.mrb[0].mxu0 %v2191
        %v2306 = vpop.f32.mrb[0].mxu0
        %v2307 = vadd.f32 %v2199, %v2306
        %v2308 = vpop.f32.mrb[0].mxu0
        %v2309 = vpop.f32.mrb[0].mxu0
        %v2310 = vadd.f32 %v2199, %v2309
        %v2311 = vpop.f32.mrb[0].mxu0
        %2312 = vmatprep.mubr.bf16.mxu0 0
        %2313 = vmatmul.mubr.bf16.gmra.mrb[0].mxu0 %v2192
        %v2314 = vpop.f32.mrb[0].mxu0
        %v2315 = vadd.f32 %v2199, %v2314
        %v2316 = vpop.f32.mrb[0].mxu0
        %v2317 = vpop.f32.mrb[0].mxu0
        %v2318 = vadd.f32 %v2199, %v2317
        %v2319 = vpop.f32.mrb[0].mxu0
        %2320 = vmatprep.mubr.bf16.mxu0 0
        %2321 = vmatmul.mubr.bf16.gmra.mrb[0].mxu0 %v2193
        %v2322 = vpop.f32.mrb[0].mxu0
        %v2323 = vadd.f32 %v2199, %v2322
        %v2324 = vpop.f32.mrb[0].mxu0
        %v2325 = vpop.f32.mrb[0].mxu0
        %v2326 = vadd.f32 %v2199, %v2325
        %v2327 = vpop.f32.mrb[0].mxu0
        %2328 = vmatprep.mubr.bf16.mxu0 0
        %2329 = vmatmul.mubr.bf16.gmra.mrb[0].mxu0 %v2194
        %v2330 = vpop.f32.mrb[0].mxu0
        %v2331 = vadd.f32 %v2199, %v2330
        %v2332 = vpop.f32.mrb[0].mxu0
        %v2333 = vpop.f32.mrb[0].mxu0
        %v2334 = vadd.f32 %v2199, %v2333
        %v2335 = vpop.f32.mrb[0].mxu0
        %2336 = vmatprep.mubr.bf16.mxu0 0
        %2337 = vmatmul.mubr.bf16.gmra.mrb[0].mxu0 %v2195
        %v2338 = vpop.f32.mrb[0].mxu0
        %v2339 = vadd.f32 %v2199, %v2338
        %v2340 = vpop.f32.mrb[0].mxu0
        %v2341 = vpop.f32.mrb[0].mxu0
        %v2342 = vadd.f32 %v2199, %v2341
        %v2343 = vpop.f32.mrb[0].mxu0
        %2344 = vdwg.mxu0
        %v2345 = vmax.f32 %v2283, 0.0
        %v2346 = vmax.f32 %v2286, 0.0
        %v2347 = vmax.f32 %v2291, 0.0
        %v2348 = vmax.f32 %v2294, 0.0
        %v2349 = vmax.f32 %v2299, 0.0
        %v2350 = vmax.f32 %v2302, 0.0
        %v2351 = vmax.f32 %v2307, 0.0
        %v2352 = vmax.f32 %v2310, 0.0
        %v2353 = vmax.f32 %v2315, 0.0
        %v2354 = vmax.f32 %v2318, 0.0
        %v2355 = vmax.f32 %v2323, 0.0
        %v2356 = vmax.f32 %v2326, 0.0
        %v2357 = vmax.f32 %v2331, 0.0
        %v2358 = vmax.f32 %v2334, 0.0
        %v2359 = vmax.f32 %v2339, 0.0
        %v2360 = vmax.f32 %v2342, 0.0
        %v2361 = vpack.c.bf16 %v2346, %v2345
        %v2362 = vpack.c.bf16 %v2348, %v2347
        %v2363 = vpack.c.bf16 %v2350, %v2349
        %v2364 = vpack.c.bf16 %v2352, %v2351
        %v2365 = vpack.c.bf16 %v2354, %v2353
        %v2366 = vpack.c.bf16 %v2356, %v2355
        %v2367 = vpack.c.bf16 %v2358, %v2357
        %v2368 = vpack.c.bf16 %v2360, %v2359
        %v2369 = vlaneseq
        %v2370 = vshrl.u32 %v2369, 7
        %v2371 = vsub.s32 5, %v2370
        %v2372 = vrot.slane %v846, %v2371
        %v2389 = vunpack.c.l.b16 %v2075
        %v2390 = vunpack.c.l.b16 %v2076
        %v2391 = vunpack.c.l.b16 %v2077
        %v2392 = vunpack.c.l.b16 %v2078
        %v2393 = vunpack.c.l.b16 %v2079
        %v2394 = vunpack.c.l.b16 %v2080
        %v2395 = vunpack.c.l.b16 %v2081
        %v2396 = vunpack.c.l.b16 %v2082
        %v2397 = vunpack.c.l.b16 %v2083
        %v2398 = vunpack.c.l.b16 %v2084
        %v2399 = vunpack.c.l.b16 %v2085
        %v2400 = vunpack.c.l.b16 %v2086
        %v2401 = vunpack.c.l.b16 %v2087
        %v2402 = vunpack.c.l.b16 %v2088
        %v2403 = vunpack.c.l.b16 %v2089
        %v2404 = vunpack.c.l.b16 %v2090
        %v2405 = vpack.c.b16 %v2390, %v2389
        %v2406 = vpack.c.b16 %v2392, %v2391
        %v2407 = vpack.c.b16 %v2394, %v2393
        %v2408 = vpack.c.b16 %v2396, %v2395
        %v2409 = vpack.c.b16 %v2398, %v2397
        %v2410 = vpack.c.b16 %v2400, %v2399
        %v2411 = vpack.c.b16 %v2402, %v2401
        %v2412 = vpack.c.b16 %v2404, %v2403
        %2421 = vmatprep.subr.bf16.mxu0 0
        %2422 = vmatpush1.bf16.msra.mxu0 %v2405
        %2423 = vmatprep.subr.bf16.mxu0 0
        %2424 = vmatpush1.bf16.msra.mxu0 %v2406
        %2425 = vmatprep.subr.bf16.mxu0 0
        %2426 = vmatpush1.bf16.msra.mxu0 %v2407
        %2427 = vmatprep.subr.bf16.mxu0 0
        %2428 = vmatpush1.bf16.msra.mxu0 %v2408
        %2429 = vmatprep.subr.bf16.mxu0 0
        %2430 = vmatpush1.bf16.msra.mxu0 %v2409
        %2431 = vmatprep.subr.bf16.mxu0 0
        %2432 = vmatpush1.bf16.msra.mxu0 %v2410
        %2433 = vmatprep.subr.bf16.mxu0 0
        %2434 = vmatpush1.bf16.msra.mxu0 %v2411
        %2435 = vmatprep.subr.bf16.mxu0 0
        %2436 = vmatpush1.bf16.msra.mxu0 %v2412
        %2437 = vmatprep.subr.bf16.mxu0 0
        %2438 = vmatpush1.bf16.msra.mxu0 0
        %2439 = vmatprep.subr.bf16.mxu0 0
        %2440 = vmatpush1.bf16.msra.mxu0 0
        %2441 = vmatprep.subr.bf16.mxu0 0
        %2442 = vmatpush1.bf16.msra.mxu0 0
        %2443 = vmatprep.subr.bf16.mxu0 0
        %2444 = vmatpush1.bf16.msra.mxu0 0
        %2445 = vmatprep.subr.bf16.mxu0 0
        %2446 = vmatpush1.bf16.msra.mxu0 0
        %2447 = vmatprep.subr.bf16.mxu0 0
        %2448 = vmatpush1.bf16.msra.mxu0 0
        %2449 = vmatprep.subr.bf16.mxu0 0
        %2450 = vmatpush1.bf16.msra.mxu0 0
        %2451 = vmatprep.subr.bf16.mxu0 0
        %2452 = vmatpush1.bf16.msra.mxu0 0
        %2453 = vmatprep.mubr.bf16.mxu0 0
        %2454 = vmatmul.mubr.bf16.gmra.mrb[0].mxu0 %v2361
        %v2455 = vpop.f32.mrb[0].mxu0
        %v2456 = vadd.f32 %v2372, %v2455
        %v2457 = vpop.f32.mrb[0].mxu0
        %v2458 = vpop.f32.mrb[0].mxu0
        %v2459 = vadd.f32 %v2372, %v2458
        %v2460 = vpop.f32.mrb[0].mxu0
        %2461 = vmatprep.mubr.bf16.mxu0 0
        %2462 = vmatmul.mubr.bf16.gmra.mrb[0].mxu0 %v2362
        %v2463 = vpop.f32.mrb[0].mxu0
        %v2464 = vadd.f32 %v2372, %v2463
        %v2465 = vpop.f32.mrb[0].mxu0
        %v2466 = vpop.f32.mrb[0].mxu0
        %v2467 = vadd.f32 %v2372, %v2466
        %v2468 = vpop.f32.mrb[0].mxu0
        %2469 = vmatprep.mubr.bf16.mxu0 0
        %2470 = vmatmul.mubr.bf16.gmra.mrb[0].mxu0 %v2363
        %v2471 = vpop.f32.mrb[0].mxu0
        %v2472 = vadd.f32 %v2372, %v2471
        %v2473 = vpop.f32.mrb[0].mxu0
        %v2474 = vpop.f32.mrb[0].mxu0
        %v2475 = vadd.f32 %v2372, %v2474
        %v2476 = vpop.f32.mrb[0].mxu0
        %2477 = vmatprep.mubr.bf16.mxu0 0
        %2478 = vmatmul.mubr.bf16.gmra.mrb[0].mxu0 %v2364
        %v2479 = vpop.f32.mrb[0].mxu0
        %v2480 = vadd.f32 %v2372, %v2479
        %v2481 = vpop.f32.mrb[0].mxu0
        %v2482 = vpop.f32.mrb[0].mxu0
        %v2483 = vadd.f32 %v2372, %v2482
        %v2484 = vpop.f32.mrb[0].mxu0
        %2485 = vmatprep.mubr.bf16.mxu0 0
        %2486 = vmatmul.mubr.bf16.gmra.mrb[0].mxu0 %v2365
        %v2487 = vpop.f32.mrb[0].mxu0
        %v2488 = vadd.f32 %v2372, %v2487
        %v2489 = vpop.f32.mrb[0].mxu0
        %v2490 = vpop.f32.mrb[0].mxu0
        %v2491 = vadd.f32 %v2372, %v2490
        %v2492 = vpop.f32.mrb[0].mxu0
        %2493 = vmatprep.mubr.bf16.mxu0 0
        %2494 = vmatmul.mubr.bf16.gmra.mrb[0].mxu0 %v2366
        %v2495 = vpop.f32.mrb[0].mxu0
        %v2496 = vadd.f32 %v2372, %v2495
        %v2497 = vpop.f32.mrb[0].mxu0
        %v2498 = vpop.f32.mrb[0].mxu0
        %v2499 = vadd.f32 %v2372, %v2498
        %v2500 = vpop.f32.mrb[0].mxu0
        %2501 = vmatprep.mubr.bf16.mxu0 0
        %2502 = vmatmul.mubr.bf16.gmra.mrb[0].mxu0 %v2367
        %v2503 = vpop.f32.mrb[0].mxu0
        %v2504 = vadd.f32 %v2372, %v2503
        %v2505 = vpop.f32.mrb[0].mxu0
        %v2506 = vpop.f32.mrb[0].mxu0
        %v2507 = vadd.f32 %v2372, %v2506
        %v2508 = vpop.f32.mrb[0].mxu0
        %2509 = vmatprep.mubr.bf16.mxu0 0
        %2510 = vmatmul.mubr.bf16.gmra.mrb[0].mxu0 %v2368
        %v2511 = vpop.f32.mrb[0].mxu0
        %v2512 = vadd.f32 %v2372, %v2511
        %v2513 = vpop.f32.mrb[0].mxu0
        %v2514 = vpop.f32.mrb[0].mxu0
        %v2515 = vadd.f32 %v2372, %v2514
        %v2516 = vpop.f32.mrb[0].mxu0
        %2517 = vdwg.mxu0
        %v2518 = vmax.f32 %v2456, 0.0
        %v2519 = vmax.f32 %v2459, 0.0
        %v2520 = vmax.f32 %v2464, 0.0
        %v2521 = vmax.f32 %v2467, 0.0
        %v2522 = vmax.f32 %v2472, 0.0
        %v2523 = vmax.f32 %v2475, 0.0
        %v2524 = vmax.f32 %v2480, 0.0
        %v2525 = vmax.f32 %v2483, 0.0
        %v2526 = vmax.f32 %v2488, 0.0
        %v2527 = vmax.f32 %v2491, 0.0
        %v2528 = vmax.f32 %v2496, 0.0
        %v2529 = vmax.f32 %v2499, 0.0
        %v2530 = vmax.f32 %v2504, 0.0
        %v2531 = vmax.f32 %v2507, 0.0
        %v2532 = vmax.f32 %v2512, 0.0
        %v2533 = vmax.f32 %v2515, 0.0
        %v2534 = vpack.c.bf16 %v2519, %v2518
        %v2535 = vpack.c.bf16 %v2521, %v2520
        %v2536 = vpack.c.bf16 %v2523, %v2522
        %v2537 = vpack.c.bf16 %v2525, %v2524
        %v2538 = vpack.c.bf16 %v2527, %v2526
        %v2539 = vpack.c.bf16 %v2529, %v2528
        %v2540 = vpack.c.bf16 %v2531, %v2530
        %v2541 = vpack.c.bf16 %v2533, %v2532
        %2542 = vmatprep.subr.bf16.mxu0 0
        %2543 = vmatpush1.bf16.msra.mxu0 %v1568
        %2544 = vmatprep.subr.bf16.mxu0 0
        %2545 = vmatpush1.bf16.msra.mxu0 %v1569
        %2546 = vmatprep.subr.bf16.mxu0 0
        %2547 = vmatpush1.bf16.msra.mxu0 %v1570
        %2548 = vmatprep.subr.bf16.mxu0 0
        %2549 = vmatpush1.bf16.msra.mxu0 %v1571
        %2550 = vmatprep.subr.bf16.mxu0 0
        %2551 = vmatpush1.bf16.msra.mxu0 %v1572
        %2552 = vmatprep.subr.bf16.mxu0 0
        %2553 = vmatpush1.bf16.msra.mxu0 %v1573
        %2554 = vmatprep.subr.bf16.mxu0 0
        %2555 = vmatpush1.bf16.msra.mxu0 %v1574
        %2556 = vmatprep.subr.bf16.mxu0 0
        %2557 = vmatpush1.bf16.msra.mxu0 %v1575
        %2558 = vmatprep.subr.bf16.mxu0 0
        %2559 = vmatpush1.bf16.msra.mxu0 0
        %2560 = vmatprep.subr.bf16.mxu0 0
        %2561 = vmatpush1.bf16.msra.mxu0 0
        %2562 = vmatprep.subr.bf16.mxu0 0
        %2563 = vmatpush1.bf16.msra.mxu0 0
        %2564 = vmatprep.subr.bf16.mxu0 0
        %2565 = vmatpush1.bf16.msra.mxu0 0
        %2566 = vmatprep.subr.bf16.mxu0 0
        %2567 = vmatpush1.bf16.msra.mxu0 0
        %2568 = vmatprep.subr.bf16.mxu0 0
        %2569 = vmatpush1.bf16.msra.mxu0 0
        %2570 = vmatprep.subr.bf16.mxu0 0
        %2571 = vmatpush1.bf16.msra.mxu0 0
        %2572 = vmatprep.subr.bf16.mxu0 0
        %2573 = vmatpush1.bf16.msra.mxu0 0
        %2574 = vmatprep.mubr.bf16.mxu0 0
        %2575 = vmatmul.mubr.bf16.gmra.mrb[0].mxu0 %v845
        %v2576 = vpop.f32.mrb[0].mxu0
        %v2577 = vadd.f32 0.0, %v2576
        %v2578 = vpop.f32.mrb[0].mxu0
        %v2579 = vpop.f32.mrb[0].mxu0
        %v2580 = vpop.f32.mrb[0].mxu0
        %2581 = vdwg.mxu0
        %v2582 = vpack.c.bf16 %v2577, %v2577
        %2583 = vmatprep.subr.bf16.mxu0 0
        %2584 = vmatpush1.bf16.msra.mxu0 %v2051
        %2585 = vmatprep.subr.bf16.mxu0 0
        %2586 = vmatpush1.bf16.msra.mxu0 %v2052
        %2587 = vmatprep.subr.bf16.mxu0 0
        %2588 = vmatpush1.bf16.msra.mxu0 %v2053
        %2589 = vmatprep.subr.bf16.mxu0 0
        %2590 = vmatpush1.bf16.msra.mxu0 %v2054
        %2591 = vmatprep.subr.bf16.mxu0 0
        %2592 = vmatpush1.bf16.msra.mxu0 %v2055
        %2593 = vmatprep.subr.bf16.mxu0 0
        %2594 = vmatpush1.bf16.msra.mxu0 %v2056
        %2595 = vmatprep.subr.bf16.mxu0 0
        %2596 = vmatpush1.bf16.msra.mxu0 %v2057
        %2597 = vmatprep.subr.bf16.mxu0 0
        %2598 = vmatpush1.bf16.msra.mxu0 %v2058
        %2599 = vmatprep.subr.bf16.mxu0 0
        %2600 = vmatpush1.bf16.msra.mxu0 0
        %2601 = vmatprep.subr.bf16.mxu0 0
        %2602 = vmatpush1.bf16.msra.mxu0 0
        %2603 = vmatprep.subr.bf16.mxu0 0
        %2604 = vmatpush1.bf16.msra.mxu0 0
        %2605 = vmatprep.subr.bf16.mxu0 0
        %2606 = vmatpush1.bf16.msra.mxu0 0
        %2607 = vmatprep.subr.bf16.mxu0 0
        %2608 = vmatpush1.bf16.msra.mxu0 0
        %2609 = vmatprep.subr.bf16.mxu0 0
        %2610 = vmatpush1.bf16.msra.mxu0 0
        %2611 = vmatprep.subr.bf16.mxu0 0
        %2612 = vmatpush1.bf16.msra.mxu0 0
        %2613 = vmatprep.subr.bf16.mxu0 0
        %2614 = vmatpush1.bf16.msra.mxu0 0
        %2615 = vmatprep.mubr.bf16.mxu0 0
        %2616 = vmatmul.mubr.bf16.gmra.mrb[0].mxu0 %v845
        %v2617 = vpop.f32.mrb[0].mxu0
        %v2618 = vadd.f32 0.0, %v2617
        %v2619 = vpop.f32.mrb[0].mxu0
        %v2620 = vpop.f32.mrb[0].mxu0
        %v2621 = vpop.f32.mrb[0].mxu0
        %2622 = vdwg.mxu0
        %v2623 = vpack.c.bf16 %v2618, %v2618
        %2624 = vmatprep.subr.bf16.mxu0 0
        %2625 = vmatpush1.bf16.msra.mxu0 %v2534
        %2626 = vmatprep.subr.bf16.mxu0 0
        %2627 = vmatpush1.bf16.msra.mxu0 %v2535
        %2628 = vmatprep.subr.bf16.mxu0 0
        %2629 = vmatpush1.bf16.msra.mxu0 %v2536
        %2630 = vmatprep.subr.bf16.mxu0 0
        %2631 = vmatpush1.bf16.msra.mxu0 %v2537
        %2632 = vmatprep.subr.bf16.mxu0 0
        %2633 = vmatpush1.bf16.msra.mxu0 %v2538
        %2634 = vmatprep.subr.bf16.mxu0 0
        %2635 = vmatpush1.bf16.msra.mxu0 %v2539
        %2636 = vmatprep.subr.bf16.mxu0 0
        %2637 = vmatpush1.bf16.msra.mxu0 %v2540
        %2638 = vmatprep.subr.bf16.mxu0 0
        %2639 = vmatpush1.bf16.msra.mxu0 %v2541
        %2640 = vmatprep.subr.bf16.mxu0 0
        %2641 = vmatpush1.bf16.msra.mxu0 0
        %2642 = vmatprep.subr.bf16.mxu0 0
        %2643 = vmatpush1.bf16.msra.mxu0 0
        %2644 = vmatprep.subr.bf16.mxu0 0
        %2645 = vmatpush1.bf16.msra.mxu0 0
        %2646 = vmatprep.subr.bf16.mxu0 0
        %2647 = vmatpush1.bf16.msra.mxu0 0
        %2648 = vmatprep.subr.bf16.mxu0 0
        %2649 = vmatpush1.bf16.msra.mxu0 0
        %2650 = vmatprep.subr.bf16.mxu0 0
        %2651 = vmatpush1.bf16.msra.mxu0 0
        %2652 = vmatprep.subr.bf16.mxu0 0
        %2653 = vmatpush1.bf16.msra.mxu0 0
        %2654 = vmatprep.subr.bf16.mxu0 0
        %2655 = vmatpush1.bf16.msra.mxu0 0
        %2656 = vmatprep.mubr.bf16.mxu0 0
        %2657 = vmatmul.mubr.bf16.gmra.mrb[0].mxu0 %v845
        %v2658 = vpop.f32.mrb[0].mxu0
        %v2659 = vadd.f32 0.0, %v2658
        %v2660 = vpop.f32.mrb[0].mxu0
        %v2661 = vpop.f32.mrb[0].mxu0
        %v2662 = vpop.f32.mrb[0].mxu0
        %2663 = vdwg.mxu0
        %v2664 = vpack.c.bf16 %v2659, %v2659
        %v2665 = vld [vmem:[#allocation19] sm:$0xf]
        %v2666 = vld [vmem:[#allocation19 + $0x4] sm:$0xf]
        %v2667 = vld [vmem:[#allocation19 + $0x8] sm:$0xf]
        %v2668 = vld [vmem:[#allocation19 + $0xc] sm:$0xf]
        %v2669 = vld [vmem:[#allocation19 + $0x10] sm:$0xf]
        %v2670 = vld [vmem:[#allocation19 + $0x14] sm:$0xf]
        %v2671 = vld [vmem:[#allocation19 + $0x18] sm:$0xf]
        %v2672 = vld [vmem:[#allocation19 + $0x1c] sm:$0xf]
        %v2673 = vld [vmem:[#allocation19 + $0x20] sm:$0xf]
        %v2674 = vld [vmem:[#allocation19 + $0x24] sm:$0xf]
        %v2675 = vld [vmem:[#allocation19 + $0x28] sm:$0xf]
        %v2676 = vld [vmem:[#allocation19 + $0x2c] sm:$0xf]
        %v2677 = vld [vmem:[#allocation19 + $0x30] sm:$0xf]
        %v2678 = vld [vmem:[#allocation19 + $0x34] sm:$0xf]
        %v2679 = vld [vmem:[#allocation19 + $0x38] sm:$0xf]
        %v2680 = vld [vmem:[#allocation19 + $0x3c] sm:$0xf]
        %v2681 = vld [vmem:[#allocation20] sm:$0xf]
        %v2682 = vld [vmem:[#allocation20 + $0x4] sm:$0xf]
        %v2683 = vld [vmem:[#allocation20 + $0x8] sm:$0xf]
        %v2684 = vld [vmem:[#allocation20 + $0xc] sm:$0xf]
        %v2685 = vld [vmem:[#allocation20 + $0x10] sm:$0xf]
        %v2686 = vld [vmem:[#allocation20 + $0x14] sm:$0xf]
        %v2687 = vld [vmem:[#allocation20 + $0x18] sm:$0xf]
        %v2688 = vld [vmem:[#allocation20 + $0x1c] sm:$0xf]
        %v2689 = vld [vmem:[#allocation20 + $0x20] sm:$0xf]
        %v2690 = vld [vmem:[#allocation20 + $0x24] sm:$0xf]
        %v2691 = vld [vmem:[#allocation20 + $0x28] sm:$0xf]
        %v2692 = vld [vmem:[#allocation20 + $0x2c] sm:$0xf]
        %v2693 = vld [vmem:[#allocation20 + $0x30] sm:$0xf]
        %v2694 = vld [vmem:[#allocation20 + $0x34] sm:$0xf]
        %v2695 = vld [vmem:[#allocation20 + $0x38] sm:$0xf]
        %v2696 = vld [vmem:[#allocation20 + $0x3c] sm:$0xf]
        %v2713 = vunpack.c.l.b16 %v2681
        %v2714 = vunpack.c.l.b16 %v2682
        %v2715 = vunpack.c.l.b16 %v2683
        %v2716 = vunpack.c.l.b16 %v2684
        %v2717 = vunpack.c.l.b16 %v2685
        %v2718 = vunpack.c.l.b16 %v2686
        %v2719 = vunpack.c.l.b16 %v2687
        %v2720 = vunpack.c.l.b16 %v2688
        %v2721 = vunpack.c.l.b16 %v2689
        %v2722 = vunpack.c.l.b16 %v2690
        %v2723 = vunpack.c.l.b16 %v2691
        %v2724 = vunpack.c.l.b16 %v2692
        %v2725 = vunpack.c.l.b16 %v2693
        %v2726 = vunpack.c.l.b16 %v2694
        %v2727 = vunpack.c.l.b16 %v2695
        %v2728 = vunpack.c.l.b16 %v2696
        %v2729 = vpack.c.b16 %v2714, %v2713
        %v2730 = vpack.c.b16 %v2716, %v2715
        %v2731 = vpack.c.b16 %v2718, %v2717
        %v2732 = vpack.c.b16 %v2720, %v2719
        %v2733 = vpack.c.b16 %v2722, %v2721
        %v2734 = vpack.c.b16 %v2724, %v2723
        %v2735 = vpack.c.b16 %v2726, %v2725
        %v2736 = vpack.c.b16 %v2728, %v2727
        %2745 = vmatprep.subr.bf16.mxu0 0
        %2746 = vmatpush1.bf16.msra.mxu0 %v2729
        %2747 = vmatprep.subr.bf16.mxu0 0
        %2748 = vmatpush1.bf16.msra.mxu0 %v2730
        %2749 = vmatprep.subr.bf16.mxu0 0
        %2750 = vmatpush1.bf16.msra.mxu0 %v2731
        %2751 = vmatprep.subr.bf16.mxu0 0
        %2752 = vmatpush1.bf16.msra.mxu0 %v2732
        %2753 = vmatprep.subr.bf16.mxu0 0
        %2754 = vmatpush1.bf16.msra.mxu0 %v2733
        %2755 = vmatprep.subr.bf16.mxu0 0
        %2756 = vmatpush1.bf16.msra.mxu0 %v2734
        %2757 = vmatprep.subr.bf16.mxu0 0
        %2758 = vmatpush1.bf16.msra.mxu0 %v2735
        %2759 = vmatprep.subr.bf16.mxu0 0
        %2760 = vmatpush1.bf16.msra.mxu0 %v2736
        %2761 = vmatprep.subr.bf16.mxu0 0
        %2762 = vmatpush1.bf16.msra.mxu0 0
        %2763 = vmatprep.subr.bf16.mxu0 0
        %2764 = vmatpush1.bf16.msra.mxu0 0
        %2765 = vmatprep.subr.bf16.mxu0 0
        %2766 = vmatpush1.bf16.msra.mxu0 0
        %2767 = vmatprep.subr.bf16.mxu0 0
        %2768 = vmatpush1.bf16.msra.mxu0 0
        %2769 = vmatprep.subr.bf16.mxu0 0
        %2770 = vmatpush1.bf16.msra.mxu0 0
        %2771 = vmatprep.subr.bf16.mxu0 0
        %2772 = vmatpush1.bf16.msra.mxu0 0
        %2773 = vmatprep.subr.bf16.mxu0 0
        %2774 = vmatpush1.bf16.msra.mxu0 0
        %2775 = vmatprep.subr.bf16.mxu0 0
        %2776 = vmatpush1.bf16.msra.mxu0 0
        %2777 = vmatprep.mubr.bf16.mxu0 0
        %2778 = vmatmul.mubr.bf16.gmra.mrb[0].mxu0 %v2623
        %v2779 = vpop.f32.mrb[0].mxu0
        %v2780 = vadd.f32 0.0, %v2779
        %v2781 = vpop.f32.mrb[0].mxu0
        %v2782 = vpop.f32.mrb[0].mxu0
        %v2783 = vpop.f32.mrb[0].mxu0
        %2784 = vdwg.mxu0
        %v2801 = vunpack.c.l.b16 %v2665
        %v2802 = vunpack.c.l.b16 %v2666
        %v2803 = vunpack.c.l.b16 %v2667
        %v2804 = vunpack.c.l.b16 %v2668
        %v2805 = vunpack.c.l.b16 %v2669
        %v2806 = vunpack.c.l.b16 %v2670
        %v2807 = vunpack.c.l.b16 %v2671
        %v2808 = vunpack.c.l.b16 %v2672
        %v2809 = vunpack.c.l.b16 %v2673
        %v2810 = vunpack.c.l.b16 %v2674
        %v2811 = vunpack.c.l.b16 %v2675
        %v2812 = vunpack.c.l.b16 %v2676
        %v2813 = vunpack.c.l.b16 %v2677
        %v2814 = vunpack.c.l.b16 %v2678
        %v2815 = vunpack.c.l.b16 %v2679
        %v2816 = vunpack.c.l.b16 %v2680
        %v2817 = vpack.c.b16 %v2802, %v2801
        %v2818 = vpack.c.b16 %v2804, %v2803
        %v2819 = vpack.c.b16 %v2806, %v2805
        %v2820 = vpack.c.b16 %v2808, %v2807
        %v2821 = vpack.c.b16 %v2810, %v2809
        %v2822 = vpack.c.b16 %v2812, %v2811
        %v2823 = vpack.c.b16 %v2814, %v2813
        %v2824 = vpack.c.b16 %v2816, %v2815
        %2833 = vmatprep.subr.bf16.mxu0 0
        %2834 = vmatpush1.bf16.msra.mxu0 %v2817
        %2835 = vmatprep.subr.bf16.mxu0 0
        %2836 = vmatpush1.bf16.msra.mxu0 %v2818
        %2837 = vmatprep.subr.bf16.mxu0 0
        %2838 = vmatpush1.bf16.msra.mxu0 %v2819
        %2839 = vmatprep.subr.bf16.mxu0 0
        %2840 = vmatpush1.bf16.msra.mxu0 %v2820
        %2841 = vmatprep.subr.bf16.mxu0 0
        %2842 = vmatpush1.bf16.msra.mxu0 %v2821
        %2843 = vmatprep.subr.bf16.mxu0 0
        %2844 = vmatpush1.bf16.msra.mxu0 %v2822
        %2845 = vmatprep.subr.bf16.mxu0 0
        %2846 = vmatpush1.bf16.msra.mxu0 %v2823
        %2847 = vmatprep.subr.bf16.mxu0 0
        %2848 = vmatpush1.bf16.msra.mxu0 %v2824
        %2849 = vmatprep.subr.bf16.mxu0 0
        %2850 = vmatpush1.bf16.msra.mxu0 0
        %2851 = vmatprep.subr.bf16.mxu0 0
        %2852 = vmatpush1.bf16.msra.mxu0 0
        %2853 = vmatprep.subr.bf16.mxu0 0
        %2854 = vmatpush1.bf16.msra.mxu0 0
        %2855 = vmatprep.subr.bf16.mxu0 0
        %2856 = vmatpush1.bf16.msra.mxu0 0
        %2857 = vmatprep.subr.bf16.mxu0 0
        %2858 = vmatpush1.bf16.msra.mxu0 0
        %2859 = vmatprep.subr.bf16.mxu0 0
        %2860 = vmatpush1.bf16.msra.mxu0 0
        %2861 = vmatprep.subr.bf16.mxu0 0
        %2862 = vmatpush1.bf16.msra.mxu0 0
        %2863 = vmatprep.subr.bf16.mxu0 0
        %2864 = vmatpush1.bf16.msra.mxu0 0
        %2865 = vmatprep.mubr.bf16.mxu0 0
        %2866 = vmatmul.mubr.bf16.gmra.mrb[0].mxu0 %v2582
        %v2867 = vpop.f32.mrb[0].mxu0
        %v2868 = vadd.f32 %v2780, %v2867
        %v2869 = vpop.f32.mrb[0].mxu0
        %v2870 = vpop.f32.mrb[0].mxu0
        %v2871 = vpop.f32.mrb[0].mxu0
        %2872 = vdwg.mxu0
        %v2873 = vld [vmem:[#allocation22] sm:$0xf]
        %v2874 = vld [vmem:[#allocation22 + $0x4] sm:$0xf]
        %v2875 = vld [vmem:[#allocation22 + $0x8] sm:$0xf]
        %v2876 = vld [vmem:[#allocation22 + $0xc] sm:$0xf]
        %v2877 = vld [vmem:[#allocation22 + $0x10] sm:$0xf]
        %v2878 = vld [vmem:[#allocation22 + $0x14] sm:$0xf]
        %v2879 = vld [vmem:[#allocation22 + $0x18] sm:$0xf]
        %v2880 = vld [vmem:[#allocation22 + $0x1c] sm:$0xf]
        %v2881 = vld [vmem:[#allocation22 + $0x20] sm:$0xf]
        %v2882 = vld [vmem:[#allocation22 + $0x24] sm:$0xf]
        %v2883 = vld [vmem:[#allocation22 + $0x28] sm:$0xf]
        %v2884 = vld [vmem:[#allocation22 + $0x2c] sm:$0xf]
        %v2885 = vld [vmem:[#allocation22 + $0x30] sm:$0xf]
        %v2886 = vld [vmem:[#allocation22 + $0x34] sm:$0xf]
        %v2887 = vld [vmem:[#allocation22 + $0x38] sm:$0xf]
        %v2888 = vld [vmem:[#allocation22 + $0x3c] sm:$0xf]
        %v2905 = vunpack.c.l.b16 %v2873
        %v2906 = vunpack.c.l.b16 %v2874
        %v2907 = vunpack.c.l.b16 %v2875
        %v2908 = vunpack.c.l.b16 %v2876
        %v2909 = vunpack.c.l.b16 %v2877
        %v2910 = vunpack.c.l.b16 %v2878
        %v2911 = vunpack.c.l.b16 %v2879
        %v2912 = vunpack.c.l.b16 %v2880
        %v2913 = vunpack.c.l.b16 %v2881
        %v2914 = vunpack.c.l.b16 %v2882
        %v2915 = vunpack.c.l.b16 %v2883
        %v2916 = vunpack.c.l.b16 %v2884
        %v2917 = vunpack.c.l.b16 %v2885
        %v2918 = vunpack.c.l.b16 %v2886
        %v2919 = vunpack.c.l.b16 %v2887
        %v2920 = vunpack.c.l.b16 %v2888
        %v2921 = vpack.c.b16 %v2906, %v2905
        %v2922 = vpack.c.b16 %v2908, %v2907
        %v2923 = vpack.c.b16 %v2910, %v2909
        %v2924 = vpack.c.b16 %v2912, %v2911
        %v2925 = vpack.c.b16 %v2914, %v2913
        %v2926 = vpack.c.b16 %v2916, %v2915
        %v2927 = vpack.c.b16 %v2918, %v2917
        %v2928 = vpack.c.b16 %v2920, %v2919
        %2937 = vmatprep.subr.bf16.mxu0 0
        %2938 = vmatpush1.bf16.msra.mxu0 %v2921
        %2939 = vmatprep.subr.bf16.mxu0 0
        %2940 = vmatpush1.bf16.msra.mxu0 %v2922
        %2941 = vmatprep.subr.bf16.mxu0 0
        %2942 = vmatpush1.bf16.msra.mxu0 %v2923
        %2943 = vmatprep.subr.bf16.mxu0 0
        %2944 = vmatpush1.bf16.msra.mxu0 %v2924
        %2945 = vmatprep.subr.bf16.mxu0 0
        %2946 = vmatpush1.bf16.msra.mxu0 %v2925
        %2947 = vmatprep.subr.bf16.mxu0 0
        %2948 = vmatpush1.bf16.msra.mxu0 %v2926
        %2949 = vmatprep.subr.bf16.mxu0 0
        %2950 = vmatpush1.bf16.msra.mxu0 %v2927
        %2951 = vmatprep.subr.bf16.mxu0 0
        %2952 = vmatpush1.bf16.msra.mxu0 %v2928
        %2953 = vmatprep.subr.bf16.mxu0 0
        %2954 = vmatpush1.bf16.msra.mxu0 0
        %2955 = vmatprep.subr.bf16.mxu0 0
        %2956 = vmatpush1.bf16.msra.mxu0 0
        %2957 = vmatprep.subr.bf16.mxu0 0
        %2958 = vmatpush1.bf16.msra.mxu0 0
        %2959 = vmatprep.subr.bf16.mxu0 0
        %2960 = vmatpush1.bf16.msra.mxu0 0
        %2961 = vmatprep.subr.bf16.mxu0 0
        %2962 = vmatpush1.bf16.msra.mxu0 0
        %2963 = vmatprep.subr.bf16.mxu0 0
        %2964 = vmatpush1.bf16.msra.mxu0 0
        %2965 = vmatprep.subr.bf16.mxu0 0
        %2966 = vmatpush1.bf16.msra.mxu0 0
        %2967 = vmatprep.subr.bf16.mxu0 0
        %2968 = vmatpush1.bf16.msra.mxu0 0
        %2969 = vmatprep.mubr.bf16.mxu0 0
        %2970 = vmatmul.mubr.bf16.gmra.mrb[0].mxu0 %v2664
        %v2971 = vpop.f32.mrb[0].mxu0
        %v2972 = vadd.f32 0.0, %v2971
        %v2973 = vpop.f32.mrb[0].mxu0
        %v2974 = vpop.f32.mrb[0].mxu0
        %v2975 = vpop.f32.mrb[0].mxu0
        %2976 = vdwg.mxu0
        %v2977 = vadd.f32 %v2868, %v2972
        %v2978 = vld [vmem:[#allocation23] sm:$0x1]
        %v2980 = vlaneseq
        %v2981 = vshrl.u32 %v2980, 7
        %v2982 = vsub.s32 0, %v2981
        %v2983 = vrot.slane %v2978, %v2982
        %v2985 = vadd.f32 %v2977, %v2983
        %v2986 = vmax.f32 %v2985, 0.0
        %v2987 = vpack.c.bf16 %v2986, %v2986
        %v2988 = vld [vmem:[%s16] sm:$0xf]
        %v2989 = vld [vmem:[%s16 + $0x4] sm:$0xf]
        %v2990 = vld [vmem:[%s16 + $0x8] sm:$0xf]
        %v2991 = vld [vmem:[%s16 + $0xc] sm:$0xf]
        %v2992 = vld [vmem:[%s16 + $0x10] sm:$0xf]
        %v2993 = vld [vmem:[%s16 + $0x14] sm:$0xf]
        %v2994 = vld [vmem:[%s16 + $0x18] sm:$0xf]
        %v2995 = vld [vmem:[%s16 + $0x1c] sm:$0xf]
        %v2996 = vld [vmem:[%s16 + $0x20] sm:$0xf]
        %v2997 = vld [vmem:[%s16 + $0x24] sm:$0xf]
        %v2998 = vld [vmem:[%s16 + $0x28] sm:$0xf]
        %v2999 = vld [vmem:[%s16 + $0x2c] sm:$0xf]
        %v3000 = vld [vmem:[%s16 + $0x30] sm:$0xf]
        %v3001 = vld [vmem:[%s16 + $0x34] sm:$0xf]
        %v3002 = vld [vmem:[%s16 + $0x38] sm:$0xf]
        %v3003 = vld [vmem:[%s16 + $0x3c] sm:$0xf]
        %v3004 = vld [vmem:[%s17] sm:$0x1]
        %v3006 = vlaneseq
        %v3007 = vshrl.u32 %v3006, 7
        %v3008 = vsub.s32 0, %v3007
        %v3009 = vrot.slane %v3004, %v3008
        %v3027 = vunpack.c.l.b16 %v2988
        %v3028 = vunpack.c.l.b16 %v2989
        %v3029 = vunpack.c.l.b16 %v2990
        %v3030 = vunpack.c.l.b16 %v2991
        %v3031 = vunpack.c.l.b16 %v2992
        %v3032 = vunpack.c.l.b16 %v2993
        %v3033 = vunpack.c.l.b16 %v2994
        %v3034 = vunpack.c.l.b16 %v2995
        %v3035 = vunpack.c.l.b16 %v2996
        %v3036 = vunpack.c.l.b16 %v2997
        %v3037 = vunpack.c.l.b16 %v2998
        %v3038 = vunpack.c.l.b16 %v2999
        %v3039 = vunpack.c.l.b16 %v3000
        %v3040 = vunpack.c.l.b16 %v3001
        %v3041 = vunpack.c.l.b16 %v3002
        %v3042 = vunpack.c.l.b16 %v3003
        %v3043 = vpack.c.b16 %v3028, %v3027
        %v3044 = vpack.c.b16 %v3030, %v3029
        %v3045 = vpack.c.b16 %v3032, %v3031
        %v3046 = vpack.c.b16 %v3034, %v3033
        %v3047 = vpack.c.b16 %v3036, %v3035
        %v3048 = vpack.c.b16 %v3038, %v3037
        %v3049 = vpack.c.b16 %v3040, %v3039
        %v3050 = vpack.c.b16 %v3042, %v3041
        %3059 = vmatprep.subr.bf16.mxu0 0
        %3060 = vmatpush1.bf16.msra.mxu0 %v3043
        %3061 = vmatprep.subr.bf16.mxu0 0
        %3062 = vmatpush1.bf16.msra.mxu0 %v3044
        %3063 = vmatprep.subr.bf16.mxu0 0
        %3064 = vmatpush1.bf16.msra.mxu0 %v3045
        %3065 = vmatprep.subr.bf16.mxu0 0
        %3066 = vmatpush1.bf16.msra.mxu0 %v3046
        %3067 = vmatprep.subr.bf16.mxu0 0
        %3068 = vmatpush1.bf16.msra.mxu0 %v3047
        %3069 = vmatprep.subr.bf16.mxu0 0
        %3070 = vmatpush1.bf16.msra.mxu0 %v3048
        %3071 = vmatprep.subr.bf16.mxu0 0
        %3072 = vmatpush1.bf16.msra.mxu0 %v3049
        %3073 = vmatprep.subr.bf16.mxu0 0
        %3074 = vmatpush1.bf16.msra.mxu0 %v3050
        %3075 = vmatprep.subr.bf16.mxu0 0
        %3076 = vmatpush1.bf16.msra.mxu0 0
        %3077 = vmatprep.subr.bf16.mxu0 0
        %3078 = vmatpush1.bf16.msra.mxu0 0
        %3079 = vmatprep.subr.bf16.mxu0 0
        %3080 = vmatpush1.bf16.msra.mxu0 0
        %3081 = vmatprep.subr.bf16.mxu0 0
        %3082 = vmatpush1.bf16.msra.mxu0 0
        %3083 = vmatprep.subr.bf16.mxu0 0
        %3084 = vmatpush1.bf16.msra.mxu0 0
        %3085 = vmatprep.subr.bf16.mxu0 0
        %3086 = vmatpush1.bf16.msra.mxu0 0
        %3087 = vmatprep.subr.bf16.mxu0 0
        %3088 = vmatpush1.bf16.msra.mxu0 0
        %3089 = vmatprep.subr.bf16.mxu0 0
        %3090 = vmatpush1.bf16.msra.mxu0 0
        %3091 = vmatprep.mubr.bf16.mxu0 0
        %3092 = vmatmul.mubr.bf16.gmra.mrb[0].mxu0 %v2987
        %v3093 = vpop.f32.mrb[0].mxu0
        %v3094 = vadd.f32 %v3009, %v3093
        %v3095 = vpop.f32.mrb[0].mxu0
        %v3096 = vpop.f32.mrb[0].mxu0
        %v3097 = vpop.f32.mrb[0].mxu0
        %3098 = vdwg.mxu0
        %3099 = vst [vmem:[%s801] sm:$0xff] %v3094
        %s3100 = sand.u32 %s443, 1
        %s3101 = scalar_lea.sflag [#allocation4], %s3100
        %s3102 = sand.u32 %s443, 1
        %s3103 = smul.addr %s3102, 8
        %s3104 = scalar_lea.vmem [#allocation25], %s3103
        // Predicated region
        $region149: #{tpu_custom_call.1} parent=91 // pred_check
          %p3105 = pneg %p453
        $region150: #{tpu_custom_call.1} parent=91 // pred_check_branch
          %3107 = sbr.rel (%p3105) target = $region152
        $region151: #{tpu_custom_call.1} parent=91 // pred_region
          %s3109 = ssub.s32 128, 128
          %3110 = vsyncadd %s3101, %s3109
          %s3111 = smul.addr %s42, 128
          %s3112 = scalar_lea.hbm %s18, %s3111
          %s3114 = sshll.u32 %s3104, 4
          %s3115 = int_to_ptr.vmem [resolvable:$true] %s3114
          %3117 = dma.vmem_to_hbm [thread:$0]  %s3115, 128, %s3112, %s3101
        $region152: #{tpu_custom_call.1} parent=91 // pred_fallthru
          _
      $region92: #{tpu_custom_call.1} parent=5 // pred_fallthru
        _
      %p3118 = scmp.le.s32.totalorder 2, %s37
      // Predicated region
      $region153: #{tpu_custom_call.1} parent=5 // pred_check
        %p3119 = pneg %p3118
      $region154: #{tpu_custom_call.1} parent=5 // pred_check_branch
        %3121 = sbr.rel (%p3119) target = $region156
      $region155: #{tpu_custom_call.1} parent=5 // pred_region
        %s3122 = ssub.s32 %s37, 2
        // Predicated region
        $region157: #{tpu_custom_call.1} parent=155 // pred_check
          %p3123 = pneg %p459
        $region158: #{tpu_custom_call.1} parent=155 // pred_check_branch
          %3125 = sbr.rel (%p3123) target = $region160
        $region159: #{tpu_custom_call.1} parent=155 // pred_region
          %s3126 = sand.u32 %s444, 1
          %s3127 = scalar_lea.sflag [#allocation4], %s3126
          %s3128 = sand.u32 %s444, 1
          %s3129 = smul.addr %s3128, 8
          %s3130 = scalar_lea.vmem [#allocation25], %s3129
          %3131 = dma.done %s3127, 128
        $region160: #{tpu_custom_call.1} parent=155 // pred_fallthru
          _
      $region156: #{tpu_custom_call.1} parent=5 // pred_fallthru
        _
    $region6: #{tpu_custom_call.1} parent=1 // loop_footer
      %s41 = sadd.s32 1, %s37
    $region7: #{tpu_custom_call.1} parent=1 // loop_footer_branch
      %36 = sbr.rel target = $region3
    $region8: #{tpu_custom_call.1} parent=1 // loop_exit
      _
    %3132 = vsyncpa [#allocation3], 1
    %s3133 = scalar_lea.sflag [#allocation3], 1
    %3134 = vsyncpa %s3133, 1
    %3135 = vsyncpa [#allocation6], 1
    %3136 = vsyncpa [#allocation9], 1
    %3137 = vsyncpa [#allocation12], 1
    %3138 = vsyncpa [#allocation15], 1
    %3139 = vsyncpa [#allocation18], 1
    %3140 = vsyncpa [#allocation21], 1
    %3141 = vsyncpa [#allocation24], 1
    %3142 = vsyncpa [#allocation4], 1
    %s3143 = scalar_lea.sflag [#allocation4], 1
    %3144 = vsyncpa %s3143, 1

</llo_original>
